<compile_context>
chip_gen: v7x
topology: tpu7x:2x2x1
jax: 0.10.0
libtpu: 0.0.40
codegen_flags: <defaults>
</compile_context>

<pallas_src>
import math

import jax
import jax.numpy as jnp
import numpy as np
from jax.experimental import pallas as pl
from jax.experimental.pallas import tpu as pltpu

# ----------------------------------------------------------------------------
# Hyper-parameters (small, consistent with TransformerModel.__init__)
# ----------------------------------------------------------------------------
NTOKEN = 64
D_MODEL = 32
NHEAD = 4
NLAYERS = 2
PAD_ID = 0
D_FF = 4 * D_MODEL            # 128
D_HEAD = D_MODEL // NHEAD     # 8
B = 2                         # batch
S = 8                         # seq_len
N = B * S                     # flattened tokens
MAX_VALUE = 512.0             # ContinuousValueEncoder.max_value
LN_EPS = 1e-5

# ---- layout of the packed (NVEC, D_MODEL) parameter slab --------------------
IDX_LNG_G = 0        # GeneEncoder LayerNorm gamma
IDX_LNG_B = 1        # GeneEncoder LayerNorm beta
IDX_CVE_W1 = 2       # ContinuousValueEncoder Linear(1, d) weight (as a d-vector)
IDX_CVE_B1 = 3
IDX_CVE_B2 = 4
IDX_CVE_LN_G = 5
IDX_CVE_LN_B = 6
LAYER_BASE = 7
LAYER_STRIDE = 9
(OFF_BQ, OFF_BK, OFF_BV, OFF_BO,
 OFF_N1G, OFF_N1B, OFF_BFF2, OFF_N2G, OFF_N2B) = range(9)
DEC_BASE = LAYER_BASE + NLAYERS * LAYER_STRIDE
IDX_DEC_B0 = DEC_BASE + 0
IDX_DEC_B2 = DEC_BASE + 1
IDX_DEC_W4 = DEC_BASE + 2    # final Linear(d, 1) weight (as a d-vector)
IDX_DEC_B4 = DEC_BASE + 3    # final bias, broadcast into a full row
NVEC = IDX_DEC_B4 + 1        # 29


# ----------------------------------------------------------------------------
# Pallas kernel: whole forward in one grid-less call (everything in VMEM).
# ----------------------------------------------------------------------------
def transformer_kernel(gid_ref, xval_ref, emb_ref, vecs_ref,
                       wqkv_ref, wo_ref, wff1_ref, bff1_ref, wff2_ref,
                       wcve2_ref, wdec_ref, out_ref):

    def vrow(i):                                   # (1, D_MODEL) packed param row
        return vecs_ref[i:i + 1, :]

    def ln(x, gi, bi):
        mu = jnp.mean(x, axis=-1, keepdims=True)
        var = jnp.mean(jnp.square(x - mu), axis=-1, keepdims=True)
        return (x - mu) * jax.lax.rsqrt(var + LN_EPS) * vrow(gi) + vrow(bi)

    # ---- GeneEncoder: embedding lookup as one-hot @ table (MXU) + LayerNorm --
    ids = gid_ref[...]                                                  # (N, 1) int32
    onehot = (jax.lax.broadcasted_iota(jnp.int32, (N, NTOKEN), 1) == ids
              ).astype(jnp.float32)
    g_emb = jnp.dot(onehot, emb_ref[...], preferred_element_type=jnp.float32)
    g_emb = ln(g_emb, IDX_LNG_G, IDX_LNG_B)

    # ---- ContinuousValueEncoder ----------------------------------------------
    xv = jnp.minimum(xval_ref[...], MAX_VALUE)                          # (N, 1)
    h = jnp.maximum(xv * vrow(IDX_CVE_W1) + vrow(IDX_CVE_B1), 0.0)      # ReLU
    h = jnp.dot(h, wcve2_ref[...],
                preferred_element_type=jnp.float32) + vrow(IDX_CVE_B2)
    x_emb = ln(h, IDX_CVE_LN_G, IDX_CVE_LN_B)
    # TODO(synk): dropout layers (encoder + transformer) are identity in eval mode.

    tok = g_emb + x_emb                                                 # (N, D_MODEL)

    # ---- Transformer encoder layers (post-norm, ReLU FFN) --------------------
    scale = 1.0 / math.sqrt(D_HEAD)
    for l in range(NLAYERS):
        base = LAYER_BASE + l * LAYER_STRIDE

        # fused QKV projection: one lane-dense (d, 3d) matmul
        qkv = jnp.dot(tok, wqkv_ref[l], preferred_element_type=jnp.float32)
        q = (qkv[:, :D_MODEL] + vrow(base + OFF_BQ)) * scale
        k = qkv[:, D_MODEL:2 * D_MODEL] + vrow(base + OFF_BK)
        v = qkv[:, 2 * D_MODEL:] + vrow(base + OFF_BV)
        q3 = q.reshape(B, S, D_MODEL)
        k3 = k.reshape(B, S, D_MODEL)
        v3 = v.reshape(B, S, D_MODEL)

        # per-head attention, accumulated straight into the out-projection
        # (uses sublane-row slices of W_out instead of a lane-axis concat)
        attn = jnp.zeros((N, D_MODEL), jnp.float32)
        for hh in range(NHEAD):
            lo = hh * D_HEAD
            qh = q3[:, :, lo:lo + D_HEAD]
            kh = k3[:, :, lo:lo + D_HEAD]
            vh = v3[:, :, lo:lo + D_HEAD]
            s = jnp.einsum('bqd,bkd->bqk', qh, kh,
                           preferred_element_type=jnp.float32)
            s = s - jnp.max(s, axis=-1, keepdims=True)
            p = jnp.exp(s)
            p = p * pl.reciprocal(jnp.sum(p, axis=-1, keepdims=True), approx=True)
            oh = jnp.einsum('bqk,bkd->bqd', p, vh,
                            preferred_element_type=jnp.float32)        # (B, S, Dh)
            attn = attn + jnp.dot(oh.reshape(N, D_HEAD),
                                  wo_ref[l, lo:lo + D_HEAD, :],
                                  preferred_element_type=jnp.float32)
        attn = attn + vrow(base + OFF_BO)
        tok = ln(tok + attn, base + OFF_N1G, base + OFF_N1B)

        # feed-forward (d -> 4d -> d, ReLU)
        ff = jnp.maximum(jnp.dot(tok, wff1_ref[l],
                                 preferred_element_type=jnp.float32)
                         + bff1_ref[l:l + 1, :], 0.0)
        ff = jnp.dot(ff, wff2_ref[l],
                     preferred_element_type=jnp.float32) + vrow(base + OFF_BFF2)
        tok = ln(tok + ff, base + OFF_N2G, base + OFF_N2B)

    # ---- ExprDecoder ----------------------------------------------------------
    h = jnp.dot(tok, wdec_ref[0],
                preferred_element_type=jnp.float32) + vrow(IDX_DEC_B0)
    h = jnp.maximum(h, 0.01 * h)                                        # LeakyReLU
    h = jnp.dot(h, wdec_ref[1],
                preferred_element_type=jnp.float32) + vrow(IDX_DEC_B2)
    h = jnp.maximum(h, 0.01 * h)
    pred = (jnp.sum(h * vrow(IDX_DEC_W4), axis=-1, keepdims=True)
            + vecs_ref[IDX_DEC_B4:IDX_DEC_B4 + 1, 0:1])                 # (N, 1)
    out_ref[...] = pred.astype(out_ref.dtype)


# ----------------------------------------------------------------------------
# Wrapper
# ----------------------------------------------------------------------------
def bioformer_forward(g_ids, x_vals, params):
    flat_g = g_ids.reshape(N, 1).astype(jnp.int32)
    flat_x = x_vals.reshape(N, 1).astype(jnp.float32)
    vmem = pl.BlockSpec(memory_space=pltpu.MemorySpace.VMEM)
    pred = pl.pallas_call(
        transformer_kernel,
        out_shape=jax.ShapeDtypeStruct((N, 1), jnp.float32),
        in_specs=[vmem] * 11,
        out_specs=vmem,
    )(flat_g, flat_x,
      params['emb'], params['vecs'],
      params['wqkv'], params['wo'], params['wff1'], params['bff1'],
      params['wff2'], params['wcve2'], params['wdec'])
    return pred.reshape(B, S)       # {'mlm_output': pred} in the PyTorch module


# ----------------------------------------------------------------------------
# Pure-JAX reference (mirrors the PyTorch forward, eval mode).
# ----------------------------------------------------------------------------
def reference(g_ids, x_vals, params):
    vecs = params['vecs']
    vr = lambda i: vecs[i]

    def ln(x, g, b):
        mu = jnp.mean(x, -1, keepdims=True)
        var = jnp.mean(jnp.square(x - mu), -1, keepdims=True)
        return (x - mu) * jax.lax.rsqrt(var + LN_EPS) * g + b

    g_emb = ln(jnp.take(params['emb'], g_ids, axis=0), vr(IDX_LNG_G), vr(IDX_LNG_B))

    xv = jnp.minimum(x_vals, MAX_VALUE)[..., None]
    h = jax.nn.relu(xv * vr(IDX_CVE_W1) + vr(IDX_CVE_B1))
    h = h @ params['wcve2'] + vr(IDX_CVE_B2)
    x_emb = ln(h, vr(IDX_CVE_LN_G), vr(IDX_CVE_LN_B))

    tok = g_emb + x_emb                                                 # (B, S, d)
    for l in range(NLAYERS):
        base = LAYER_BASE + l * LAYER_STRIDE
        qkv = tok @ params['wqkv'][l]
        q = qkv[..., :D_MODEL] + vr(base + OFF_BQ)
        k = qkv[..., D_MODEL:2 * D_MODEL] + vr(base + OFF_BK)
        v = qkv[..., 2 * D_MODEL:] + vr(base + OFF_BV)
        q = q.reshape(B, S, NHEAD, D_HEAD).transpose(0, 2, 1, 3) / math.sqrt(D_HEAD)
        k = k.reshape(B, S, NHEAD, D_HEAD).transpose(0, 2, 1, 3)
        v = v.reshape(B, S, NHEAD, D_HEAD).transpose(0, 2, 1, 3)
        a = jax.nn.softmax(jnp.einsum('bhqd,bhkd->bhqk', q, k), axis=-1)
        o = jnp.einsum('bhqk,bhkd->bhqd', a, v).transpose(0, 2, 1, 3).reshape(B, S, D_MODEL)
        attn = o @ params['wo'][l] + vr(base + OFF_BO)
        tok = ln(tok + attn, vr(base + OFF_N1G), vr(base + OFF_N1B))
        ff = jax.nn.relu(tok @ params['wff1'][l] + params['bff1'][l])
        ff = ff @ params['wff2'][l] + vr(base + OFF_BFF2)
        tok = ln(tok + ff, vr(base + OFF_N2G), vr(base + OFF_N2B))

    h = tok @ params['wdec'][0] + vr(IDX_DEC_B0)
    h = jnp.where(h > 0, h, 0.01 * h)
    h = h @ params['wdec'][1] + vr(IDX_DEC_B2)
    h = jnp.where(h > 0, h, 0.01 * h)
    return jnp.sum(h * vr(IDX_DEC_W4), axis=-1) + vecs[IDX_DEC_B4, 0]   # (B, S)


# ----------------------------------------------------------------------------
# Main
# ----------------------------------------------------------------------------
if __name__ == "__main__":
    keys = iter(jax.random.split(jax.random.PRNGKey(0), 64))

    def rnd(shape, scale=0.1):
        return scale * jax.random.normal(next(keys), shape, jnp.float32)

    def gamma_row():
        return 1.0 + 0.05 * jax.random.normal(next(keys), (D_MODEL,), jnp.float32)

    # embedding table, pad row zero (nn.Embedding padding_idx semantics)
    emb = rnd((NTOKEN, D_MODEL), 1.0).at[PAD_ID].set(0.0)

    rows = [
        gamma_row(),               # GeneEncoder LN gamma
        rnd((D_MODEL,), 0.05),     # GeneEncoder LN beta
        rnd((D_MODEL,), 0.5),      # CVE Linear(1,d) weight
        rnd((D_MODEL,), 0.1),      # CVE b1
        rnd((D_MODEL,), 0.1),      # CVE b2
        gamma_row(),               # CVE LN gamma
        rnd((D_MODEL,), 0.05),     # CVE LN beta
    ]
    for _ in range(NLAYERS):
        rows += [rnd((D_MODEL,), 0.1),   # bq
                 rnd((D_MODEL,), 0.1),   # bk
                 rnd((D_MODEL,), 0.1),   # bv
                 rnd((D_MODEL,), 0.1),   # out_proj bias
                 gamma_row(),            # norm1 gamma
                 rnd((D_MODEL,), 0.05),  # norm1 beta
                 rnd((D_MODEL,), 0.1),   # linear2 bias
                 gamma_row(),            # norm2 gamma
                 rnd((D_MODEL,), 0.05)]  # norm2 beta
    rows += [rnd((D_MODEL,), 0.1),       # decoder b0
             rnd((D_MODEL,), 0.1),       # decoder b2
             rnd((D_MODEL,), 0.2)]       # decoder Linear(d,1) weight
    b4 = 0.1 * jax.random.normal(next(keys), (), jnp.float32)
    rows.append(jnp.full((D_MODEL,), b4, jnp.float32))                  # decoder final bias
    vecs = jnp.stack(rows, axis=0)                                      # (NVEC, d)
    assert vecs.shape == (NVEC, D_MODEL)

    params = {
        'emb':   emb,
        'vecs':  vecs,
        'wqkv':  jnp.stack([rnd((D_MODEL, 3 * D_MODEL)) for _ in range(NLAYERS)]),
        'wo':    jnp.stack([rnd((D_MODEL, D_MODEL)) for _ in range(NLAYERS)]),
        'wff1':  jnp.stack([rnd((D_MODEL, D_FF)) for _ in range(NLAYERS)]),
        'bff1':  jnp.stack([rnd((D_FF,)) for _ in range(NLAYERS)]),
        'wff2':  jnp.stack([rnd((D_FF, D_MODEL)) for _ in range(NLAYERS)]),
        'wcve2': rnd((D_MODEL, D_MODEL)),
        'wdec':  jnp.stack([rnd((D_MODEL, D_MODEL)) for _ in range(2)]),
    }

    g = jax.random.randint(next(keys), (B, S), 0, NTOKEN, dtype=jnp.int32)
    x = 2.0 * jax.random.normal(next(keys), (B, S), jnp.float32)

    out = jax.block_until_ready(bioformer_forward(g, x, params))
    ref = jax.block_until_ready(reference(g, x, params))
    np.testing.assert_allclose(np.asarray(out), np.asarray(ref),
                               rtol=2e-3, atol=2e-3)

    print("KERNEL_OK")
</pallas_src>

<mosaic_0001>
module attributes {stable_mosaic.version = 11 : i64} {
  func.func @transformer_kernel(%arg0: memref<16x1xi32, #tpu.memory_space<vmem>>, %arg1: memref<16x1xf32, #tpu.memory_space<vmem>>, %arg2: memref<64x32xf32, #tpu.memory_space<vmem>>, %arg3: memref<29x32xf32, #tpu.memory_space<vmem>>, %arg4: memref<2x32x96xf32, #tpu.memory_space<vmem>>, %arg5: memref<2x32x32xf32, #tpu.memory_space<vmem>>, %arg6: memref<2x32x128xf32, #tpu.memory_space<vmem>>, %arg7: memref<2x128xf32, #tpu.memory_space<vmem>>, %arg8: memref<2x128x32xf32, #tpu.memory_space<vmem>>, %arg9: memref<32x32xf32, #tpu.memory_space<vmem>>, %arg10: memref<2x32x32xf32, #tpu.memory_space<vmem>>, %arg11: memref<16x1xf32, #tpu.memory_space<vmem>>) attributes {dimension_semantics = [], scalar_prefetch = 0 : i64, scratch_operands = 0 : i64, tpu.core_type = #tpu.core_type<tc>} {
    %c0 = arith.constant 0 : index
    %c0_0 = arith.constant 0 : index
    %0 = vector.load %arg0[%c0, %c0_0] : memref<16x1xi32, #tpu.memory_space<vmem>>, vector<16x1xi32>
    %1 = tpu.iota {dimensions = array<i32: 1>} : vector<16x64xi32>
    %2 = vector.broadcast %0 : vector<16x1xi32> to vector<16x64xi32>
    %3 = arith.cmpi eq, %1, %2 : vector<16x64xi32>
    %4 = arith.extui %3 : vector<16x64xi1> to vector<16x64xi32>
    %5 = arith.sitofp %4 : vector<16x64xi32> to vector<16x64xf32>
    %c0_1 = arith.constant 0 : index
    %c0_2 = arith.constant 0 : index
    %6 = vector.load %arg2[%c0_1, %c0_2] : memref<64x32xf32, #tpu.memory_space<vmem>>, vector<64x32xf32>
    %cst = arith.constant dense<0.000000e+00> : vector<16x32xf32>
    %7 = tpu.matmul %5, %6, %cst {dimension_numbers = #tpu.dot_dimension_numbers<[1], [0], [0], [1], [0, 0, 1, 1], [], []>} : vector<16x64xf32>, vector<64x32xf32>, vector<16x32xf32> -> vector<16x32xf32>
    %cst_3 = arith.constant dense<0.000000e+00> : vector<16xf32>
    %8 = vector.multi_reduction <add>, %7, %cst_3 [1] : vector<16x32xf32> to vector<16xf32>
    %9 = vector.shape_cast %8 : vector<16xf32> to vector<16x1xf32>
    %cst_4 = arith.constant 3.200000e+01 : f32
    %10 = vector.broadcast %cst_4 : f32 to vector<16x1xf32>
    %11 = arith.divf %9, %10 : vector<16x1xf32>
    %12 = vector.broadcast %11 : vector<16x1xf32> to vector<16x32xf32>
    %13 = arith.subf %7, %12 : vector<16x32xf32>
    %14 = arith.mulf %13, %13 : vector<16x32xf32>
    %cst_5 = arith.constant dense<0.000000e+00> : vector<16xf32>
    %15 = vector.multi_reduction <add>, %14, %cst_5 [1] : vector<16x32xf32> to vector<16xf32>
    %16 = vector.shape_cast %15 : vector<16xf32> to vector<16x1xf32>
    %cst_6 = arith.constant 3.200000e+01 : f32
    %17 = vector.broadcast %cst_6 : f32 to vector<16x1xf32>
    %18 = arith.divf %16, %17 : vector<16x1xf32>
    %19 = vector.broadcast %11 : vector<16x1xf32> to vector<16x32xf32>
    %20 = arith.subf %7, %19 : vector<16x32xf32>
    %cst_7 = arith.constant 9.99999974E-6 : f32
    %21 = vector.broadcast %cst_7 : f32 to vector<16x1xf32>
    %22 = arith.addf %18, %21 : vector<16x1xf32>
    %23 = math.rsqrt %22 : vector<16x1xf32>
    %24 = vector.broadcast %23 : vector<16x1xf32> to vector<16x32xf32>
    %25 = arith.mulf %20, %24 : vector<16x32xf32>
    %c0_8 = arith.constant 0 : index
    %c0_9 = arith.constant 0 : index
    %26 = vector.load %arg3[%c0_8, %c0_9] : memref<29x32xf32, #tpu.memory_space<vmem>>, vector<1x32xf32>
    %27 = vector.broadcast %26 : vector<1x32xf32> to vector<16x32xf32>
    %28 = arith.mulf %25, %27 : vector<16x32xf32>
    %c1 = arith.constant 1 : index
    %c0_10 = arith.constant 0 : index
    %29 = vector.load %arg3[%c1, %c0_10] : memref<29x32xf32, #tpu.memory_space<vmem>>, vector<1x32xf32>
    %30 = vector.broadcast %29 : vector<1x32xf32> to vector<16x32xf32>
    %31 = arith.addf %28, %30 : vector<16x32xf32>
    %c0_11 = arith.constant 0 : index
    %c0_12 = arith.constant 0 : index
    %32 = vector.load %arg1[%c0_11, %c0_12] : memref<16x1xf32, #tpu.memory_space<vmem>>, vector<16x1xf32>
    %cst_13 = arith.constant 5.120000e+02 : f32
    %33 = vector.broadcast %cst_13 : f32 to vector<16x1xf32>
    %34 = arith.minimumf %32, %33 : vector<16x1xf32>
    %c2 = arith.constant 2 : index
    %c0_14 = arith.constant 0 : index
    %35 = vector.load %arg3[%c2, %c0_14] : memref<29x32xf32, #tpu.memory_space<vmem>>, vector<1x32xf32>
    %36 = vector.broadcast %34 : vector<16x1xf32> to vector<16x32xf32>
    %37 = vector.broadcast %35 : vector<1x32xf32> to vector<16x32xf32>
    %38 = arith.mulf %36, %37 : vector<16x32xf32>
    %c3 = arith.constant 3 : index
    %c0_15 = arith.constant 0 : index
    %39 = vector.load %arg3[%c3, %c0_15] : memref<29x32xf32, #tpu.memory_space<vmem>>, vector<1x32xf32>
    %40 = vector.broadcast %39 : vector<1x32xf32> to vector<16x32xf32>
    %41 = arith.addf %38, %40 : vector<16x32xf32>
    %cst_16 = arith.constant 0.000000e+00 : f32
    %42 = vector.broadcast %cst_16 : f32 to vector<16x32xf32>
    %43 = arith.maximumf %41, %42 : vector<16x32xf32>
    %c0_17 = arith.constant 0 : index
    %c0_18 = arith.constant 0 : index
    %44 = vector.load %arg9[%c0_17, %c0_18] : memref<32x32xf32, #tpu.memory_space<vmem>>, vector<32x32xf32>
    %cst_19 = arith.constant dense<0.000000e+00> : vector<16x32xf32>
    %45 = tpu.matmul %43, %44, %cst_19 {dimension_numbers = #tpu.dot_dimension_numbers<[1], [0], [0], [1], [0, 0, 1, 1], [], []>} : vector<16x32xf32>, vector<32x32xf32>, vector<16x32xf32> -> vector<16x32xf32>
    %c4 = arith.constant 4 : index
    %c0_20 = arith.constant 0 : index
    %46 = vector.load %arg3[%c4, %c0_20] : memref<29x32xf32, #tpu.memory_space<vmem>>, vector<1x32xf32>
    %47 = vector.broadcast %46 : vector<1x32xf32> to vector<16x32xf32>
    %48 = arith.addf %45, %47 : vector<16x32xf32>
    %cst_21 = arith.constant dense<0.000000e+00> : vector<16xf32>
    %49 = vector.multi_reduction <add>, %48, %cst_21 [1] : vector<16x32xf32> to vector<16xf32>
    %50 = vector.shape_cast %49 : vector<16xf32> to vector<16x1xf32>
    %cst_22 = arith.constant 3.200000e+01 : f32
    %51 = vector.broadcast %cst_22 : f32 to vector<16x1xf32>
    %52 = arith.divf %50, %51 : vector<16x1xf32>
    %53 = vector.broadcast %52 : vector<16x1xf32> to vector<16x32xf32>
    %54 = arith.subf %48, %53 : vector<16x32xf32>
    %55 = arith.mulf %54, %54 : vector<16x32xf32>
    %cst_23 = arith.constant dense<0.000000e+00> : vector<16xf32>
    %56 = vector.multi_reduction <add>, %55, %cst_23 [1] : vector<16x32xf32> to vector<16xf32>
    %57 = vector.shape_cast %56 : vector<16xf32> to vector<16x1xf32>
    %cst_24 = arith.constant 3.200000e+01 : f32
    %58 = vector.broadcast %cst_24 : f32 to vector<16x1xf32>
    %59 = arith.divf %57, %58 : vector<16x1xf32>
    %60 = vector.broadcast %52 : vector<16x1xf32> to vector<16x32xf32>
    %61 = arith.subf %48, %60 : vector<16x32xf32>
    %cst_25 = arith.constant 9.99999974E-6 : f32
    %62 = vector.broadcast %cst_25 : f32 to vector<16x1xf32>
    %63 = arith.addf %59, %62 : vector<16x1xf32>
    %64 = math.rsqrt %63 : vector<16x1xf32>
    %65 = vector.broadcast %64 : vector<16x1xf32> to vector<16x32xf32>
    %66 = arith.mulf %61, %65 : vector<16x32xf32>
    %c5 = arith.constant 5 : index
    %c0_26 = arith.constant 0 : index
    %67 = vector.load %arg3[%c5, %c0_26] : memref<29x32xf32, #tpu.memory_space<vmem>>, vector<1x32xf32>
    %68 = vector.broadcast %67 : vector<1x32xf32> to vector<16x32xf32>
    %69 = arith.mulf %66, %68 : vector<16x32xf32>
    %c6 = arith.constant 6 : index
    %c0_27 = arith.constant 0 : index
    %70 = vector.load %arg3[%c6, %c0_27] : memref<29x32xf32, #tpu.memory_space<vmem>>, vector<1x32xf32>
    %71 = vector.broadcast %70 : vector<1x32xf32> to vector<16x32xf32>
    %72 = arith.addf %69, %71 : vector<16x32xf32>
    %73 = arith.addf %31, %72 : vector<16x32xf32>
    %c0_28 = arith.constant 0 : index
    %c0_29 = arith.constant 0 : index
    %c0_30 = arith.constant 0 : index
    %74 = vector.load %arg4[%c0_28, %c0_29, %c0_30] : memref<2x32x96xf32, #tpu.memory_space<vmem>>, vector<1x32x96xf32>
    %75 = vector.shape_cast %74 : vector<1x32x96xf32> to vector<32x96xf32>
    %cst_31 = arith.constant dense<0.000000e+00> : vector<16x96xf32>
    %76 = tpu.matmul %73, %75, %cst_31 {dimension_numbers = #tpu.dot_dimension_numbers<[1], [0], [0], [1], [0, 0, 1, 1], [], []>} : vector<16x32xf32>, vector<32x96xf32>, vector<16x96xf32> -> vector<16x96xf32>
    %77 = vector.extract_strided_slice %76 {offsets = [0, 0], sizes = [16, 32], strides = [1, 1]} : vector<16x96xf32> to vector<16x32xf32>
    %c7 = arith.constant 7 : index
    %c0_32 = arith.constant 0 : index
    %78 = vector.load %arg3[%c7, %c0_32] : memref<29x32xf32, #tpu.memory_space<vmem>>, vector<1x32xf32>
    %79 = vector.broadcast %78 : vector<1x32xf32> to vector<16x32xf32>
    %80 = arith.addf %77, %79 : vector<16x32xf32>
    %cst_33 = arith.constant 0.353553385 : f32
    %81 = vector.broadcast %cst_33 : f32 to vector<16x32xf32>
    %82 = arith.mulf %80, %81 : vector<16x32xf32>
    %83 = vector.extract_strided_slice %76 {offsets = [0, 32], sizes = [16, 32], strides = [1, 1]} : vector<16x96xf32> to vector<16x32xf32>
    %c8 = arith.constant 8 : index
    %c0_34 = arith.constant 0 : index
    %84 = vector.load %arg3[%c8, %c0_34] : memref<29x32xf32, #tpu.memory_space<vmem>>, vector<1x32xf32>
    %85 = vector.broadcast %84 : vector<1x32xf32> to vector<16x32xf32>
    %86 = arith.addf %83, %85 : vector<16x32xf32>
    %87 = vector.extract_strided_slice %76 {offsets = [0, 64], sizes = [16, 32], strides = [1, 1]} : vector<16x96xf32> to vector<16x32xf32>
    %c9 = arith.constant 9 : index
    %c0_35 = arith.constant 0 : index
    %88 = vector.load %arg3[%c9, %c0_35] : memref<29x32xf32, #tpu.memory_space<vmem>>, vector<1x32xf32>
    %89 = vector.broadcast %88 : vector<1x32xf32> to vector<16x32xf32>
    %90 = arith.addf %87, %89 : vector<16x32xf32>
    %91 = vector.shape_cast %82 : vector<16x32xf32> to vector<2x8x32xf32>
    %92 = vector.shape_cast %86 : vector<16x32xf32> to vector<2x8x32xf32>
    %93 = vector.shape_cast %90 : vector<16x32xf32> to vector<2x8x32xf32>
    %cst_36 = arith.constant 0.000000e+00 : f32
    %94 = vector.broadcast %cst_36 : f32 to vector<16x32xf32>
    %95 = vector.extract_strided_slice %91 {offsets = [0, 0, 0], sizes = [2, 8, 8], strides = [1, 1, 1]} : vector<2x8x32xf32> to vector<2x8x8xf32>
    %96 = vector.extract_strided_slice %92 {offsets = [0, 0, 0], sizes = [2, 8, 8], strides = [1, 1, 1]} : vector<2x8x32xf32> to vector<2x8x8xf32>
    %97 = vector.extract_strided_slice %93 {offsets = [0, 0, 0], sizes = [2, 8, 8], strides = [1, 1, 1]} : vector<2x8x32xf32> to vector<2x8x8xf32>
    "tpu.trace_start"() <{level = 10 : i32, message = "bqd,bkd->bqk"}> : () -> ()
    %cst_37 = arith.constant dense<0.000000e+00> : vector<2x8x8xf32>
    %98 = tpu.matmul %95, %96, %cst_37 {dimension_numbers = #tpu.dot_dimension_numbers<[2], [2], [1], [1], [0, 0, 0, 1, 1, 1], [0], [0]>} : vector<2x8x8xf32>, vector<2x8x8xf32>, vector<2x8x8xf32> -> vector<2x8x8xf32>
    "tpu.trace_stop"() : () -> ()
    %cst_38 = arith.constant dense<0xFF800000> : vector<2x8xf32>
    %99 = vector.multi_reduction <maximumf>, %98, %cst_38 [2] : vector<2x8x8xf32> to vector<2x8xf32>
    %100 = vector.shape_cast %99 : vector<2x8xf32> to vector<2x8x1xf32>
    %101 = vector.broadcast %100 : vector<2x8x1xf32> to vector<2x8x8xf32>
    %102 = arith.subf %98, %101 : vector<2x8x8xf32>
    %103 = math.exp %102 : vector<2x8x8xf32>
    %cst_39 = arith.constant dense<0.000000e+00> : vector<2x8xf32>
    %104 = vector.multi_reduction <add>, %103, %cst_39 [2] : vector<2x8x8xf32> to vector<2x8xf32>
    %105 = vector.shape_cast %104 : vector<2x8xf32> to vector<2x8x1xf32>
    %106 = tpu.reciprocal %105 {approx = true} : vector<2x8x1xf32> -> vector<2x8x1xf32>
    %107 = vector.broadcast %106 : vector<2x8x1xf32> to vector<2x8x8xf32>
    %108 = arith.mulf %103, %107 : vector<2x8x8xf32>
    "tpu.trace_start"() <{level = 10 : i32, message = "bqk,bkd->bqd"}> : () -> ()
    %cst_40 = arith.constant dense<0.000000e+00> : vector<2x8x8xf32>
    %109 = tpu.matmul %108, %97, %cst_40 {dimension_numbers = #tpu.dot_dimension_numbers<[2], [1], [1], [2], [0, 0, 0, 1, 1, 2], [0], [0]>} : vector<2x8x8xf32>, vector<2x8x8xf32>, vector<2x8x8xf32> -> vector<2x8x8xf32>
    "tpu.trace_stop"() : () -> ()
    %110 = vector.shape_cast %109 : vector<2x8x8xf32> to vector<16x8xf32>
    %c0_41 = arith.constant 0 : index
    %c0_42 = arith.constant 0 : index
    %c0_43 = arith.constant 0 : index
    %111 = vector.load %arg5[%c0_41, %c0_42, %c0_43] : memref<2x32x32xf32, #tpu.memory_space<vmem>>, vector<1x8x32xf32>
    %112 = vector.shape_cast %111 : vector<1x8x32xf32> to vector<8x32xf32>
    %cst_44 = arith.constant dense<0.000000e+00> : vector<16x32xf32>
    %113 = tpu.matmul %110, %112, %cst_44 {dimension_numbers = #tpu.dot_dimension_numbers<[1], [0], [0], [1], [0, 0, 1, 1], [], []>} : vector<16x8xf32>, vector<8x32xf32>, vector<16x32xf32> -> vector<16x32xf32>
    %114 = arith.addf %94, %113 : vector<16x32xf32>
    %115 = vector.extract_strided_slice %91 {offsets = [0, 0, 8], sizes = [2, 8, 8], strides = [1, 1, 1]} : vector<2x8x32xf32> to vector<2x8x8xf32>
    %116 = vector.extract_strided_slice %92 {offsets = [0, 0, 8], sizes = [2, 8, 8], strides = [1, 1, 1]} : vector<2x8x32xf32> to vector<2x8x8xf32>
    %117 = vector.extract_strided_slice %93 {offsets = [0, 0, 8], sizes = [2, 8, 8], strides = [1, 1, 1]} : vector<2x8x32xf32> to vector<2x8x8xf32>
    "tpu.trace_start"() <{level = 10 : i32, message = "bqd,bkd->bqk"}> : () -> ()
    %cst_45 = arith.constant dense<0.000000e+00> : vector<2x8x8xf32>
    %118 = tpu.matmul %115, %116, %cst_45 {dimension_numbers = #tpu.dot_dimension_numbers<[2], [2], [1], [1], [0, 0, 0, 1, 1, 1], [0], [0]>} : vector<2x8x8xf32>, vector<2x8x8xf32>, vector<2x8x8xf32> -> vector<2x8x8xf32>
    "tpu.trace_stop"() : () -> ()
    %cst_46 = arith.constant dense<0xFF800000> : vector<2x8xf32>
    %119 = vector.multi_reduction <maximumf>, %118, %cst_46 [2] : vector<2x8x8xf32> to vector<2x8xf32>
    %120 = vector.shape_cast %119 : vector<2x8xf32> to vector<2x8x1xf32>
    %121 = vector.broadcast %120 : vector<2x8x1xf32> to vector<2x8x8xf32>
    %122 = arith.subf %118, %121 : vector<2x8x8xf32>
    %123 = math.exp %122 : vector<2x8x8xf32>
    %cst_47 = arith.constant dense<0.000000e+00> : vector<2x8xf32>
    %124 = vector.multi_reduction <add>, %123, %cst_47 [2] : vector<2x8x8xf32> to vector<2x8xf32>
    %125 = vector.shape_cast %124 : vector<2x8xf32> to vector<2x8x1xf32>
    %126 = tpu.reciprocal %125 {approx = true} : vector<2x8x1xf32> -> vector<2x8x1xf32>
    %127 = vector.broadcast %126 : vector<2x8x1xf32> to vector<2x8x8xf32>
    %128 = arith.mulf %123, %127 : vector<2x8x8xf32>
    "tpu.trace_start"() <{level = 10 : i32, message = "bqk,bkd->bqd"}> : () -> ()
    %cst_48 = arith.constant dense<0.000000e+00> : vector<2x8x8xf32>
    %129 = tpu.matmul %128, %117, %cst_48 {dimension_numbers = #tpu.dot_dimension_numbers<[2], [1], [1], [2], [0, 0, 0, 1, 1, 2], [0], [0]>} : vector<2x8x8xf32>, vector<2x8x8xf32>, vector<2x8x8xf32> -> vector<2x8x8xf32>
    "tpu.trace_stop"() : () -> ()
    %130 = vector.shape_cast %129 : vector<2x8x8xf32> to vector<16x8xf32>
    %c0_49 = arith.constant 0 : index
    %c8_50 = arith.constant 8 : index
    %c0_51 = arith.constant 0 : index
    %131 = vector.load %arg5[%c0_49, %c8_50, %c0_51] : memref<2x32x32xf32, #tpu.memory_space<vmem>>, vector<1x8x32xf32>
    %132 = vector.shape_cast %131 : vector<1x8x32xf32> to vector<8x32xf32>
    %cst_52 = arith.constant dense<0.000000e+00> : vector<16x32xf32>
    %133 = tpu.matmul %130, %132, %cst_52 {dimension_numbers = #tpu.dot_dimension_numbers<[1], [0], [0], [1], [0, 0, 1, 1], [], []>} : vector<16x8xf32>, vector<8x32xf32>, vector<16x32xf32> -> vector<16x32xf32>
    %134 = arith.addf %114, %133 : vector<16x32xf32>
    %135 = vector.extract_strided_slice %91 {offsets = [0, 0, 16], sizes = [2, 8, 8], strides = [1, 1, 1]} : vector<2x8x32xf32> to vector<2x8x8xf32>
    %136 = vector.extract_strided_slice %92 {offsets = [0, 0, 16], sizes = [2, 8, 8], strides = [1, 1, 1]} : vector<2x8x32xf32> to vector<2x8x8xf32>
    %137 = vector.extract_strided_slice %93 {offsets = [0, 0, 16], sizes = [2, 8, 8], strides = [1, 1, 1]} : vector<2x8x32xf32> to vector<2x8x8xf32>
    "tpu.trace_start"() <{level = 10 : i32, message = "bqd,bkd->bqk"}> : () -> ()
    %cst_53 = arith.constant dense<0.000000e+00> : vector<2x8x8xf32>
    %138 = tpu.matmul %135, %136, %cst_53 {dimension_numbers = #tpu.dot_dimension_numbers<[2], [2], [1], [1], [0, 0, 0, 1, 1, 1], [0], [0]>} : vector<2x8x8xf32>, vector<2x8x8xf32>, vector<2x8x8xf32> -> vector<2x8x8xf32>
    "tpu.trace_stop"() : () -> ()
    %cst_54 = arith.constant dense<0xFF800000> : vector<2x8xf32>
    %139 = vector.multi_reduction <maximumf>, %138, %cst_54 [2] : vector<2x8x8xf32> to vector<2x8xf32>
    %140 = vector.shape_cast %139 : vector<2x8xf32> to vector<2x8x1xf32>
    %141 = vector.broadcast %140 : vector<2x8x1xf32> to vector<2x8x8xf32>
    %142 = arith.subf %138, %141 : vector<2x8x8xf32>
    %143 = math.exp %142 : vector<2x8x8xf32>
    %cst_55 = arith.constant dense<0.000000e+00> : vector<2x8xf32>
    %144 = vector.multi_reduction <add>, %143, %cst_55 [2] : vector<2x8x8xf32> to vector<2x8xf32>
    %145 = vector.shape_cast %144 : vector<2x8xf32> to vector<2x8x1xf32>
    %146 = tpu.reciprocal %145 {approx = true} : vector<2x8x1xf32> -> vector<2x8x1xf32>
    %147 = vector.broadcast %146 : vector<2x8x1xf32> to vector<2x8x8xf32>
    %148 = arith.mulf %143, %147 : vector<2x8x8xf32>
    "tpu.trace_start"() <{level = 10 : i32, message = "bqk,bkd->bqd"}> : () -> ()
    %cst_56 = arith.constant dense<0.000000e+00> : vector<2x8x8xf32>
    %149 = tpu.matmul %148, %137, %cst_56 {dimension_numbers = #tpu.dot_dimension_numbers<[2], [1], [1], [2], [0, 0, 0, 1, 1, 2], [0], [0]>} : vector<2x8x8xf32>, vector<2x8x8xf32>, vector<2x8x8xf32> -> vector<2x8x8xf32>
    "tpu.trace_stop"() : () -> ()
    %150 = vector.shape_cast %149 : vector<2x8x8xf32> to vector<16x8xf32>
    %c0_57 = arith.constant 0 : index
    %c16 = arith.constant 16 : index
    %c0_58 = arith.constant 0 : index
    %151 = vector.load %arg5[%c0_57, %c16, %c0_58] : memref<2x32x32xf32, #tpu.memory_space<vmem>>, vector<1x8x32xf32>
    %152 = vector.shape_cast %151 : vector<1x8x32xf32> to vector<8x32xf32>
    %cst_59 = arith.constant dense<0.000000e+00> : vector<16x32xf32>
    %153 = tpu.matmul %150, %152, %cst_59 {dimension_numbers = #tpu.dot_dimension_numbers<[1], [0], [0], [1], [0, 0, 1, 1], [], []>} : vector<16x8xf32>, vector<8x32xf32>, vector<16x32xf32> -> vector<16x32xf32>
    %154 = arith.addf %134, %153 : vector<16x32xf32>
    %155 = vector.extract_strided_slice %91 {offsets = [0, 0, 24], sizes = [2, 8, 8], strides = [1, 1, 1]} : vector<2x8x32xf32> to vector<2x8x8xf32>
    %156 = vector.extract_strided_slice %92 {offsets = [0, 0, 24], sizes = [2, 8, 8], strides = [1, 1, 1]} : vector<2x8x32xf32> to vector<2x8x8xf32>
    %157 = vector.extract_strided_slice %93 {offsets = [0, 0, 24], sizes = [2, 8, 8], strides = [1, 1, 1]} : vector<2x8x32xf32> to vector<2x8x8xf32>
    "tpu.trace_start"() <{level = 10 : i32, message = "bqd,bkd->bqk"}> : () -> ()
    %cst_60 = arith.constant dense<0.000000e+00> : vector<2x8x8xf32>
    %158 = tpu.matmul %155, %156, %cst_60 {dimension_numbers = #tpu.dot_dimension_numbers<[2], [2], [1], [1], [0, 0, 0, 1, 1, 1], [0], [0]>} : vector<2x8x8xf32>, vector<2x8x8xf32>, vector<2x8x8xf32> -> vector<2x8x8xf32>
    "tpu.trace_stop"() : () -> ()
    %cst_61 = arith.constant dense<0xFF800000> : vector<2x8xf32>
    %159 = vector.multi_reduction <maximumf>, %158, %cst_61 [2] : vector<2x8x8xf32> to vector<2x8xf32>
    %160 = vector.shape_cast %159 : vector<2x8xf32> to vector<2x8x1xf32>
    %161 = vector.broadcast %160 : vector<2x8x1xf32> to vector<2x8x8xf32>
    %162 = arith.subf %158, %161 : vector<2x8x8xf32>
    %163 = math.exp %162 : vector<2x8x8xf32>
    %cst_62 = arith.constant dense<0.000000e+00> : vector<2x8xf32>
    %164 = vector.multi_reduction <add>, %163, %cst_62 [2] : vector<2x8x8xf32> to vector<2x8xf32>
    %165 = vector.shape_cast %164 : vector<2x8xf32> to vector<2x8x1xf32>
    %166 = tpu.reciprocal %165 {approx = true} : vector<2x8x1xf32> -> vector<2x8x1xf32>
    %167 = vector.broadcast %166 : vector<2x8x1xf32> to vector<2x8x8xf32>
    %168 = arith.mulf %163, %167 : vector<2x8x8xf32>
    "tpu.trace_start"() <{level = 10 : i32, message = "bqk,bkd->bqd"}> : () -> ()
    %cst_63 = arith.constant dense<0.000000e+00> : vector<2x8x8xf32>
    %169 = tpu.matmul %168, %157, %cst_63 {dimension_numbers = #tpu.dot_dimension_numbers<[2], [1], [1], [2], [0, 0, 0, 1, 1, 2], [0], [0]>} : vector<2x8x8xf32>, vector<2x8x8xf32>, vector<2x8x8xf32> -> vector<2x8x8xf32>
    "tpu.trace_stop"() : () -> ()
    %170 = vector.shape_cast %169 : vector<2x8x8xf32> to vector<16x8xf32>
    %c0_64 = arith.constant 0 : index
    %c24 = arith.constant 24 : index
    %c0_65 = arith.constant 0 : index
    %171 = vector.load %arg5[%c0_64, %c24, %c0_65] : memref<2x32x32xf32, #tpu.memory_space<vmem>>, vector<1x8x32xf32>
    %172 = vector.shape_cast %171 : vector<1x8x32xf32> to vector<8x32xf32>
    %cst_66 = arith.constant dense<0.000000e+00> : vector<16x32xf32>
    %173 = tpu.matmul %170, %172, %cst_66 {dimension_numbers = #tpu.dot_dimension_numbers<[1], [0], [0], [1], [0, 0, 1, 1], [], []>} : vector<16x8xf32>, vector<8x32xf32>, vector<16x32xf32> -> vector<16x32xf32>
    %174 = arith.addf %154, %173 : vector<16x32xf32>
    %c10 = arith.constant 10 : index
    %c0_67 = arith.constant 0 : index
    %175 = vector.load %arg3[%c10, %c0_67] : memref<29x32xf32, #tpu.memory_space<vmem>>, vector<1x32xf32>
    %176 = vector.broadcast %175 : vector<1x32xf32> to vector<16x32xf32>
    %177 = arith.addf %174, %176 : vector<16x32xf32>
    %178 = arith.addf %73, %177 : vector<16x32xf32>
    %cst_68 = arith.constant dense<0.000000e+00> : vector<16xf32>
    %179 = vector.multi_reduction <add>, %178, %cst_68 [1] : vector<16x32xf32> to vector<16xf32>
    %180 = vector.shape_cast %179 : vector<16xf32> to vector<16x1xf32>
    %cst_69 = arith.constant 3.200000e+01 : f32
    %181 = vector.broadcast %cst_69 : f32 to vector<16x1xf32>
    %182 = arith.divf %180, %181 : vector<16x1xf32>
    %183 = vector.broadcast %182 : vector<16x1xf32> to vector<16x32xf32>
    %184 = arith.subf %178, %183 : vector<16x32xf32>
    %185 = arith.mulf %184, %184 : vector<16x32xf32>
    %cst_70 = arith.constant dense<0.000000e+00> : vector<16xf32>
    %186 = vector.multi_reduction <add>, %185, %cst_70 [1] : vector<16x32xf32> to vector<16xf32>
    %187 = vector.shape_cast %186 : vector<16xf32> to vector<16x1xf32>
    %cst_71 = arith.constant 3.200000e+01 : f32
    %188 = vector.broadcast %cst_71 : f32 to vector<16x1xf32>
    %189 = arith.divf %187, %188 : vector<16x1xf32>
    %190 = vector.broadcast %182 : vector<16x1xf32> to vector<16x32xf32>
    %191 = arith.subf %178, %190 : vector<16x32xf32>
    %cst_72 = arith.constant 9.99999974E-6 : f32
    %192 = vector.broadcast %cst_72 : f32 to vector<16x1xf32>
    %193 = arith.addf %189, %192 : vector<16x1xf32>
    %194 = math.rsqrt %193 : vector<16x1xf32>
    %195 = vector.broadcast %194 : vector<16x1xf32> to vector<16x32xf32>
    %196 = arith.mulf %191, %195 : vector<16x32xf32>
    %c11 = arith.constant 11 : index
    %c0_73 = arith.constant 0 : index
    %197 = vector.load %arg3[%c11, %c0_73] : memref<29x32xf32, #tpu.memory_space<vmem>>, vector<1x32xf32>
    %198 = vector.broadcast %197 : vector<1x32xf32> to vector<16x32xf32>
    %199 = arith.mulf %196, %198 : vector<16x32xf32>
    %c12 = arith.constant 12 : index
    %c0_74 = arith.constant 0 : index
    %200 = vector.load %arg3[%c12, %c0_74] : memref<29x32xf32, #tpu.memory_space<vmem>>, vector<1x32xf32>
    %201 = vector.broadcast %200 : vector<1x32xf32> to vector<16x32xf32>
    %202 = arith.addf %199, %201 : vector<16x32xf32>
    %c0_75 = arith.constant 0 : index
    %c0_76 = arith.constant 0 : index
    %c0_77 = arith.constant 0 : index
    %203 = vector.load %arg6[%c0_75, %c0_76, %c0_77] : memref<2x32x128xf32, #tpu.memory_space<vmem>>, vector<1x32x128xf32>
    %204 = vector.shape_cast %203 : vector<1x32x128xf32> to vector<32x128xf32>
    %cst_78 = arith.constant dense<0.000000e+00> : vector<16x128xf32>
    %205 = tpu.matmul %202, %204, %cst_78 {dimension_numbers = #tpu.dot_dimension_numbers<[1], [0], [0], [1], [0, 0, 1, 1], [], []>} : vector<16x32xf32>, vector<32x128xf32>, vector<16x128xf32> -> vector<16x128xf32>
    %c0_79 = arith.constant 0 : index
    %c0_80 = arith.constant 0 : index
    %206 = vector.load %arg7[%c0_79, %c0_80] : memref<2x128xf32, #tpu.memory_space<vmem>>, vector<1x128xf32>
    %207 = vector.broadcast %206 : vector<1x128xf32> to vector<16x128xf32>
    %208 = arith.addf %205, %207 : vector<16x128xf32>
    %cst_81 = arith.constant 0.000000e+00 : f32
    %209 = vector.broadcast %cst_81 : f32 to vector<16x128xf32>
    %210 = arith.maximumf %208, %209 : vector<16x128xf32>
    %c0_82 = arith.constant 0 : index
    %c0_83 = arith.constant 0 : index
    %c0_84 = arith.constant 0 : index
    %211 = vector.load %arg8[%c0_82, %c0_83, %c0_84] : memref<2x128x32xf32, #tpu.memory_space<vmem>>, vector<1x128x32xf32>
    %212 = vector.shape_cast %211 : vector<1x128x32xf32> to vector<128x32xf32>
    %cst_85 = arith.constant dense<0.000000e+00> : vector<16x32xf32>
    %213 = tpu.matmul %210, %212, %cst_85 {dimension_numbers = #tpu.dot_dimension_numbers<[1], [0], [0], [1], [0, 0, 1, 1], [], []>} : vector<16x128xf32>, vector<128x32xf32>, vector<16x32xf32> -> vector<16x32xf32>
    %c13 = arith.constant 13 : index
    %c0_86 = arith.constant 0 : index
    %214 = vector.load %arg3[%c13, %c0_86] : memref<29x32xf32, #tpu.memory_space<vmem>>, vector<1x32xf32>
    %215 = vector.broadcast %214 : vector<1x32xf32> to vector<16x32xf32>
    %216 = arith.addf %213, %215 : vector<16x32xf32>
    %217 = arith.addf %202, %216 : vector<16x32xf32>
    %cst_87 = arith.constant dense<0.000000e+00> : vector<16xf32>
    %218 = vector.multi_reduction <add>, %217, %cst_87 [1] : vector<16x32xf32> to vector<16xf32>
    %219 = vector.shape_cast %218 : vector<16xf32> to vector<16x1xf32>
    %cst_88 = arith.constant 3.200000e+01 : f32
    %220 = vector.broadcast %cst_88 : f32 to vector<16x1xf32>
    %221 = arith.divf %219, %220 : vector<16x1xf32>
    %222 = vector.broadcast %221 : vector<16x1xf32> to vector<16x32xf32>
    %223 = arith.subf %217, %222 : vector<16x32xf32>
    %224 = arith.mulf %223, %223 : vector<16x32xf32>
    %cst_89 = arith.constant dense<0.000000e+00> : vector<16xf32>
    %225 = vector.multi_reduction <add>, %224, %cst_89 [1] : vector<16x32xf32> to vector<16xf32>
    %226 = vector.shape_cast %225 : vector<16xf32> to vector<16x1xf32>
    %cst_90 = arith.constant 3.200000e+01 : f32
    %227 = vector.broadcast %cst_90 : f32 to vector<16x1xf32>
    %228 = arith.divf %226, %227 : vector<16x1xf32>
    %229 = vector.broadcast %221 : vector<16x1xf32> to vector<16x32xf32>
    %230 = arith.subf %217, %229 : vector<16x32xf32>
    %cst_91 = arith.constant 9.99999974E-6 : f32
    %231 = vector.broadcast %cst_91 : f32 to vector<16x1xf32>
    %232 = arith.addf %228, %231 : vector<16x1xf32>
    %233 = math.rsqrt %232 : vector<16x1xf32>
    %234 = vector.broadcast %233 : vector<16x1xf32> to vector<16x32xf32>
    %235 = arith.mulf %230, %234 : vector<16x32xf32>
    %c14 = arith.constant 14 : index
    %c0_92 = arith.constant 0 : index
    %236 = vector.load %arg3[%c14, %c0_92] : memref<29x32xf32, #tpu.memory_space<vmem>>, vector<1x32xf32>
    %237 = vector.broadcast %236 : vector<1x32xf32> to vector<16x32xf32>
    %238 = arith.mulf %235, %237 : vector<16x32xf32>
    %c15 = arith.constant 15 : index
    %c0_93 = arith.constant 0 : index
    %239 = vector.load %arg3[%c15, %c0_93] : memref<29x32xf32, #tpu.memory_space<vmem>>, vector<1x32xf32>
    %240 = vector.broadcast %239 : vector<1x32xf32> to vector<16x32xf32>
    %241 = arith.addf %238, %240 : vector<16x32xf32>
    %c1_94 = arith.constant 1 : index
    %c0_95 = arith.constant 0 : index
    %c0_96 = arith.constant 0 : index
    %242 = vector.load %arg4[%c1_94, %c0_95, %c0_96] : memref<2x32x96xf32, #tpu.memory_space<vmem>>, vector<1x32x96xf32>
    %243 = vector.shape_cast %242 : vector<1x32x96xf32> to vector<32x96xf32>
    %cst_97 = arith.constant dense<0.000000e+00> : vector<16x96xf32>
    %244 = tpu.matmul %241, %243, %cst_97 {dimension_numbers = #tpu.dot_dimension_numbers<[1], [0], [0], [1], [0, 0, 1, 1], [], []>} : vector<16x32xf32>, vector<32x96xf32>, vector<16x96xf32> -> vector<16x96xf32>
    %245 = vector.extract_strided_slice %244 {offsets = [0, 0], sizes = [16, 32], strides = [1, 1]} : vector<16x96xf32> to vector<16x32xf32>
    %c16_98 = arith.constant 16 : index
    %c0_99 = arith.constant 0 : index
    %246 = vector.load %arg3[%c16_98, %c0_99] : memref<29x32xf32, #tpu.memory_space<vmem>>, vector<1x32xf32>
    %247 = vector.broadcast %246 : vector<1x32xf32> to vector<16x32xf32>
    %248 = arith.addf %245, %247 : vector<16x32xf32>
    %cst_100 = arith.constant 0.353553385 : f32
    %249 = vector.broadcast %cst_100 : f32 to vector<16x32xf32>
    %250 = arith.mulf %248, %249 : vector<16x32xf32>
    %251 = vector.extract_strided_slice %244 {offsets = [0, 32], sizes = [16, 32], strides = [1, 1]} : vector<16x96xf32> to vector<16x32xf32>
    %c17 = arith.constant 17 : index
    %c0_101 = arith.constant 0 : index
    %252 = vector.load %arg3[%c17, %c0_101] : memref<29x32xf32, #tpu.memory_space<vmem>>, vector<1x32xf32>
    %253 = vector.broadcast %252 : vector<1x32xf32> to vector<16x32xf32>
    %254 = arith.addf %251, %253 : vector<16x32xf32>
    %255 = vector.extract_strided_slice %244 {offsets = [0, 64], sizes = [16, 32], strides = [1, 1]} : vector<16x96xf32> to vector<16x32xf32>
    %c18 = arith.constant 18 : index
    %c0_102 = arith.constant 0 : index
    %256 = vector.load %arg3[%c18, %c0_102] : memref<29x32xf32, #tpu.memory_space<vmem>>, vector<1x32xf32>
    %257 = vector.broadcast %256 : vector<1x32xf32> to vector<16x32xf32>
    %258 = arith.addf %255, %257 : vector<16x32xf32>
    %259 = vector.shape_cast %250 : vector<16x32xf32> to vector<2x8x32xf32>
    %260 = vector.shape_cast %254 : vector<16x32xf32> to vector<2x8x32xf32>
    %261 = vector.shape_cast %258 : vector<16x32xf32> to vector<2x8x32xf32>
    %cst_103 = arith.constant 0.000000e+00 : f32
    %262 = vector.broadcast %cst_103 : f32 to vector<16x32xf32>
    %263 = vector.extract_strided_slice %259 {offsets = [0, 0, 0], sizes = [2, 8, 8], strides = [1, 1, 1]} : vector<2x8x32xf32> to vector<2x8x8xf32>
    %264 = vector.extract_strided_slice %260 {offsets = [0, 0, 0], sizes = [2, 8, 8], strides = [1, 1, 1]} : vector<2x8x32xf32> to vector<2x8x8xf32>
    %265 = vector.extract_strided_slice %261 {offsets = [0, 0, 0], sizes = [2, 8, 8], strides = [1, 1, 1]} : vector<2x8x32xf32> to vector<2x8x8xf32>
    "tpu.trace_start"() <{level = 10 : i32, message = "bqd,bkd->bqk"}> : () -> ()
    %cst_104 = arith.constant dense<0.000000e+00> : vector<2x8x8xf32>
    %266 = tpu.matmul %263, %264, %cst_104 {dimension_numbers = #tpu.dot_dimension_numbers<[2], [2], [1], [1], [0, 0, 0, 1, 1, 1], [0], [0]>} : vector<2x8x8xf32>, vector<2x8x8xf32>, vector<2x8x8xf32> -> vector<2x8x8xf32>
    "tpu.trace_stop"() : () -> ()
    %cst_105 = arith.constant dense<0xFF800000> : vector<2x8xf32>
    %267 = vector.multi_reduction <maximumf>, %266, %cst_105 [2] : vector<2x8x8xf32> to vector<2x8xf32>
    %268 = vector.shape_cast %267 : vector<2x8xf32> to vector<2x8x1xf32>
    %269 = vector.broadcast %268 : vector<2x8x1xf32> to vector<2x8x8xf32>
    %270 = arith.subf %266, %269 : vector<2x8x8xf32>
    %271 = math.exp %270 : vector<2x8x8xf32>
    %cst_106 = arith.constant dense<0.000000e+00> : vector<2x8xf32>
    %272 = vector.multi_reduction <add>, %271, %cst_106 [2] : vector<2x8x8xf32> to vector<2x8xf32>
    %273 = vector.shape_cast %272 : vector<2x8xf32> to vector<2x8x1xf32>
    %274 = tpu.reciprocal %273 {approx = true} : vector<2x8x1xf32> -> vector<2x8x1xf32>
    %275 = vector.broadcast %274 : vector<2x8x1xf32> to vector<2x8x8xf32>
    %276 = arith.mulf %271, %275 : vector<2x8x8xf32>
    "tpu.trace_start"() <{level = 10 : i32, message = "bqk,bkd->bqd"}> : () -> ()
    %cst_107 = arith.constant dense<0.000000e+00> : vector<2x8x8xf32>
    %277 = tpu.matmul %276, %265, %cst_107 {dimension_numbers = #tpu.dot_dimension_numbers<[2], [1], [1], [2], [0, 0, 0, 1, 1, 2], [0], [0]>} : vector<2x8x8xf32>, vector<2x8x8xf32>, vector<2x8x8xf32> -> vector<2x8x8xf32>
    "tpu.trace_stop"() : () -> ()
    %278 = vector.shape_cast %277 : vector<2x8x8xf32> to vector<16x8xf32>
    %c1_108 = arith.constant 1 : index
    %c0_109 = arith.constant 0 : index
    %c0_110 = arith.constant 0 : index
    %279 = vector.load %arg5[%c1_108, %c0_109, %c0_110] : memref<2x32x32xf32, #tpu.memory_space<vmem>>, vector<1x8x32xf32>
    %280 = vector.shape_cast %279 : vector<1x8x32xf32> to vector<8x32xf32>
    %cst_111 = arith.constant dense<0.000000e+00> : vector<16x32xf32>
    %281 = tpu.matmul %278, %280, %cst_111 {dimension_numbers = #tpu.dot_dimension_numbers<[1], [0], [0], [1], [0, 0, 1, 1], [], []>} : vector<16x8xf32>, vector<8x32xf32>, vector<16x32xf32> -> vector<16x32xf32>
    %282 = arith.addf %262, %281 : vector<16x32xf32>
    %283 = vector.extract_strided_slice %259 {offsets = [0, 0, 8], sizes = [2, 8, 8], strides = [1, 1, 1]} : vector<2x8x32xf32> to vector<2x8x8xf32>
    %284 = vector.extract_strided_slice %260 {offsets = [0, 0, 8], sizes = [2, 8, 8], strides = [1, 1, 1]} : vector<2x8x32xf32> to vector<2x8x8xf32>
    %285 = vector.extract_strided_slice %261 {offsets = [0, 0, 8], sizes = [2, 8, 8], strides = [1, 1, 1]} : vector<2x8x32xf32> to vector<2x8x8xf32>
    "tpu.trace_start"() <{level = 10 : i32, message = "bqd,bkd->bqk"}> : () -> ()
    %cst_112 = arith.constant dense<0.000000e+00> : vector<2x8x8xf32>
    %286 = tpu.matmul %283, %284, %cst_112 {dimension_numbers = #tpu.dot_dimension_numbers<[2], [2], [1], [1], [0, 0, 0, 1, 1, 1], [0], [0]>} : vector<2x8x8xf32>, vector<2x8x8xf32>, vector<2x8x8xf32> -> vector<2x8x8xf32>
    "tpu.trace_stop"() : () -> ()
    %cst_113 = arith.constant dense<0xFF800000> : vector<2x8xf32>
    %287 = vector.multi_reduction <maximumf>, %286, %cst_113 [2] : vector<2x8x8xf32> to vector<2x8xf32>
    %288 = vector.shape_cast %287 : vector<2x8xf32> to vector<2x8x1xf32>
    %289 = vector.broadcast %288 : vector<2x8x1xf32> to vector<2x8x8xf32>
    %290 = arith.subf %286, %289 : vector<2x8x8xf32>
    %291 = math.exp %290 : vector<2x8x8xf32>
    %cst_114 = arith.constant dense<0.000000e+00> : vector<2x8xf32>
    %292 = vector.multi_reduction <add>, %291, %cst_114 [2] : vector<2x8x8xf32> to vector<2x8xf32>
    %293 = vector.shape_cast %292 : vector<2x8xf32> to vector<2x8x1xf32>
    %294 = tpu.reciprocal %293 {approx = true} : vector<2x8x1xf32> -> vector<2x8x1xf32>
    %295 = vector.broadcast %294 : vector<2x8x1xf32> to vector<2x8x8xf32>
    %296 = arith.mulf %291, %295 : vector<2x8x8xf32>
    "tpu.trace_start"() <{level = 10 : i32, message = "bqk,bkd->bqd"}> : () -> ()
    %cst_115 = arith.constant dense<0.000000e+00> : vector<2x8x8xf32>
    %297 = tpu.matmul %296, %285, %cst_115 {dimension_numbers = #tpu.dot_dimension_numbers<[2], [1], [1], [2], [0, 0, 0, 1, 1, 2], [0], [0]>} : vector<2x8x8xf32>, vector<2x8x8xf32>, vector<2x8x8xf32> -> vector<2x8x8xf32>
    "tpu.trace_stop"() : () -> ()
    %298 = vector.shape_cast %297 : vector<2x8x8xf32> to vector<16x8xf32>
    %c1_116 = arith.constant 1 : index
    %c8_117 = arith.constant 8 : index
    %c0_118 = arith.constant 0 : index
    %299 = vector.load %arg5[%c1_116, %c8_117, %c0_118] : memref<2x32x32xf32, #tpu.memory_space<vmem>>, vector<1x8x32xf32>
    %300 = vector.shape_cast %299 : vector<1x8x32xf32> to vector<8x32xf32>
    %cst_119 = arith.constant dense<0.000000e+00> : vector<16x32xf32>
    %301 = tpu.matmul %298, %300, %cst_119 {dimension_numbers = #tpu.dot_dimension_numbers<[1], [0], [0], [1], [0, 0, 1, 1], [], []>} : vector<16x8xf32>, vector<8x32xf32>, vector<16x32xf32> -> vector<16x32xf32>
    %302 = arith.addf %282, %301 : vector<16x32xf32>
    %303 = vector.extract_strided_slice %259 {offsets = [0, 0, 16], sizes = [2, 8, 8], strides = [1, 1, 1]} : vector<2x8x32xf32> to vector<2x8x8xf32>
    %304 = vector.extract_strided_slice %260 {offsets = [0, 0, 16], sizes = [2, 8, 8], strides = [1, 1, 1]} : vector<2x8x32xf32> to vector<2x8x8xf32>
    %305 = vector.extract_strided_slice %261 {offsets = [0, 0, 16], sizes = [2, 8, 8], strides = [1, 1, 1]} : vector<2x8x32xf32> to vector<2x8x8xf32>
    "tpu.trace_start"() <{level = 10 : i32, message = "bqd,bkd->bqk"}> : () -> ()
    %cst_120 = arith.constant dense<0.000000e+00> : vector<2x8x8xf32>
    %306 = tpu.matmul %303, %304, %cst_120 {dimension_numbers = #tpu.dot_dimension_numbers<[2], [2], [1], [1], [0, 0, 0, 1, 1, 1], [0], [0]>} : vector<2x8x8xf32>, vector<2x8x8xf32>, vector<2x8x8xf32> -> vector<2x8x8xf32>
    "tpu.trace_stop"() : () -> ()
    %cst_121 = arith.constant dense<0xFF800000> : vector<2x8xf32>
    %307 = vector.multi_reduction <maximumf>, %306, %cst_121 [2] : vector<2x8x8xf32> to vector<2x8xf32>
    %308 = vector.shape_cast %307 : vector<2x8xf32> to vector<2x8x1xf32>
    %309 = vector.broadcast %308 : vector<2x8x1xf32> to vector<2x8x8xf32>
    %310 = arith.subf %306, %309 : vector<2x8x8xf32>
    %311 = math.exp %310 : vector<2x8x8xf32>
    %cst_122 = arith.constant dense<0.000000e+00> : vector<2x8xf32>
    %312 = vector.multi_reduction <add>, %311, %cst_122 [2] : vector<2x8x8xf32> to vector<2x8xf32>
    %313 = vector.shape_cast %312 : vector<2x8xf32> to vector<2x8x1xf32>
    %314 = tpu.reciprocal %313 {approx = true} : vector<2x8x1xf32> -> vector<2x8x1xf32>
    %315 = vector.broadcast %314 : vector<2x8x1xf32> to vector<2x8x8xf32>
    %316 = arith.mulf %311, %315 : vector<2x8x8xf32>
    "tpu.trace_start"() <{level = 10 : i32, message = "bqk,bkd->bqd"}> : () -> ()
    %cst_123 = arith.constant dense<0.000000e+00> : vector<2x8x8xf32>
    %317 = tpu.matmul %316, %305, %cst_123 {dimension_numbers = #tpu.dot_dimension_numbers<[2], [1], [1], [2], [0, 0, 0, 1, 1, 2], [0], [0]>} : vector<2x8x8xf32>, vector<2x8x8xf32>, vector<2x8x8xf32> -> vector<2x8x8xf32>
    "tpu.trace_stop"() : () -> ()
    %318 = vector.shape_cast %317 : vector<2x8x8xf32> to vector<16x8xf32>
    %c1_124 = arith.constant 1 : index
    %c16_125 = arith.constant 16 : index
    %c0_126 = arith.constant 0 : index
    %319 = vector.load %arg5[%c1_124, %c16_125, %c0_126] : memref<2x32x32xf32, #tpu.memory_space<vmem>>, vector<1x8x32xf32>
    %320 = vector.shape_cast %319 : vector<1x8x32xf32> to vector<8x32xf32>
    %cst_127 = arith.constant dense<0.000000e+00> : vector<16x32xf32>
    %321 = tpu.matmul %318, %320, %cst_127 {dimension_numbers = #tpu.dot_dimension_numbers<[1], [0], [0], [1], [0, 0, 1, 1], [], []>} : vector<16x8xf32>, vector<8x32xf32>, vector<16x32xf32> -> vector<16x32xf32>
    %322 = arith.addf %302, %321 : vector<16x32xf32>
    %323 = vector.extract_strided_slice %259 {offsets = [0, 0, 24], sizes = [2, 8, 8], strides = [1, 1, 1]} : vector<2x8x32xf32> to vector<2x8x8xf32>
    %324 = vector.extract_strided_slice %260 {offsets = [0, 0, 24], sizes = [2, 8, 8], strides = [1, 1, 1]} : vector<2x8x32xf32> to vector<2x8x8xf32>
    %325 = vector.extract_strided_slice %261 {offsets = [0, 0, 24], sizes = [2, 8, 8], strides = [1, 1, 1]} : vector<2x8x32xf32> to vector<2x8x8xf32>
    "tpu.trace_start"() <{level = 10 : i32, message = "bqd,bkd->bqk"}> : () -> ()
    %cst_128 = arith.constant dense<0.000000e+00> : vector<2x8x8xf32>
    %326 = tpu.matmul %323, %324, %cst_128 {dimension_numbers = #tpu.dot_dimension_numbers<[2], [2], [1], [1], [0, 0, 0, 1, 1, 1], [0], [0]>} : vector<2x8x8xf32>, vector<2x8x8xf32>, vector<2x8x8xf32> -> vector<2x8x8xf32>
    "tpu.trace_stop"() : () -> ()
    %cst_129 = arith.constant dense<0xFF800000> : vector<2x8xf32>
    %327 = vector.multi_reduction <maximumf>, %326, %cst_129 [2] : vector<2x8x8xf32> to vector<2x8xf32>
    %328 = vector.shape_cast %327 : vector<2x8xf32> to vector<2x8x1xf32>
    %329 = vector.broadcast %328 : vector<2x8x1xf32> to vector<2x8x8xf32>
    %330 = arith.subf %326, %329 : vector<2x8x8xf32>
    %331 = math.exp %330 : vector<2x8x8xf32>
    %cst_130 = arith.constant dense<0.000000e+00> : vector<2x8xf32>
    %332 = vector.multi_reduction <add>, %331, %cst_130 [2] : vector<2x8x8xf32> to vector<2x8xf32>
    %333 = vector.shape_cast %332 : vector<2x8xf32> to vector<2x8x1xf32>
    %334 = tpu.reciprocal %333 {approx = true} : vector<2x8x1xf32> -> vector<2x8x1xf32>
    %335 = vector.broadcast %334 : vector<2x8x1xf32> to vector<2x8x8xf32>
    %336 = arith.mulf %331, %335 : vector<2x8x8xf32>
    "tpu.trace_start"() <{level = 10 : i32, message = "bqk,bkd->bqd"}> : () -> ()
    %cst_131 = arith.constant dense<0.000000e+00> : vector<2x8x8xf32>
    %337 = tpu.matmul %336, %325, %cst_131 {dimension_numbers = #tpu.dot_dimension_numbers<[2], [1], [1], [2], [0, 0, 0, 1, 1, 2], [0], [0]>} : vector<2x8x8xf32>, vector<2x8x8xf32>, vector<2x8x8xf32> -> vector<2x8x8xf32>
    "tpu.trace_stop"() : () -> ()
    %338 = vector.shape_cast %337 : vector<2x8x8xf32> to vector<16x8xf32>
    %c1_132 = arith.constant 1 : index
    %c24_133 = arith.constant 24 : index
    %c0_134 = arith.constant 0 : index
    %339 = vector.load %arg5[%c1_132, %c24_133, %c0_134] : memref<2x32x32xf32, #tpu.memory_space<vmem>>, vector<1x8x32xf32>
    %340 = vector.shape_cast %339 : vector<1x8x32xf32> to vector<8x32xf32>
    %cst_135 = arith.constant dense<0.000000e+00> : vector<16x32xf32>
    %341 = tpu.matmul %338, %340, %cst_135 {dimension_numbers = #tpu.dot_dimension_numbers<[1], [0], [0], [1], [0, 0, 1, 1], [], []>} : vector<16x8xf32>, vector<8x32xf32>, vector<16x32xf32> -> vector<16x32xf32>
    %342 = arith.addf %322, %341 : vector<16x32xf32>
    %c19 = arith.constant 19 : index
    %c0_136 = arith.constant 0 : index
    %343 = vector.load %arg3[%c19, %c0_136] : memref<29x32xf32, #tpu.memory_space<vmem>>, vector<1x32xf32>
    %344 = vector.broadcast %343 : vector<1x32xf32> to vector<16x32xf32>
    %345 = arith.addf %342, %344 : vector<16x32xf32>
    %346 = arith.addf %241, %345 : vector<16x32xf32>
    %cst_137 = arith.constant dense<0.000000e+00> : vector<16xf32>
    %347 = vector.multi_reduction <add>, %346, %cst_137 [1] : vector<16x32xf32> to vector<16xf32>
    %348 = vector.shape_cast %347 : vector<16xf32> to vector<16x1xf32>
    %cst_138 = arith.constant 3.200000e+01 : f32
    %349 = vector.broadcast %cst_138 : f32 to vector<16x1xf32>
    %350 = arith.divf %348, %349 : vector<16x1xf32>
    %351 = vector.broadcast %350 : vector<16x1xf32> to vector<16x32xf32>
    %352 = arith.subf %346, %351 : vector<16x32xf32>
    %353 = arith.mulf %352, %352 : vector<16x32xf32>
    %cst_139 = arith.constant dense<0.000000e+00> : vector<16xf32>
    %354 = vector.multi_reduction <add>, %353, %cst_139 [1] : vector<16x32xf32> to vector<16xf32>
    %355 = vector.shape_cast %354 : vector<16xf32> to vector<16x1xf32>
    %cst_140 = arith.constant 3.200000e+01 : f32
    %356 = vector.broadcast %cst_140 : f32 to vector<16x1xf32>
    %357 = arith.divf %355, %356 : vector<16x1xf32>
    %358 = vector.broadcast %350 : vector<16x1xf32> to vector<16x32xf32>
    %359 = arith.subf %346, %358 : vector<16x32xf32>
    %cst_141 = arith.constant 9.99999974E-6 : f32
    %360 = vector.broadcast %cst_141 : f32 to vector<16x1xf32>
    %361 = arith.addf %357, %360 : vector<16x1xf32>
    %362 = math.rsqrt %361 : vector<16x1xf32>
    %363 = vector.broadcast %362 : vector<16x1xf32> to vector<16x32xf32>
    %364 = arith.mulf %359, %363 : vector<16x32xf32>
    %c20 = arith.constant 20 : index
    %c0_142 = arith.constant 0 : index
    %365 = vector.load %arg3[%c20, %c0_142] : memref<29x32xf32, #tpu.memory_space<vmem>>, vector<1x32xf32>
    %366 = vector.broadcast %365 : vector<1x32xf32> to vector<16x32xf32>
    %367 = arith.mulf %364, %366 : vector<16x32xf32>
    %c21 = arith.constant 21 : index
    %c0_143 = arith.constant 0 : index
    %368 = vector.load %arg3[%c21, %c0_143] : memref<29x32xf32, #tpu.memory_space<vmem>>, vector<1x32xf32>
    %369 = vector.broadcast %368 : vector<1x32xf32> to vector<16x32xf32>
    %370 = arith.addf %367, %369 : vector<16x32xf32>
    %c1_144 = arith.constant 1 : index
    %c0_145 = arith.constant 0 : index
    %c0_146 = arith.constant 0 : index
    %371 = vector.load %arg6[%c1_144, %c0_145, %c0_146] : memref<2x32x128xf32, #tpu.memory_space<vmem>>, vector<1x32x128xf32>
    %372 = vector.shape_cast %371 : vector<1x32x128xf32> to vector<32x128xf32>
    %cst_147 = arith.constant dense<0.000000e+00> : vector<16x128xf32>
    %373 = tpu.matmul %370, %372, %cst_147 {dimension_numbers = #tpu.dot_dimension_numbers<[1], [0], [0], [1], [0, 0, 1, 1], [], []>} : vector<16x32xf32>, vector<32x128xf32>, vector<16x128xf32> -> vector<16x128xf32>
    %c1_148 = arith.constant 1 : index
    %c0_149 = arith.constant 0 : index
    %374 = vector.load %arg7[%c1_148, %c0_149] : memref<2x128xf32, #tpu.memory_space<vmem>>, vector<1x128xf32>
    %375 = vector.broadcast %374 : vector<1x128xf32> to vector<16x128xf32>
    %376 = arith.addf %373, %375 : vector<16x128xf32>
    %cst_150 = arith.constant 0.000000e+00 : f32
    %377 = vector.broadcast %cst_150 : f32 to vector<16x128xf32>
    %378 = arith.maximumf %376, %377 : vector<16x128xf32>
    %c1_151 = arith.constant 1 : index
    %c0_152 = arith.constant 0 : index
    %c0_153 = arith.constant 0 : index
    %379 = vector.load %arg8[%c1_151, %c0_152, %c0_153] : memref<2x128x32xf32, #tpu.memory_space<vmem>>, vector<1x128x32xf32>
    %380 = vector.shape_cast %379 : vector<1x128x32xf32> to vector<128x32xf32>
    %cst_154 = arith.constant dense<0.000000e+00> : vector<16x32xf32>
    %381 = tpu.matmul %378, %380, %cst_154 {dimension_numbers = #tpu.dot_dimension_numbers<[1], [0], [0], [1], [0, 0, 1, 1], [], []>} : vector<16x128xf32>, vector<128x32xf32>, vector<16x32xf32> -> vector<16x32xf32>
    %c22 = arith.constant 22 : index
    %c0_155 = arith.constant 0 : index
    %382 = vector.load %arg3[%c22, %c0_155] : memref<29x32xf32, #tpu.memory_space<vmem>>, vector<1x32xf32>
    %383 = vector.broadcast %382 : vector<1x32xf32> to vector<16x32xf32>
    %384 = arith.addf %381, %383 : vector<16x32xf32>
    %385 = arith.addf %370, %384 : vector<16x32xf32>
    %cst_156 = arith.constant dense<0.000000e+00> : vector<16xf32>
    %386 = vector.multi_reduction <add>, %385, %cst_156 [1] : vector<16x32xf32> to vector<16xf32>
    %387 = vector.shape_cast %386 : vector<16xf32> to vector<16x1xf32>
    %cst_157 = arith.constant 3.200000e+01 : f32
    %388 = vector.broadcast %cst_157 : f32 to vector<16x1xf32>
    %389 = arith.divf %387, %388 : vector<16x1xf32>
    %390 = vector.broadcast %389 : vector<16x1xf32> to vector<16x32xf32>
    %391 = arith.subf %385, %390 : vector<16x32xf32>
    %392 = arith.mulf %391, %391 : vector<16x32xf32>
    %cst_158 = arith.constant dense<0.000000e+00> : vector<16xf32>
    %393 = vector.multi_reduction <add>, %392, %cst_158 [1] : vector<16x32xf32> to vector<16xf32>
    %394 = vector.shape_cast %393 : vector<16xf32> to vector<16x1xf32>
    %cst_159 = arith.constant 3.200000e+01 : f32
    %395 = vector.broadcast %cst_159 : f32 to vector<16x1xf32>
    %396 = arith.divf %394, %395 : vector<16x1xf32>
    %397 = vector.broadcast %389 : vector<16x1xf32> to vector<16x32xf32>
    %398 = arith.subf %385, %397 : vector<16x32xf32>
    %cst_160 = arith.constant 9.99999974E-6 : f32
    %399 = vector.broadcast %cst_160 : f32 to vector<16x1xf32>
    %400 = arith.addf %396, %399 : vector<16x1xf32>
    %401 = math.rsqrt %400 : vector<16x1xf32>
    %402 = vector.broadcast %401 : vector<16x1xf32> to vector<16x32xf32>
    %403 = arith.mulf %398, %402 : vector<16x32xf32>
    %c23 = arith.constant 23 : index
    %c0_161 = arith.constant 0 : index
    %404 = vector.load %arg3[%c23, %c0_161] : memref<29x32xf32, #tpu.memory_space<vmem>>, vector<1x32xf32>
    %405 = vector.broadcast %404 : vector<1x32xf32> to vector<16x32xf32>
    %406 = arith.mulf %403, %405 : vector<16x32xf32>
    %c24_162 = arith.constant 24 : index
    %c0_163 = arith.constant 0 : index
    %407 = vector.load %arg3[%c24_162, %c0_163] : memref<29x32xf32, #tpu.memory_space<vmem>>, vector<1x32xf32>
    %408 = vector.broadcast %407 : vector<1x32xf32> to vector<16x32xf32>
    %409 = arith.addf %406, %408 : vector<16x32xf32>
    %c0_164 = arith.constant 0 : index
    %c0_165 = arith.constant 0 : index
    %c0_166 = arith.constant 0 : index
    %410 = vector.load %arg10[%c0_164, %c0_165, %c0_166] : memref<2x32x32xf32, #tpu.memory_space<vmem>>, vector<1x32x32xf32>
    %411 = vector.shape_cast %410 : vector<1x32x32xf32> to vector<32x32xf32>
    %cst_167 = arith.constant dense<0.000000e+00> : vector<16x32xf32>
    %412 = tpu.matmul %409, %411, %cst_167 {dimension_numbers = #tpu.dot_dimension_numbers<[1], [0], [0], [1], [0, 0, 1, 1], [], []>} : vector<16x32xf32>, vector<32x32xf32>, vector<16x32xf32> -> vector<16x32xf32>
    %c25 = arith.constant 25 : index
    %c0_168 = arith.constant 0 : index
    %413 = vector.load %arg3[%c25, %c0_168] : memref<29x32xf32, #tpu.memory_space<vmem>>, vector<1x32xf32>
    %414 = vector.broadcast %413 : vector<1x32xf32> to vector<16x32xf32>
    %415 = arith.addf %412, %414 : vector<16x32xf32>
    %cst_169 = arith.constant 0.00999999977 : f32
    %416 = vector.broadcast %cst_169 : f32 to vector<16x32xf32>
    %417 = arith.mulf %416, %415 : vector<16x32xf32>
    %418 = arith.maximumf %415, %417 : vector<16x32xf32>
    %c1_170 = arith.constant 1 : index
    %c0_171 = arith.constant 0 : index
    %c0_172 = arith.constant 0 : index
    %419 = vector.load %arg10[%c1_170, %c0_171, %c0_172] : memref<2x32x32xf32, #tpu.memory_space<vmem>>, vector<1x32x32xf32>
    %420 = vector.shape_cast %419 : vector<1x32x32xf32> to vector<32x32xf32>
    %cst_173 = arith.constant dense<0.000000e+00> : vector<16x32xf32>
    %421 = tpu.matmul %418, %420, %cst_173 {dimension_numbers = #tpu.dot_dimension_numbers<[1], [0], [0], [1], [0, 0, 1, 1], [], []>} : vector<16x32xf32>, vector<32x32xf32>, vector<16x32xf32> -> vector<16x32xf32>
    %c26 = arith.constant 26 : index
    %c0_174 = arith.constant 0 : index
    %422 = vector.load %arg3[%c26, %c0_174] : memref<29x32xf32, #tpu.memory_space<vmem>>, vector<1x32xf32>
    %423 = vector.broadcast %422 : vector<1x32xf32> to vector<16x32xf32>
    %424 = arith.addf %421, %423 : vector<16x32xf32>
    %cst_175 = arith.constant 0.00999999977 : f32
    %425 = vector.broadcast %cst_175 : f32 to vector<16x32xf32>
    %426 = arith.mulf %425, %424 : vector<16x32xf32>
    %427 = arith.maximumf %424, %426 : vector<16x32xf32>
    %c27 = arith.constant 27 : index
    %c0_176 = arith.constant 0 : index
    %428 = vector.load %arg3[%c27, %c0_176] : memref<29x32xf32, #tpu.memory_space<vmem>>, vector<1x32xf32>
    %429 = vector.broadcast %428 : vector<1x32xf32> to vector<16x32xf32>
    %430 = arith.mulf %427, %429 : vector<16x32xf32>
    %cst_177 = arith.constant dense<0.000000e+00> : vector<16xf32>
    %431 = vector.multi_reduction <add>, %430, %cst_177 [1] : vector<16x32xf32> to vector<16xf32>
    %432 = vector.shape_cast %431 : vector<16xf32> to vector<16x1xf32>
    %c28 = arith.constant 28 : index
    %c0_178 = arith.constant 0 : index
    %433 = vector.load %arg3[%c28, %c0_178] : memref<29x32xf32, #tpu.memory_space<vmem>>, vector<1x1xf32>
    %434 = vector.broadcast %433 : vector<1x1xf32> to vector<16x1xf32>
    %435 = arith.addf %432, %434 : vector<16x1xf32>
    %c0_179 = arith.constant 0 : index
    %c0_180 = arith.constant 0 : index
    %436 = vector.load %arg11[%c0_179, %c0_180] : memref<16x1xf32, #tpu.memory_space<vmem>>, vector<16x1xf32>
    tpu.vector_store %arg11[%c0_179, %c0_180], %435 {strides = array<i32>} : memref<16x1xf32, #tpu.memory_space<vmem>>, vector<16x1xf32>,
    return
  }
}

</mosaic_0001>

<llo_original>
// kernel: tpu_custom_call.1
$region0: #{tpu_custom_call.1}
  #allocation0 [shape = 'u32[]', space=smem, size = 0x4, offset = 0x4, fixed_abs, tag = 'smem constant byte address 0x4 - core index']
  #allocation1 [shape = 'u32[144,128]{1,0:T(1,128)}', space=vmem, size = 0x12000, scoped, tag = 'internal scratch']
  %s0 = inlined_call_operand.vmem [shape: s32[16,1], index: 0, kind: input, shape index: {}]
  %s1 = inlined_call_operand.vmem [shape: f32[16,1], index: 1, kind: input, shape index: {}]
  %s2 = inlined_call_operand.vmem [shape: f32[64,32], index: 2, kind: input, shape index: {}]
  %s3 = inlined_call_operand.vmem [shape: f32[29,32], index: 3, kind: input, shape index: {}]
  %s4 = inlined_call_operand.vmem [shape: f32[2,32,96], index: 4, kind: input, shape index: {}]
  %s5 = inlined_call_operand.vmem [shape: f32[2,32,32], index: 5, kind: input, shape index: {}]
  %s6 = inlined_call_operand.vmem [shape: f32[2,32,128], index: 6, kind: input, shape index: {}]
  %s7 = inlined_call_operand.vmem [shape: f32[2,128], index: 7, kind: input, shape index: {}]
  %s8 = inlined_call_operand.vmem [shape: f32[2,128,32], index: 8, kind: input, shape index: {}]
  %s9 = inlined_call_operand.vmem [shape: f32[32,32], index: 9, kind: input, shape index: {}]
  %s10 = inlined_call_operand.vmem [shape: f32[2,32,32], index: 10, kind: input, shape index: {}]
  %s11 = inlined_call_operand.vmem [shape: f32[16,1], index: 11, kind: output, shape index: {}]
  %s12 = sld [smem:[#allocation0]]
  $region54: #{tpu_custom_call.1} parent=0
    _
  %s14 = ssub.s32 1, %s12
  %s15 = scalar_select 0, %s14, %s12
  // Predicated region
  $region2: #{tpu_custom_call.1} parent=0 // pred_check
    _
  $region3: #{tpu_custom_call.1} parent=0 // pred_check_branch
    %17 = sbr.rel (0) target = $region5
  $region4: #{tpu_custom_call.1} parent=0 // pred_region
    _
  $region5: #{tpu_custom_call.1} parent=0 // pred_fallthru
    _
  // Predicated region
  $region6: #{tpu_custom_call.1} parent=0 // pred_check
    _
  $region7: #{tpu_custom_call.1} parent=0 // pred_check_branch
    %19 = sbr.rel (0) target = $region9
  $region8: #{tpu_custom_call.1} parent=0 // pred_region
    _
  $region9: #{tpu_custom_call.1} parent=0 // pred_fallthru
    _
  // Predicated region
  $region10: #{tpu_custom_call.1} parent=0 // pred_check
    _
  $region11: #{tpu_custom_call.1} parent=0 // pred_check_branch
    %21 = sbr.rel (0) target = $region13
  $region12: #{tpu_custom_call.1} parent=0 // pred_region
    _
  $region13: #{tpu_custom_call.1} parent=0 // pred_fallthru
    _
  // Predicated region
  $region14: #{tpu_custom_call.1} parent=0 // pred_check
    _
  $region15: #{tpu_custom_call.1} parent=0 // pred_check_branch
    %23 = sbr.rel (0) target = $region17
  $region16: #{tpu_custom_call.1} parent=0 // pred_region
    _
  $region17: #{tpu_custom_call.1} parent=0 // pred_fallthru
    _
  // Predicated region
  $region18: #{tpu_custom_call.1} parent=0 // pred_check
    _
  $region19: #{tpu_custom_call.1} parent=0 // pred_check_branch
    %25 = sbr.rel (0) target = $region21
  $region20: #{tpu_custom_call.1} parent=0 // pred_region
    _
  $region21: #{tpu_custom_call.1} parent=0 // pred_fallthru
    _
  // Predicated region
  $region22: #{tpu_custom_call.1} parent=0 // pred_check
    _
  $region23: #{tpu_custom_call.1} parent=0 // pred_check_branch
    %27 = sbr.rel (0) target = $region25
  $region24: #{tpu_custom_call.1} parent=0 // pred_region
    _
  $region25: #{tpu_custom_call.1} parent=0 // pred_fallthru
    _
  // Predicated region
  $region26: #{tpu_custom_call.1} parent=0 // pred_check
    _
  $region27: #{tpu_custom_call.1} parent=0 // pred_check_branch
    %29 = sbr.rel (0) target = $region29
  $region28: #{tpu_custom_call.1} parent=0 // pred_region
    _
  $region29: #{tpu_custom_call.1} parent=0 // pred_fallthru
    _
  // Predicated region
  $region30: #{tpu_custom_call.1} parent=0 // pred_check
    _
  $region31: #{tpu_custom_call.1} parent=0 // pred_check_branch
    %31 = sbr.rel (0) target = $region33
  $region32: #{tpu_custom_call.1} parent=0 // pred_region
    _
  $region33: #{tpu_custom_call.1} parent=0 // pred_fallthru
    _
  // Predicated region
  $region34: #{tpu_custom_call.1} parent=0 // pred_check
    _
  $region35: #{tpu_custom_call.1} parent=0 // pred_check_branch
    %33 = sbr.rel (0) target = $region37
  $region36: #{tpu_custom_call.1} parent=0 // pred_region
    _
  $region37: #{tpu_custom_call.1} parent=0 // pred_fallthru
    _
  // Predicated region
  $region38: #{tpu_custom_call.1} parent=0 // pred_check
    _
  $region39: #{tpu_custom_call.1} parent=0 // pred_check_branch
    %35 = sbr.rel (0) target = $region41
  $region40: #{tpu_custom_call.1} parent=0 // pred_region
    _
  $region41: #{tpu_custom_call.1} parent=0 // pred_fallthru
    _
  // Predicated region
  $region42: #{tpu_custom_call.1} parent=0 // pred_check
    _
  $region43: #{tpu_custom_call.1} parent=0 // pred_check_branch
    %37 = sbr.rel (0) target = $region45
  $region44: #{tpu_custom_call.1} parent=0 // pred_region
    _
  $region45: #{tpu_custom_call.1} parent=0 // pred_fallthru
    _
  %v38 = vld [vmem:[%s0] sm:$0xff]
  %v39 = vld [vmem:[%s0 + $0x8] sm:$0xff]
  %v40 = vlaneseq
  %v41 = vand.u32 %v40, 127
  %42 = vset.pattern.permute.xlu0 0
  %43 = vperm.xlu0 %42, %v38
  %v44 = vpop.permute.xlu0 %43
  %45 = vset.pattern.permute.xlu0 0
  %46 = vperm.xlu0 %45, %v39
  %v47 = vpop.permute.xlu0 %46
  %vm48 = vcmp.eq.s32.totalorder %v41, %v44
  %vm49 = vcmp.eq.s32.totalorder %v41, %v47
  %v50 = vsel %vm48, 1, 0
  %v51 = vsel %vm49, 1, 0
  %v52 = vcvt.s32.f32 %v50
  %v53 = vcvt.s32.f32 %v51
  %v54 = vld [vmem:[%s2] sm:$0xff]
  %v55 = vld [vmem:[%s2 + $0x8] sm:$0xff]
  %v56 = vld [vmem:[%s2 + $0x10] sm:$0xff]
  %v57 = vld [vmem:[%s2 + $0x18] sm:$0xff]
  %v58 = vld [vmem:[%s2 + $0x20] sm:$0xff]
  %v59 = vld [vmem:[%s2 + $0x28] sm:$0xff]
  %v60 = vld [vmem:[%s2 + $0x30] sm:$0xff]
  %v61 = vld [vmem:[%s2 + $0x38] sm:$0xff]
  %vm62 = vcmask 523264
  %v64 = vsel %vm62, %v52, 0
  %v67 = vsel %vm62, %v53, 0
  %69 = vmatprep.subr.mxu0 0.0
  %70 = vmatpush1.msra.mxu0 %v54
  %71 = vmatprep.subr.mxu0 0.0
  %72 = vmatpush1.msra.mxu0 %v55
  %73 = vmatprep.subr.mxu0 0.0
  %74 = vmatpush1.msra.mxu0 %v56
  %75 = vmatprep.subr.mxu0 0.0
  %76 = vmatpush1.msra.mxu0 %v57
  %77 = vmatprep.subr.mxu0 0.0
  %78 = vmatpush1.msra.mxu0 %v58
  %79 = vmatprep.subr.mxu0 0.0
  %80 = vmatpush1.msra.mxu0 %v59
  %81 = vmatprep.subr.mxu0 0.0
  %82 = vmatpush1.msra.mxu0 %v60
  %83 = vmatprep.subr.mxu0 0.0
  %84 = vmatpush1.msra.mxu0 %v61
  %85 = vmatprep.subr.mxu0 0.0
  %86 = vmatpush1.msra.mxu0 0.0
  %87 = vmatprep.subr.mxu0 0.0
  %88 = vmatpush1.msra.mxu0 0.0
  %89 = vmatprep.subr.mxu0 0.0
  %90 = vmatpush1.msra.mxu0 0.0
  %91 = vmatprep.subr.mxu0 0.0
  %92 = vmatpush1.msra.mxu0 0.0
  %93 = vmatprep.subr.mxu0 0.0
  %94 = vmatpush1.msra.mxu0 0.0
  %95 = vmatprep.subr.mxu0 0.0
  %96 = vmatpush1.msra.mxu0 0.0
  %97 = vmatprep.subr.mxu0 0.0
  %98 = vmatpush1.msra.mxu0 0.0
  %99 = vmatprep.subr.mxu0 0.0
  %100 = vmatpush1.msra.mxu0 0.0
  %101 = vmatprep.subr.mxu0 0.0
  %102 = vmatpush1.msra.mxu0 0.0
  %103 = vmatprep.subr.mxu0 0.0
  %104 = vmatpush1.msra.mxu0 0.0
  %105 = vmatprep.subr.mxu0 0.0
  %106 = vmatpush1.msra.mxu0 0.0
  %107 = vmatprep.subr.mxu0 0.0
  %108 = vmatpush1.msra.mxu0 0.0
  %109 = vmatprep.subr.mxu0 0.0
  %110 = vmatpush1.msra.mxu0 0.0
  %111 = vmatprep.subr.mxu0 0.0
  %112 = vmatpush1.msra.mxu0 0.0
  %113 = vmatprep.subr.mxu0 0.0
  %114 = vmatpush1.msra.mxu0 0.0
  %115 = vmatprep.subr.mxu0 0.0
  %116 = vmatpush1.msra.mxu0 0.0
  %117 = vmatprep.subr.mxu0 0.0
  %118 = vmatpush1.msra.mxu0 0.0
  %119 = vmatprep.subr.mxu0 0.0
  %120 = vmatpush1.msra.mxu0 0.0
  %121 = vmatprep.subr.mxu0 0.0
  %122 = vmatpush1.msra.mxu0 0.0
  %123 = vmatprep.subr.mxu0 0.0
  %124 = vmatpush1.msra.mxu0 0.0
  %125 = vmatprep.subr.mxu0 0.0
  %126 = vmatpush1.msra.mxu0 0.0
  %127 = vmatprep.subr.mxu0 0.0
  %128 = vmatpush1.msra.mxu0 0.0
  %129 = vmatprep.subr.mxu0 0.0
  %130 = vmatpush1.msra.mxu0 0.0
  %131 = vmatprep.subr.mxu0 0.0
  %132 = vmatpush1.msra.mxu0 0.0
  %133 = vmatprep.mubr.f32.mxu0 0.0
  %134 = vmatmul.mubr.f32.gmra.mrb[0].mxu0 %v64
  %v135 = vpop.f32.mrb[0].mxu0
  %v136 = vadd.f32 0.0, %v135
  %v137 = vpop.f32.mrb[0].mxu0
  %138 = vmatprep.mubr.f32.mxu0 0.0
  %139 = vmatmul.mubr.f32.gmra.mrb[0].mxu0 %v67
  %v140 = vpop.f32.mrb[0].mxu0
  %v141 = vadd.f32 0.0, %v140
  %v142 = vpop.f32.mrb[0].mxu0
  %143 = vdwg.mxu0
  %vm144 = vcmask 261120
  %v145 = vsel %vm144, %v136, 0.0
  %146 = vadd.xlane.f32.xlu0 %v145
  %v147 = vpop.xlane.xlu0 %146
  %v148 = vsel %vm144, %v141, 0.0
  %149 = vadd.xlane.f32.xlu0 %v148
  %v150 = vpop.xlane.xlu0 %149
  %v151 = vrcp.pop 32.0
  %v152 = vmul.f32 %v147, %v151
  %v153 = vmul.f32 %v150, %v151
  %v154 = vsub.f32 %v136, %v152
  %v155 = vsub.f32 %v141, %v153
  %v156 = vmul.f32 %v154, %v154
  %v157 = vmul.f32 %v155, %v155
  %v158 = vsel %vm144, %v156, 0.0
  %159 = vadd.xlane.f32.xlu0 %v158
  %v160 = vpop.xlane.xlu0 %159
  %v161 = vsel %vm144, %v157, 0.0
  %162 = vadd.xlane.f32.xlu0 %v161
  %v163 = vpop.xlane.xlu0 %162
  %v164 = vmul.f32 %v160, %v151
  %v165 = vmul.f32 %v163, %v151
  %v166 = vadd.f32 %v164, 1e-05
  %v167 = vadd.f32 %v165, 1e-05
  %v168 = vrsqrt.pop %v166
  %v169 = vrsqrt.pop %v167
  %v170 = vmul.f32 %v154, %v168
  %v171 = vmul.f32 %v155, %v169
  %v172 = vld [vmem:[%s3] sm:$0x1]
  %v173 = vlaneseq
  %v174 = vshrl.u32 %v173, 7
  %v175 = vsub.s32 0, %v174
  %v176 = vrot.slane %v172, %v175
  %v177 = vmul.f32 %v170, %v176
  %v178 = vmul.f32 %v171, %v176
  %v179 = vld [vmem:[%s3 + $0x1] sm:$0x1]
  %v180 = vlaneseq
  %v181 = vshrl.u32 %v180, 7
  %v182 = vsub.s32 0, %v181
  %v183 = vrot.slane %v179, %v182
  %v184 = vadd.f32 %v177, %v183
  %v185 = vadd.f32 %v178, %v183
  %v186 = vld [vmem:[%s1] sm:$0xff]
  %v187 = vld [vmem:[%s1 + $0x8] sm:$0xff]
  %v188 = vmin.f32 %v186, 512.0
  %v189 = vmin.f32 %v187, 512.0
  %v190 = vld [vmem:[%s3 + $0x2] sm:$0x1]
  %192 = vset.pattern.permute.xlu0 0
  %193 = vperm.xlu0 %192, %v188
  %v194 = vpop.permute.xlu0 %193
  %197 = vset.pattern.permute.xlu0 0
  %198 = vperm.xlu0 %197, %v189
  %v199 = vpop.permute.xlu0 %198
  %v201 = vlaneseq
  %v202 = vshrl.u32 %v201, 7
  %v203 = vsub.s32 0, %v202
  %v204 = vrot.slane %v190, %v203
  %v205 = vmul.f32 %v194, %v204
  %v206 = vmul.f32 %v199, %v204
  %v207 = vld [vmem:[%s3 + $0x3] sm:$0x1]
  %v208 = vlaneseq
  %v209 = vshrl.u32 %v208, 7
  %v210 = vsub.s32 0, %v209
  %v211 = vrot.slane %v207, %v210
  %v212 = vadd.f32 %v205, %v211
  %v213 = vadd.f32 %v206, %v211
  %v214 = vmax.f32 %v212, 0.0
  %v215 = vmax.f32 %v213, 0.0
  %v216 = vld [vmem:[%s9] sm:$0xff]
  %v217 = vld [vmem:[%s9 + $0x8] sm:$0xff]
  %v218 = vld [vmem:[%s9 + $0x10] sm:$0xff]
  %v219 = vld [vmem:[%s9 + $0x18] sm:$0xff]
  %v220 = vld [vmem:[%s3 + $0x4] sm:$0x1]
  %v221 = vlaneseq
  %v222 = vshrl.u32 %v221, 7
  %v223 = vsub.s32 0, %v222
  %v224 = vrot.slane %v220, %v223
  %v226 = vsel %vm144, %v214, 0
  %v229 = vsel %vm144, %v215, 0
  %231 = vmatprep.subr.mxu0 0.0
  %232 = vmatpush1.msra.mxu0 %v216
  %233 = vmatprep.subr.mxu0 0.0
  %234 = vmatpush1.msra.mxu0 %v217
  %235 = vmatprep.subr.mxu0 0.0
  %236 = vmatpush1.msra.mxu0 %v218
  %237 = vmatprep.subr.mxu0 0.0
  %238 = vmatpush1.msra.mxu0 %v219
  %239 = vmatprep.subr.mxu0 0.0
  %240 = vmatpush1.msra.mxu0 0.0
  %241 = vmatprep.subr.mxu0 0.0
  %242 = vmatpush1.msra.mxu0 0.0
  %243 = vmatprep.subr.mxu0 0.0
  %244 = vmatpush1.msra.mxu0 0.0
  %245 = vmatprep.subr.mxu0 0.0
  %246 = vmatpush1.msra.mxu0 0.0
  %247 = vmatprep.subr.mxu0 0.0
  %248 = vmatpush1.msra.mxu0 0.0
  %249 = vmatprep.subr.mxu0 0.0
  %250 = vmatpush1.msra.mxu0 0.0
  %251 = vmatprep.subr.mxu0 0.0
  %252 = vmatpush1.msra.mxu0 0.0
  %253 = vmatprep.subr.mxu0 0.0
  %254 = vmatpush1.msra.mxu0 0.0
  %255 = vmatprep.subr.mxu0 0.0
  %256 = vmatpush1.msra.mxu0 0.0
  %257 = vmatprep.subr.mxu0 0.0
  %258 = vmatpush1.msra.mxu0 0.0
  %259 = vmatprep.subr.mxu0 0.0
  %260 = vmatpush1.msra.mxu0 0.0
  %261 = vmatprep.subr.mxu0 0.0
  %262 = vmatpush1.msra.mxu0 0.0
  %263 = vmatprep.subr.mxu0 0.0
  %264 = vmatpush1.msra.mxu0 0.0
  %265 = vmatprep.subr.mxu0 0.0
  %266 = vmatpush1.msra.mxu0 0.0
  %267 = vmatprep.subr.mxu0 0.0
  %268 = vmatpush1.msra.mxu0 0.0
  %269 = vmatprep.subr.mxu0 0.0
  %270 = vmatpush1.msra.mxu0 0.0
  %271 = vmatprep.subr.mxu0 0.0
  %272 = vmatpush1.msra.mxu0 0.0
  %273 = vmatprep.subr.mxu0 0.0
  %274 = vmatpush1.msra.mxu0 0.0
  %275 = vmatprep.subr.mxu0 0.0
  %276 = vmatpush1.msra.mxu0 0.0
  %277 = vmatprep.subr.mxu0 0.0
  %278 = vmatpush1.msra.mxu0 0.0
  %279 = vmatprep.subr.mxu0 0.0
  %280 = vmatpush1.msra.mxu0 0.0
  %281 = vmatprep.subr.mxu0 0.0
  %282 = vmatpush1.msra.mxu0 0.0
  %283 = vmatprep.subr.mxu0 0.0
  %284 = vmatpush1.msra.mxu0 0.0
  %285 = vmatprep.subr.mxu0 0.0
  %286 = vmatpush1.msra.mxu0 0.0
  %287 = vmatprep.subr.mxu0 0.0
  %288 = vmatpush1.msra.mxu0 0.0
  %289 = vmatprep.subr.mxu0 0.0
  %290 = vmatpush1.msra.mxu0 0.0
  %291 = vmatprep.subr.mxu0 0.0
  %292 = vmatpush1.msra.mxu0 0.0
  %293 = vmatprep.subr.mxu0 0.0
  %294 = vmatpush1.msra.mxu0 0.0
  %295 = vmatprep.mubr.f32.mxu0 0.0
  %296 = vmatmul.mubr.f32.gmra.mrb[0].mxu0 %v226
  %v297 = vpop.f32.mrb[0].mxu0
  %v298 = vadd.f32 %v224, %v297
  %v299 = vpop.f32.mrb[0].mxu0
  %300 = vmatprep.mubr.f32.mxu0 0.0
  %301 = vmatmul.mubr.f32.gmra.mrb[0].mxu0 %v229
  %v302 = vpop.f32.mrb[0].mxu0
  %v303 = vadd.f32 %v224, %v302
  %v304 = vpop.f32.mrb[0].mxu0
  %305 = vdwg.mxu0
  %v306 = vsel %vm144, %v298, 0.0
  %307 = vadd.xlane.f32.xlu0 %v306
  %v308 = vpop.xlane.xlu0 %307
  %v309 = vsel %vm144, %v303, 0.0
  %310 = vadd.xlane.f32.xlu0 %v309
  %v311 = vpop.xlane.xlu0 %310
  %v312 = vmul.f32 %v308, %v151
  %v313 = vmul.f32 %v311, %v151
  %v314 = vsub.f32 %v298, %v312
  %v315 = vsub.f32 %v303, %v313
  %v316 = vmul.f32 %v314, %v314
  %v317 = vmul.f32 %v315, %v315
  %v318 = vsel %vm144, %v316, 0.0
  %319 = vadd.xlane.f32.xlu0 %v318
  %v320 = vpop.xlane.xlu0 %319
  %v321 = vsel %vm144, %v317, 0.0
  %322 = vadd.xlane.f32.xlu0 %v321
  %v323 = vpop.xlane.xlu0 %322
  %v324 = vmul.f32 %v320, %v151
  %v325 = vmul.f32 %v323, %v151
  %v326 = vadd.f32 %v324, 1e-05
  %v327 = vadd.f32 %v325, 1e-05
  %v328 = vrsqrt.pop %v326
  %v329 = vrsqrt.pop %v327
  %v330 = vmul.f32 %v314, %v328
  %v331 = vmul.f32 %v315, %v329
  %v332 = vld [vmem:[%s3 + $0x5] sm:$0x1]
  %v333 = vlaneseq
  %v334 = vshrl.u32 %v333, 7
  %v335 = vsub.s32 0, %v334
  %v336 = vrot.slane %v332, %v335
  %v337 = vmul.f32 %v330, %v336
  %v338 = vmul.f32 %v331, %v336
  %v339 = vld [vmem:[%s3 + $0x6] sm:$0x1]
  %v340 = vlaneseq
  %v341 = vshrl.u32 %v340, 7
  %v342 = vsub.s32 0, %v341
  %v343 = vrot.slane %v339, %v342
  %v344 = vadd.f32 %v337, %v343
  %v345 = vadd.f32 %v338, %v343
  %v346 = vadd.f32 %v184, %v344
  %v347 = vadd.f32 %v185, %v345
  %v348 = vld [vmem:[%s4] sm:$0xff]
  %v349 = vld [vmem:[%s4 + $0x8] sm:$0xff]
  %v350 = vld [vmem:[%s4 + $0x10] sm:$0xff]
  %v351 = vld [vmem:[%s4 + $0x18] sm:$0xff]
  %v353 = vsel %vm144, %v346, 0
  %v356 = vsel %vm144, %v347, 0
  %358 = vmatprep.subr.mxu0 0.0
  %359 = vmatpush1.msra.mxu0 %v348
  %360 = vmatprep.subr.mxu0 0.0
  %361 = vmatpush1.msra.mxu0 %v349
  %362 = vmatprep.subr.mxu0 0.0
  %363 = vmatpush1.msra.mxu0 %v350
  %364 = vmatprep.subr.mxu0 0.0
  %365 = vmatpush1.msra.mxu0 %v351
  %366 = vmatprep.subr.mxu0 0.0
  %367 = vmatpush1.msra.mxu0 0.0
  %368 = vmatprep.subr.mxu0 0.0
  %369 = vmatpush1.msra.mxu0 0.0
  %370 = vmatprep.subr.mxu0 0.0
  %371 = vmatpush1.msra.mxu0 0.0
  %372 = vmatprep.subr.mxu0 0.0
  %373 = vmatpush1.msra.mxu0 0.0
  %374 = vmatprep.subr.mxu0 0.0
  %375 = vmatpush1.msra.mxu0 0.0
  %376 = vmatprep.subr.mxu0 0.0
  %377 = vmatpush1.msra.mxu0 0.0
  %378 = vmatprep.subr.mxu0 0.0
  %379 = vmatpush1.msra.mxu0 0.0
  %380 = vmatprep.subr.mxu0 0.0
  %381 = vmatpush1.msra.mxu0 0.0
  %382 = vmatprep.subr.mxu0 0.0
  %383 = vmatpush1.msra.mxu0 0.0
  %384 = vmatprep.subr.mxu0 0.0
  %385 = vmatpush1.msra.mxu0 0.0
  %386 = vmatprep.subr.mxu0 0.0
  %387 = vmatpush1.msra.mxu0 0.0
  %388 = vmatprep.subr.mxu0 0.0
  %389 = vmatpush1.msra.mxu0 0.0
  %390 = vmatprep.subr.mxu0 0.0
  %391 = vmatpush1.msra.mxu0 0.0
  %392 = vmatprep.subr.mxu0 0.0
  %393 = vmatpush1.msra.mxu0 0.0
  %394 = vmatprep.subr.mxu0 0.0
  %395 = vmatpush1.msra.mxu0 0.0
  %396 = vmatprep.subr.mxu0 0.0
  %397 = vmatpush1.msra.mxu0 0.0
  %398 = vmatprep.subr.mxu0 0.0
  %399 = vmatpush1.msra.mxu0 0.0
  %400 = vmatprep.subr.mxu0 0.0
  %401 = vmatpush1.msra.mxu0 0.0
  %402 = vmatprep.subr.mxu0 0.0
  %403 = vmatpush1.msra.mxu0 0.0
  %404 = vmatprep.subr.mxu0 0.0
  %405 = vmatpush1.msra.mxu0 0.0
  %406 = vmatprep.subr.mxu0 0.0
  %407 = vmatpush1.msra.mxu0 0.0
  %408 = vmatprep.subr.mxu0 0.0
  %409 = vmatpush1.msra.mxu0 0.0
  %410 = vmatprep.subr.mxu0 0.0
  %411 = vmatpush1.msra.mxu0 0.0
  %412 = vmatprep.subr.mxu0 0.0
  %413 = vmatpush1.msra.mxu0 0.0
  %414 = vmatprep.subr.mxu0 0.0
  %415 = vmatpush1.msra.mxu0 0.0
  %416 = vmatprep.subr.mxu0 0.0
  %417 = vmatpush1.msra.mxu0 0.0
  %418 = vmatprep.subr.mxu0 0.0
  %419 = vmatpush1.msra.mxu0 0.0
  %420 = vmatprep.subr.mxu0 0.0
  %421 = vmatpush1.msra.mxu0 0.0
  %422 = vmatprep.mubr.f32.mxu0 0.0
  %423 = vmatmul.mubr.f32.gmra.mrb[0].mxu0 %v353
  %v424 = vpop.f32.mrb[0].mxu0
  %v425 = vadd.f32 0.0, %v424
  %v426 = vpop.f32.mrb[0].mxu0
  %427 = vmatprep.mubr.f32.mxu0 0.0
  %428 = vmatmul.mubr.f32.gmra.mrb[0].mxu0 %v356
  %v429 = vpop.f32.mrb[0].mxu0
  %v430 = vadd.f32 0.0, %v429
  %v431 = vpop.f32.mrb[0].mxu0
  %432 = vdwg.mxu0
  %v433 = vld [vmem:[%s3 + $0x7] sm:$0x1]
  %v434 = vlaneseq
  %v435 = vshrl.u32 %v434, 7
  %v436 = vsub.s32 0, %v435
  %v437 = vrot.slane %v433, %v436
  %v438 = vadd.f32 %v425, %v437
  %v439 = vadd.f32 %v430, %v437
  %v440 = vmul.f32 %v438, 0.35355338
  %v441 = vmul.f32 %v439, 0.35355338
  %v442 = vld [vmem:[%s3 + $0x8] sm:$0x1]
  %v443 = vlaneseq
  %v444 = vshrl.u32 %v443, 7
  %v445 = vsub.s32 0, %v444
  %v446 = vrot.slane %v442, %v445
  %448 = vrot.lane.b32.xlu0 %v446, 32
  %v449 = vpop.permute.xlu0 %448
  %v451 = vadd.f32 %v425, %v449
  %v452 = vadd.f32 %v430, %v449
  %v453 = vld [vmem:[%s3 + $0x9] sm:$0x1]
  %v454 = vlaneseq
  %v455 = vshrl.u32 %v454, 7
  %v456 = vsub.s32 0, %v455
  %v457 = vrot.slane %v453, %v456
  %459 = vrot.lane.b32.xlu0 %v457, 64
  %v460 = vpop.permute.xlu0 %459
  %v462 = vadd.f32 %v425, %v460
  %v463 = vadd.f32 %v430, %v460
  %465 = vrot.lane.b32.xlu0 %v451, 96
  %v466 = vpop.permute.xlu0 %465
  %vm467 = vcmask 64512
  %v469 = vsel %vm467, %v440, 0
  %v471 = vsel %vm467, %v466, 0
  %473 = vmatprep.subr.mxu0 0.0
  %474 = vmatpush1.xpose.msra.mxu0 %v471
  %475 = vmatprep.subr.mxu0 0.0
  %476 = vmatpush1.xpose.msra.mxu0 0.0
  %477 = vmatprep.subr.mxu0 0.0
  %478 = vmatpush1.xpose.msra.mxu0 0.0
  %479 = vmatprep.subr.mxu0 0.0
  %480 = vmatpush1.xpose.msra.mxu0 0.0
  %481 = vmatprep.subr.mxu0 0.0
  %482 = vmatpush1.xpose.msra.mxu0 0.0
  %483 = vmatprep.subr.mxu0 0.0
  %484 = vmatpush1.xpose.msra.mxu0 0.0
  %485 = vmatprep.subr.mxu0 0.0
  %486 = vmatpush1.xpose.msra.mxu0 0.0
  %487 = vmatprep.subr.mxu0 0.0
  %488 = vmatpush1.xpose.msra.mxu0 0.0
  %489 = vmatprep.subr.mxu0 0.0
  %490 = vmatpush1.xpose.msra.mxu0 0.0
  %491 = vmatprep.subr.mxu0 0.0
  %492 = vmatpush1.xpose.msra.mxu0 0.0
  %493 = vmatprep.subr.mxu0 0.0
  %494 = vmatpush1.xpose.msra.mxu0 0.0
  %495 = vmatprep.subr.mxu0 0.0
  %496 = vmatpush1.xpose.msra.mxu0 0.0
  %497 = vmatprep.subr.mxu0 0.0
  %498 = vmatpush1.xpose.msra.mxu0 0.0
  %499 = vmatprep.subr.mxu0 0.0
  %500 = vmatpush1.xpose.msra.mxu0 0.0
  %501 = vmatprep.subr.mxu0 0.0
  %502 = vmatpush1.xpose.msra.mxu0 0.0
  %503 = vmatprep.subr.mxu0 0.0
  %504 = vmatpush1.xpose.msra.mxu0 0.0
  %505 = vmatprep.subr.mxu0 0.0
  %506 = vmatpush1.xpose.msra.mxu0 0.0
  %507 = vmatprep.subr.mxu0 0.0
  %508 = vmatpush1.xpose.msra.mxu0 0.0
  %509 = vmatprep.subr.mxu0 0.0
  %510 = vmatpush1.xpose.msra.mxu0 0.0
  %511 = vmatprep.subr.mxu0 0.0
  %512 = vmatpush1.xpose.msra.mxu0 0.0
  %513 = vmatprep.subr.mxu0 0.0
  %514 = vmatpush1.xpose.msra.mxu0 0.0
  %515 = vmatprep.subr.mxu0 0.0
  %516 = vmatpush1.xpose.msra.mxu0 0.0
  %517 = vmatprep.subr.mxu0 0.0
  %518 = vmatpush1.xpose.msra.mxu0 0.0
  %519 = vmatprep.subr.mxu0 0.0
  %520 = vmatpush1.xpose.msra.mxu0 0.0
  %521 = vmatprep.subr.mxu0 0.0
  %522 = vmatpush1.xpose.msra.mxu0 0.0
  %523 = vmatprep.subr.mxu0 0.0
  %524 = vmatpush1.xpose.msra.mxu0 0.0
  %525 = vmatprep.subr.mxu0 0.0
  %526 = vmatpush1.xpose.msra.mxu0 0.0
  %527 = vmatprep.subr.mxu0 0.0
  %528 = vmatpush1.xpose.msra.mxu0 0.0
  %529 = vmatprep.subr.mxu0 0.0
  %530 = vmatpush1.xpose.msra.mxu0 0.0
  %531 = vmatprep.subr.mxu0 0.0
  %532 = vmatpush1.xpose.msra.mxu0 0.0
  %533 = vmatprep.subr.mxu0 0.0
  %534 = vmatpush1.xpose.msra.mxu0 0.0
  %535 = vmatprep.subr.mxu0 0.0
  %536 = vmatpush1.xpose.msra.mxu0 0.0
  %537 = vmatprep.mubr.f32.mxu0 0.0
  %538 = vmatmul.mubr.f32.gmra.mrb[0].mxu0 %v469
  %v539 = vpop.f32.mrb[0].mxu0
  %v540 = vadd.f32 0.0, %v539
  %v541 = vpop.f32.mrb[0].mxu0
  %542 = vdwg.mxu0
  %544 = vrot.lane.b32.xlu0 %v452, 96
  %v545 = vpop.permute.xlu0 %544
  %v547 = vsel %vm467, %v441, 0
  %v549 = vsel %vm467, %v545, 0
  %551 = vmatprep.subr.mxu0 0.0
  %552 = vmatpush1.xpose.msra.mxu0 %v549
  %553 = vmatprep.subr.mxu0 0.0
  %554 = vmatpush1.xpose.msra.mxu0 0.0
  %555 = vmatprep.subr.mxu0 0.0
  %556 = vmatpush1.xpose.msra.mxu0 0.0
  %557 = vmatprep.subr.mxu0 0.0
  %558 = vmatpush1.xpose.msra.mxu0 0.0
  %559 = vmatprep.subr.mxu0 0.0
  %560 = vmatpush1.xpose.msra.mxu0 0.0
  %561 = vmatprep.subr.mxu0 0.0
  %562 = vmatpush1.xpose.msra.mxu0 0.0
  %563 = vmatprep.subr.mxu0 0.0
  %564 = vmatpush1.xpose.msra.mxu0 0.0
  %565 = vmatprep.subr.mxu0 0.0
  %566 = vmatpush1.xpose.msra.mxu0 0.0
  %567 = vmatprep.subr.mxu0 0.0
  %568 = vmatpush1.xpose.msra.mxu0 0.0
  %569 = vmatprep.subr.mxu0 0.0
  %570 = vmatpush1.xpose.msra.mxu0 0.0
  %571 = vmatprep.subr.mxu0 0.0
  %572 = vmatpush1.xpose.msra.mxu0 0.0
  %573 = vmatprep.subr.mxu0 0.0
  %574 = vmatpush1.xpose.msra.mxu0 0.0
  %575 = vmatprep.subr.mxu0 0.0
  %576 = vmatpush1.xpose.msra.mxu0 0.0
  %577 = vmatprep.subr.mxu0 0.0
  %578 = vmatpush1.xpose.msra.mxu0 0.0
  %579 = vmatprep.subr.mxu0 0.0
  %580 = vmatpush1.xpose.msra.mxu0 0.0
  %581 = vmatprep.subr.mxu0 0.0
  %582 = vmatpush1.xpose.msra.mxu0 0.0
  %583 = vmatprep.subr.mxu0 0.0
  %584 = vmatpush1.xpose.msra.mxu0 0.0
  %585 = vmatprep.subr.mxu0 0.0
  %586 = vmatpush1.xpose.msra.mxu0 0.0
  %587 = vmatprep.subr.mxu0 0.0
  %588 = vmatpush1.xpose.msra.mxu0 0.0
  %589 = vmatprep.subr.mxu0 0.0
  %590 = vmatpush1.xpose.msra.mxu0 0.0
  %591 = vmatprep.subr.mxu0 0.0
  %592 = vmatpush1.xpose.msra.mxu0 0.0
  %593 = vmatprep.subr.mxu0 0.0
  %594 = vmatpush1.xpose.msra.mxu0 0.0
  %595 = vmatprep.subr.mxu0 0.0
  %596 = vmatpush1.xpose.msra.mxu0 0.0
  %597 = vmatprep.subr.mxu0 0.0
  %598 = vmatpush1.xpose.msra.mxu0 0.0
  %599 = vmatprep.subr.mxu0 0.0
  %600 = vmatpush1.xpose.msra.mxu0 0.0
  %601 = vmatprep.subr.mxu0 0.0
  %602 = vmatpush1.xpose.msra.mxu0 0.0
  %603 = vmatprep.subr.mxu0 0.0
  %604 = vmatpush1.xpose.msra.mxu0 0.0
  %605 = vmatprep.subr.mxu0 0.0
  %606 = vmatpush1.xpose.msra.mxu0 0.0
  %607 = vmatprep.subr.mxu0 0.0
  %608 = vmatpush1.xpose.msra.mxu0 0.0
  %609 = vmatprep.subr.mxu0 0.0
  %610 = vmatpush1.xpose.msra.mxu0 0.0
  %611 = vmatprep.subr.mxu0 0.0
  %612 = vmatpush1.xpose.msra.mxu0 0.0
  %613 = vmatprep.subr.mxu0 0.0
  %614 = vmatpush1.xpose.msra.mxu0 0.0
  %615 = vmatprep.mubr.f32.mxu0 0.0
  %616 = vmatmul.mubr.f32.gmra.mrb[0].mxu0 %v547
  %v617 = vpop.f32.mrb[0].mxu0
  %v618 = vadd.f32 0.0, %v617
  %v619 = vpop.f32.mrb[0].mxu0
  %620 = vdwg.mxu0
  %v621 = vsel %vm467, %v540, -inf
  %622 = vmax.xlane.f32.xlu0 %v621
  %v623 = vpop.xlane.xlu0 %622
  %v624 = vsel %vm467, %v618, -inf
  %625 = vmax.xlane.f32.xlu0 %v624
  %v626 = vpop.xlane.xlu0 %625
  %v627 = vsub.f32 %v540, %v623
  %v628 = vsub.f32 %v618, %v626
  %v629 = vmul.f32 %v627, 1.442695
  %v630 = vpow.pop %v629
  %v631 = vmul.f32 %v628, 1.442695
  %v632 = vpow.pop %v631
  %v633 = vsel %vm467, %v630, 0.0
  %634 = vadd.xlane.f32.xlu0 %v633
  %v635 = vpop.xlane.xlu0 %634
  %v636 = vsel %vm467, %v632, 0.0
  %637 = vadd.xlane.f32.xlu0 %v636
  %v638 = vpop.xlane.xlu0 %637
  %v639 = vrcp.pop %v635
  %v640 = vrcp.pop %v638
  %v641 = vmul.f32 %v630, %v639
  %v642 = vmul.f32 %v632, %v640
  %644 = vrot.lane.b32.xlu0 %v462, 64
  %v645 = vpop.permute.xlu0 %644
  %v648 = vsel %vm467, %v641, 0
  %650 = vmatprep.subr.mxu0 0.0
  %651 = vmatpush1.msra.mxu0 %v645
  %652 = vmatprep.subr.mxu0 0.0
  %653 = vmatpush1.msra.mxu0 0.0
  %654 = vmatprep.subr.mxu0 0.0
  %655 = vmatpush1.msra.mxu0 0.0
  %656 = vmatprep.subr.mxu0 0.0
  %657 = vmatpush1.msra.mxu0 0.0
  %658 = vmatprep.subr.mxu0 0.0
  %659 = vmatpush1.msra.mxu0 0.0
  %660 = vmatprep.subr.mxu0 0.0
  %661 = vmatpush1.msra.mxu0 0.0
  %662 = vmatprep.subr.mxu0 0.0
  %663 = vmatpush1.msra.mxu0 0.0
  %664 = vmatprep.subr.mxu0 0.0
  %665 = vmatpush1.msra.mxu0 0.0
  %666 = vmatprep.subr.mxu0 0.0
  %667 = vmatpush1.msra.mxu0 0.0
  %668 = vmatprep.subr.mxu0 0.0
  %669 = vmatpush1.msra.mxu0 0.0
  %670 = vmatprep.subr.mxu0 0.0
  %671 = vmatpush1.msra.mxu0 0.0
  %672 = vmatprep.subr.mxu0 0.0
  %673 = vmatpush1.msra.mxu0 0.0
  %674 = vmatprep.subr.mxu0 0.0
  %675 = vmatpush1.msra.mxu0 0.0
  %676 = vmatprep.subr.mxu0 0.0
  %677 = vmatpush1.msra.mxu0 0.0
  %678 = vmatprep.subr.mxu0 0.0
  %679 = vmatpush1.msra.mxu0 0.0
  %680 = vmatprep.subr.mxu0 0.0
  %681 = vmatpush1.msra.mxu0 0.0
  %682 = vmatprep.subr.mxu0 0.0
  %683 = vmatpush1.msra.mxu0 0.0
  %684 = vmatprep.subr.mxu0 0.0
  %685 = vmatpush1.msra.mxu0 0.0
  %686 = vmatprep.subr.mxu0 0.0
  %687 = vmatpush1.msra.mxu0 0.0
  %688 = vmatprep.subr.mxu0 0.0
  %689 = vmatpush1.msra.mxu0 0.0
  %690 = vmatprep.subr.mxu0 0.0
  %691 = vmatpush1.msra.mxu0 0.0
  %692 = vmatprep.subr.mxu0 0.0
  %693 = vmatpush1.msra.mxu0 0.0
  %694 = vmatprep.subr.mxu0 0.0
  %695 = vmatpush1.msra.mxu0 0.0
  %696 = vmatprep.subr.mxu0 0.0
  %697 = vmatpush1.msra.mxu0 0.0
  %698 = vmatprep.subr.mxu0 0.0
  %699 = vmatpush1.msra.mxu0 0.0
  %700 = vmatprep.subr.mxu0 0.0
  %701 = vmatpush1.msra.mxu0 0.0
  %702 = vmatprep.subr.mxu0 0.0
  %703 = vmatpush1.msra.mxu0 0.0
  %704 = vmatprep.subr.mxu0 0.0
  %705 = vmatpush1.msra.mxu0 0.0
  %706 = vmatprep.subr.mxu0 0.0
  %707 = vmatpush1.msra.mxu0 0.0
  %708 = vmatprep.subr.mxu0 0.0
  %709 = vmatpush1.msra.mxu0 0.0
  %710 = vmatprep.subr.mxu0 0.0
  %711 = vmatpush1.msra.mxu0 0.0
  %712 = vmatprep.subr.mxu0 0.0
  %713 = vmatpush1.msra.mxu0 0.0
  %714 = vmatprep.mubr.f32.mxu0 0.0
  %715 = vmatmul.mubr.f32.gmra.mrb[0].mxu0 %v648
  %v716 = vpop.f32.mrb[0].mxu0
  %v717 = vadd.f32 0.0, %v716
  %v718 = vpop.f32.mrb[0].mxu0
  %719 = vdwg.mxu0
  %721 = vrot.lane.b32.xlu0 %v463, 64
  %v722 = vpop.permute.xlu0 %721
  %v725 = vsel %vm467, %v642, 0
  %727 = vmatprep.subr.mxu0 0.0
  %728 = vmatpush1.msra.mxu0 %v722
  %729 = vmatprep.subr.mxu0 0.0
  %730 = vmatpush1.msra.mxu0 0.0
  %731 = vmatprep.subr.mxu0 0.0
  %732 = vmatpush1.msra.mxu0 0.0
  %733 = vmatprep.subr.mxu0 0.0
  %734 = vmatpush1.msra.mxu0 0.0
  %735 = vmatprep.subr.mxu0 0.0
  %736 = vmatpush1.msra.mxu0 0.0
  %737 = vmatprep.subr.mxu0 0.0
  %738 = vmatpush1.msra.mxu0 0.0
  %739 = vmatprep.subr.mxu0 0.0
  %740 = vmatpush1.msra.mxu0 0.0
  %741 = vmatprep.subr.mxu0 0.0
  %742 = vmatpush1.msra.mxu0 0.0
  %743 = vmatprep.subr.mxu0 0.0
  %744 = vmatpush1.msra.mxu0 0.0
  %745 = vmatprep.subr.mxu0 0.0
  %746 = vmatpush1.msra.mxu0 0.0
  %747 = vmatprep.subr.mxu0 0.0
  %748 = vmatpush1.msra.mxu0 0.0
  %749 = vmatprep.subr.mxu0 0.0
  %750 = vmatpush1.msra.mxu0 0.0
  %751 = vmatprep.subr.mxu0 0.0
  %752 = vmatpush1.msra.mxu0 0.0
  %753 = vmatprep.subr.mxu0 0.0
  %754 = vmatpush1.msra.mxu0 0.0
  %755 = vmatprep.subr.mxu0 0.0
  %756 = vmatpush1.msra.mxu0 0.0
  %757 = vmatprep.subr.mxu0 0.0
  %758 = vmatpush1.msra.mxu0 0.0
  %759 = vmatprep.subr.mxu0 0.0
  %760 = vmatpush1.msra.mxu0 0.0
  %761 = vmatprep.subr.mxu0 0.0
  %762 = vmatpush1.msra.mxu0 0.0
  %763 = vmatprep.subr.mxu0 0.0
  %764 = vmatpush1.msra.mxu0 0.0
  %765 = vmatprep.subr.mxu0 0.0
  %766 = vmatpush1.msra.mxu0 0.0
  %767 = vmatprep.subr.mxu0 0.0
  %768 = vmatpush1.msra.mxu0 0.0
  %769 = vmatprep.subr.mxu0 0.0
  %770 = vmatpush1.msra.mxu0 0.0
  %771 = vmatprep.subr.mxu0 0.0
  %772 = vmatpush1.msra.mxu0 0.0
  %773 = vmatprep.subr.mxu0 0.0
  %774 = vmatpush1.msra.mxu0 0.0
  %775 = vmatprep.subr.mxu0 0.0
  %776 = vmatpush1.msra.mxu0 0.0
  %777 = vmatprep.subr.mxu0 0.0
  %778 = vmatpush1.msra.mxu0 0.0
  %779 = vmatprep.subr.mxu0 0.0
  %780 = vmatpush1.msra.mxu0 0.0
  %781 = vmatprep.subr.mxu0 0.0
  %782 = vmatpush1.msra.mxu0 0.0
  %783 = vmatprep.subr.mxu0 0.0
  %784 = vmatpush1.msra.mxu0 0.0
  %785 = vmatprep.subr.mxu0 0.0
  %786 = vmatpush1.msra.mxu0 0.0
  %787 = vmatprep.subr.mxu0 0.0
  %788 = vmatpush1.msra.mxu0 0.0
  %789 = vmatprep.subr.mxu0 0.0
  %790 = vmatpush1.msra.mxu0 0.0
  %791 = vmatprep.mubr.f32.mxu0 0.0
  %792 = vmatmul.mubr.f32.gmra.mrb[0].mxu0 %v725
  %v793 = vpop.f32.mrb[0].mxu0
  %v794 = vadd.f32 0.0, %v793
  %v795 = vpop.f32.mrb[0].mxu0
  %796 = vdwg.mxu0
  %v797 = vld [vmem:[%s5] sm:$0xff]
  %798 = vrot.lane.b32.xlu0 %v440, 120
  %v799 = vpop.permute.xlu0 %798
  %800 = vrot.lane.b32.xlu0 %v451, 88
  %v801 = vpop.permute.xlu0 %800
  %v802 = vsel %vm467, %v799, 0
  %v804 = vsel %vm467, %v801, 0
  %806 = vmatprep.subr.mxu0 0.0
  %807 = vmatpush1.xpose.msra.mxu0 %v804
  %808 = vmatprep.subr.mxu0 0.0
  %809 = vmatpush1.xpose.msra.mxu0 0.0
  %810 = vmatprep.subr.mxu0 0.0
  %811 = vmatpush1.xpose.msra.mxu0 0.0
  %812 = vmatprep.subr.mxu0 0.0
  %813 = vmatpush1.xpose.msra.mxu0 0.0
  %814 = vmatprep.subr.mxu0 0.0
  %815 = vmatpush1.xpose.msra.mxu0 0.0
  %816 = vmatprep.subr.mxu0 0.0
  %817 = vmatpush1.xpose.msra.mxu0 0.0
  %818 = vmatprep.subr.mxu0 0.0
  %819 = vmatpush1.xpose.msra.mxu0 0.0
  %820 = vmatprep.subr.mxu0 0.0
  %821 = vmatpush1.xpose.msra.mxu0 0.0
  %822 = vmatprep.subr.mxu0 0.0
  %823 = vmatpush1.xpose.msra.mxu0 0.0
  %824 = vmatprep.subr.mxu0 0.0
  %825 = vmatpush1.xpose.msra.mxu0 0.0
  %826 = vmatprep.subr.mxu0 0.0
  %827 = vmatpush1.xpose.msra.mxu0 0.0
  %828 = vmatprep.subr.mxu0 0.0
  %829 = vmatpush1.xpose.msra.mxu0 0.0
  %830 = vmatprep.subr.mxu0 0.0
  %831 = vmatpush1.xpose.msra.mxu0 0.0
  %832 = vmatprep.subr.mxu0 0.0
  %833 = vmatpush1.xpose.msra.mxu0 0.0
  %834 = vmatprep.subr.mxu0 0.0
  %835 = vmatpush1.xpose.msra.mxu0 0.0
  %836 = vmatprep.subr.mxu0 0.0
  %837 = vmatpush1.xpose.msra.mxu0 0.0
  %838 = vmatprep.subr.mxu0 0.0
  %839 = vmatpush1.xpose.msra.mxu0 0.0
  %840 = vmatprep.subr.mxu0 0.0
  %841 = vmatpush1.xpose.msra.mxu0 0.0
  %842 = vmatprep.subr.mxu0 0.0
  %843 = vmatpush1.xpose.msra.mxu0 0.0
  %844 = vmatprep.subr.mxu0 0.0
  %845 = vmatpush1.xpose.msra.mxu0 0.0
  %846 = vmatprep.subr.mxu0 0.0
  %847 = vmatpush1.xpose.msra.mxu0 0.0
  %848 = vmatprep.subr.mxu0 0.0
  %849 = vmatpush1.xpose.msra.mxu0 0.0
  %850 = vmatprep.subr.mxu0 0.0
  %851 = vmatpush1.xpose.msra.mxu0 0.0
  %852 = vmatprep.subr.mxu0 0.0
  %853 = vmatpush1.xpose.msra.mxu0 0.0
  %854 = vmatprep.subr.mxu0 0.0
  %855 = vmatpush1.xpose.msra.mxu0 0.0
  %856 = vmatprep.subr.mxu0 0.0
  %857 = vmatpush1.xpose.msra.mxu0 0.0
  %858 = vmatprep.subr.mxu0 0.0
  %859 = vmatpush1.xpose.msra.mxu0 0.0
  %860 = vmatprep.subr.mxu0 0.0
  %861 = vmatpush1.xpose.msra.mxu0 0.0
  %862 = vmatprep.subr.mxu0 0.0
  %863 = vmatpush1.xpose.msra.mxu0 0.0
  %864 = vmatprep.subr.mxu0 0.0
  %865 = vmatpush1.xpose.msra.mxu0 0.0
  %866 = vmatprep.subr.mxu0 0.0
  %867 = vmatpush1.xpose.msra.mxu0 0.0
  %868 = vmatprep.subr.mxu0 0.0
  %869 = vmatpush1.xpose.msra.mxu0 0.0
  %870 = vmatprep.mubr.f32.mxu0 0.0
  %871 = vmatmul.mubr.f32.gmra.mrb[0].mxu0 %v802
  %v872 = vpop.f32.mrb[0].mxu0
  %v873 = vadd.f32 0.0, %v872
  %v874 = vpop.f32.mrb[0].mxu0
  %875 = vdwg.mxu0
  %876 = vrot.lane.b32.xlu0 %v441, 120
  %v877 = vpop.permute.xlu0 %876
  %878 = vrot.lane.b32.xlu0 %v452, 88
  %v879 = vpop.permute.xlu0 %878
  %v880 = vsel %vm467, %v877, 0
  %v882 = vsel %vm467, %v879, 0
  %884 = vmatprep.subr.mxu0 0.0
  %885 = vmatpush1.xpose.msra.mxu0 %v882
  %886 = vmatprep.subr.mxu0 0.0
  %887 = vmatpush1.xpose.msra.mxu0 0.0
  %888 = vmatprep.subr.mxu0 0.0
  %889 = vmatpush1.xpose.msra.mxu0 0.0
  %890 = vmatprep.subr.mxu0 0.0
  %891 = vmatpush1.xpose.msra.mxu0 0.0
  %892 = vmatprep.subr.mxu0 0.0
  %893 = vmatpush1.xpose.msra.mxu0 0.0
  %894 = vmatprep.subr.mxu0 0.0
  %895 = vmatpush1.xpose.msra.mxu0 0.0
  %896 = vmatprep.subr.mxu0 0.0
  %897 = vmatpush1.xpose.msra.mxu0 0.0
  %898 = vmatprep.subr.mxu0 0.0
  %899 = vmatpush1.xpose.msra.mxu0 0.0
  %900 = vmatprep.subr.mxu0 0.0
  %901 = vmatpush1.xpose.msra.mxu0 0.0
  %902 = vmatprep.subr.mxu0 0.0
  %903 = vmatpush1.xpose.msra.mxu0 0.0
  %904 = vmatprep.subr.mxu0 0.0
  %905 = vmatpush1.xpose.msra.mxu0 0.0
  %906 = vmatprep.subr.mxu0 0.0
  %907 = vmatpush1.xpose.msra.mxu0 0.0
  %908 = vmatprep.subr.mxu0 0.0
  %909 = vmatpush1.xpose.msra.mxu0 0.0
  %910 = vmatprep.subr.mxu0 0.0
  %911 = vmatpush1.xpose.msra.mxu0 0.0
  %912 = vmatprep.subr.mxu0 0.0
  %913 = vmatpush1.xpose.msra.mxu0 0.0
  %914 = vmatprep.subr.mxu0 0.0
  %915 = vmatpush1.xpose.msra.mxu0 0.0
  %916 = vmatprep.subr.mxu0 0.0
  %917 = vmatpush1.xpose.msra.mxu0 0.0
  %918 = vmatprep.subr.mxu0 0.0
  %919 = vmatpush1.xpose.msra.mxu0 0.0
  %920 = vmatprep.subr.mxu0 0.0
  %921 = vmatpush1.xpose.msra.mxu0 0.0
  %922 = vmatprep.subr.mxu0 0.0
  %923 = vmatpush1.xpose.msra.mxu0 0.0
  %924 = vmatprep.subr.mxu0 0.0
  %925 = vmatpush1.xpose.msra.mxu0 0.0
  %926 = vmatprep.subr.mxu0 0.0
  %927 = vmatpush1.xpose.msra.mxu0 0.0
  %928 = vmatprep.subr.mxu0 0.0
  %929 = vmatpush1.xpose.msra.mxu0 0.0
  %930 = vmatprep.subr.mxu0 0.0
  %931 = vmatpush1.xpose.msra.mxu0 0.0
  %932 = vmatprep.subr.mxu0 0.0
  %933 = vmatpush1.xpose.msra.mxu0 0.0
  %934 = vmatprep.subr.mxu0 0.0
  %935 = vmatpush1.xpose.msra.mxu0 0.0
  %936 = vmatprep.subr.mxu0 0.0
  %937 = vmatpush1.xpose.msra.mxu0 0.0
  %938 = vmatprep.subr.mxu0 0.0
  %939 = vmatpush1.xpose.msra.mxu0 0.0
  %940 = vmatprep.subr.mxu0 0.0
  %941 = vmatpush1.xpose.msra.mxu0 0.0
  %942 = vmatprep.subr.mxu0 0.0
  %943 = vmatpush1.xpose.msra.mxu0 0.0
  %944 = vmatprep.subr.mxu0 0.0
  %945 = vmatpush1.xpose.msra.mxu0 0.0
  %946 = vmatprep.subr.mxu0 0.0
  %947 = vmatpush1.xpose.msra.mxu0 0.0
  %948 = vmatprep.mubr.f32.mxu0 0.0
  %949 = vmatmul.mubr.f32.gmra.mrb[0].mxu0 %v880
  %v950 = vpop.f32.mrb[0].mxu0
  %v951 = vadd.f32 0.0, %v950
  %v952 = vpop.f32.mrb[0].mxu0
  %953 = vdwg.mxu0
  %v954 = vsel %vm467, %v873, -inf
  %955 = vmax.xlane.f32.xlu0 %v954
  %v956 = vpop.xlane.xlu0 %955
  %v957 = vsel %vm467, %v951, -inf
  %958 = vmax.xlane.f32.xlu0 %v957
  %v959 = vpop.xlane.xlu0 %958
  %v960 = vsub.f32 %v873, %v956
  %v961 = vsub.f32 %v951, %v959
  %v962 = vmul.f32 %v960, 1.442695
  %v963 = vpow.pop %v962
  %v964 = vmul.f32 %v961, 1.442695
  %v965 = vpow.pop %v964
  %v966 = vsel %vm467, %v963, 0.0
  %967 = vadd.xlane.f32.xlu0 %v966
  %v968 = vpop.xlane.xlu0 %967
  %v969 = vsel %vm467, %v965, 0.0
  %970 = vadd.xlane.f32.xlu0 %v969
  %v971 = vpop.xlane.xlu0 %970
  %v972 = vrcp.pop %v968
  %v973 = vrcp.pop %v971
  %v974 = vmul.f32 %v963, %v972
  %v975 = vmul.f32 %v965, %v973
  %976 = vrot.lane.b32.xlu0 %v462, 56
  %v977 = vpop.permute.xlu0 %976
  %v980 = vsel %vm467, %v974, 0
  %982 = vmatprep.subr.mxu0 0.0
  %983 = vmatpush1.msra.mxu0 %v977
  %984 = vmatprep.subr.mxu0 0.0
  %985 = vmatpush1.msra.mxu0 0.0
  %986 = vmatprep.subr.mxu0 0.0
  %987 = vmatpush1.msra.mxu0 0.0
  %988 = vmatprep.subr.mxu0 0.0
  %989 = vmatpush1.msra.mxu0 0.0
  %990 = vmatprep.subr.mxu0 0.0
  %991 = vmatpush1.msra.mxu0 0.0
  %992 = vmatprep.subr.mxu0 0.0
  %993 = vmatpush1.msra.mxu0 0.0
  %994 = vmatprep.subr.mxu0 0.0
  %995 = vmatpush1.msra.mxu0 0.0
  %996 = vmatprep.subr.mxu0 0.0
  %997 = vmatpush1.msra.mxu0 0.0
  %998 = vmatprep.subr.mxu0 0.0
  %999 = vmatpush1.msra.mxu0 0.0
  %1000 = vmatprep.subr.mxu0 0.0
  %1001 = vmatpush1.msra.mxu0 0.0
  %1002 = vmatprep.subr.mxu0 0.0
  %1003 = vmatpush1.msra.mxu0 0.0
  %1004 = vmatprep.subr.mxu0 0.0
  %1005 = vmatpush1.msra.mxu0 0.0
  %1006 = vmatprep.subr.mxu0 0.0
  %1007 = vmatpush1.msra.mxu0 0.0
  %1008 = vmatprep.subr.mxu0 0.0
  %1009 = vmatpush1.msra.mxu0 0.0
  %1010 = vmatprep.subr.mxu0 0.0
  %1011 = vmatpush1.msra.mxu0 0.0
  %1012 = vmatprep.subr.mxu0 0.0
  %1013 = vmatpush1.msra.mxu0 0.0
  %1014 = vmatprep.subr.mxu0 0.0
  %1015 = vmatpush1.msra.mxu0 0.0
  %1016 = vmatprep.subr.mxu0 0.0
  %1017 = vmatpush1.msra.mxu0 0.0
  %1018 = vmatprep.subr.mxu0 0.0
  %1019 = vmatpush1.msra.mxu0 0.0
  %1020 = vmatprep.subr.mxu0 0.0
  %1021 = vmatpush1.msra.mxu0 0.0
  %1022 = vmatprep.subr.mxu0 0.0
  %1023 = vmatpush1.msra.mxu0 0.0
  %1024 = vmatprep.subr.mxu0 0.0
  %1025 = vmatpush1.msra.mxu0 0.0
  %1026 = vmatprep.subr.mxu0 0.0
  %1027 = vmatpush1.msra.mxu0 0.0
  %1028 = vmatprep.subr.mxu0 0.0
  %1029 = vmatpush1.msra.mxu0 0.0
  %1030 = vmatprep.subr.mxu0 0.0
  %1031 = vmatpush1.msra.mxu0 0.0
  %1032 = vmatprep.subr.mxu0 0.0
  %1033 = vmatpush1.msra.mxu0 0.0
  %1034 = vmatprep.subr.mxu0 0.0
  %1035 = vmatpush1.msra.mxu0 0.0
  %1036 = vmatprep.subr.mxu0 0.0
  %1037 = vmatpush1.msra.mxu0 0.0
  %1038 = vmatprep.subr.mxu0 0.0
  %1039 = vmatpush1.msra.mxu0 0.0
  %1040 = vmatprep.subr.mxu0 0.0
  %1041 = vmatpush1.msra.mxu0 0.0
  %1042 = vmatprep.subr.mxu0 0.0
  %1043 = vmatpush1.msra.mxu0 0.0
  %1044 = vmatprep.subr.mxu0 0.0
  %1045 = vmatpush1.msra.mxu0 0.0
  %1046 = vmatprep.mubr.f32.mxu0 0.0
  %1047 = vmatmul.mubr.f32.gmra.mrb[0].mxu0 %v980
  %v1048 = vpop.f32.mrb[0].mxu0
  %v1049 = vadd.f32 0.0, %v1048
  %v1050 = vpop.f32.mrb[0].mxu0
  %1051 = vdwg.mxu0
  %1052 = vrot.lane.b32.xlu0 %v463, 56
  %v1053 = vpop.permute.xlu0 %1052
  %v1056 = vsel %vm467, %v975, 0
  %1058 = vmatprep.subr.mxu0 0.0
  %1059 = vmatpush1.msra.mxu0 %v1053
  %1060 = vmatprep.subr.mxu0 0.0
  %1061 = vmatpush1.msra.mxu0 0.0
  %1062 = vmatprep.subr.mxu0 0.0
  %1063 = vmatpush1.msra.mxu0 0.0
  %1064 = vmatprep.subr.mxu0 0.0
  %1065 = vmatpush1.msra.mxu0 0.0
  %1066 = vmatprep.subr.mxu0 0.0
  %1067 = vmatpush1.msra.mxu0 0.0
  %1068 = vmatprep.subr.mxu0 0.0
  %1069 = vmatpush1.msra.mxu0 0.0
  %1070 = vmatprep.subr.mxu0 0.0
  %1071 = vmatpush1.msra.mxu0 0.0
  %1072 = vmatprep.subr.mxu0 0.0
  %1073 = vmatpush1.msra.mxu0 0.0
  %1074 = vmatprep.subr.mxu0 0.0
  %1075 = vmatpush1.msra.mxu0 0.0
  %1076 = vmatprep.subr.mxu0 0.0
  %1077 = vmatpush1.msra.mxu0 0.0
  %1078 = vmatprep.subr.mxu0 0.0
  %1079 = vmatpush1.msra.mxu0 0.0
  %1080 = vmatprep.subr.mxu0 0.0
  %1081 = vmatpush1.msra.mxu0 0.0
  %1082 = vmatprep.subr.mxu0 0.0
  %1083 = vmatpush1.msra.mxu0 0.0
  %1084 = vmatprep.subr.mxu0 0.0
  %1085 = vmatpush1.msra.mxu0 0.0
  %1086 = vmatprep.subr.mxu0 0.0
  %1087 = vmatpush1.msra.mxu0 0.0
  %1088 = vmatprep.subr.mxu0 0.0
  %1089 = vmatpush1.msra.mxu0 0.0
  %1090 = vmatprep.subr.mxu0 0.0
  %1091 = vmatpush1.msra.mxu0 0.0
  %1092 = vmatprep.subr.mxu0 0.0
  %1093 = vmatpush1.msra.mxu0 0.0
  %1094 = vmatprep.subr.mxu0 0.0
  %1095 = vmatpush1.msra.mxu0 0.0
  %1096 = vmatprep.subr.mxu0 0.0
  %1097 = vmatpush1.msra.mxu0 0.0
  %1098 = vmatprep.subr.mxu0 0.0
  %1099 = vmatpush1.msra.mxu0 0.0
  %1100 = vmatprep.subr.mxu0 0.0
  %1101 = vmatpush1.msra.mxu0 0.0
  %1102 = vmatprep.subr.mxu0 0.0
  %1103 = vmatpush1.msra.mxu0 0.0
  %1104 = vmatprep.subr.mxu0 0.0
  %1105 = vmatpush1.msra.mxu0 0.0
  %1106 = vmatprep.subr.mxu0 0.0
  %1107 = vmatpush1.msra.mxu0 0.0
  %1108 = vmatprep.subr.mxu0 0.0
  %1109 = vmatpush1.msra.mxu0 0.0
  %1110 = vmatprep.subr.mxu0 0.0
  %1111 = vmatpush1.msra.mxu0 0.0
  %1112 = vmatprep.subr.mxu0 0.0
  %1113 = vmatpush1.msra.mxu0 0.0
  %1114 = vmatprep.subr.mxu0 0.0
  %1115 = vmatpush1.msra.mxu0 0.0
  %1116 = vmatprep.subr.mxu0 0.0
  %1117 = vmatpush1.msra.mxu0 0.0
  %1118 = vmatprep.subr.mxu0 0.0
  %1119 = vmatpush1.msra.mxu0 0.0
  %1120 = vmatprep.subr.mxu0 0.0
  %1121 = vmatpush1.msra.mxu0 0.0
  %1122 = vmatprep.mubr.f32.mxu0 0.0
  %1123 = vmatmul.mubr.f32.gmra.mrb[0].mxu0 %v1056
  %v1124 = vpop.f32.mrb[0].mxu0
  %v1125 = vadd.f32 0.0, %v1124
  %v1126 = vpop.f32.mrb[0].mxu0
  %1127 = vdwg.mxu0
  %v1128 = vld [vmem:[%s5 + $0x8] sm:$0xff]
  %v1130 = vsel %vm467, %v1049, 0
  %v1133 = vsel %vm467, %v1125, 0
  %1135 = vmatprep.subr.mxu0 0.0
  %1136 = vmatpush1.msra.mxu0 %v1128
  %1137 = vmatprep.subr.mxu0 0.0
  %1138 = vmatpush1.msra.mxu0 0.0
  %1139 = vmatprep.subr.mxu0 0.0
  %1140 = vmatpush1.msra.mxu0 0.0
  %1141 = vmatprep.subr.mxu0 0.0
  %1142 = vmatpush1.msra.mxu0 0.0
  %1143 = vmatprep.subr.mxu0 0.0
  %1144 = vmatpush1.msra.mxu0 0.0
  %1145 = vmatprep.subr.mxu0 0.0
  %1146 = vmatpush1.msra.mxu0 0.0
  %1147 = vmatprep.subr.mxu0 0.0
  %1148 = vmatpush1.msra.mxu0 0.0
  %1149 = vmatprep.subr.mxu0 0.0
  %1150 = vmatpush1.msra.mxu0 0.0
  %1151 = vmatprep.subr.mxu0 0.0
  %1152 = vmatpush1.msra.mxu0 0.0
  %1153 = vmatprep.subr.mxu0 0.0
  %1154 = vmatpush1.msra.mxu0 0.0
  %1155 = vmatprep.subr.mxu0 0.0
  %1156 = vmatpush1.msra.mxu0 0.0
  %1157 = vmatprep.subr.mxu0 0.0
  %1158 = vmatpush1.msra.mxu0 0.0
  %1159 = vmatprep.subr.mxu0 0.0
  %1160 = vmatpush1.msra.mxu0 0.0
  %1161 = vmatprep.subr.mxu0 0.0
  %1162 = vmatpush1.msra.mxu0 0.0
  %1163 = vmatprep.subr.mxu0 0.0
  %1164 = vmatpush1.msra.mxu0 0.0
  %1165 = vmatprep.subr.mxu0 0.0
  %1166 = vmatpush1.msra.mxu0 0.0
  %1167 = vmatprep.subr.mxu0 0.0
  %1168 = vmatpush1.msra.mxu0 0.0
  %1169 = vmatprep.subr.mxu0 0.0
  %1170 = vmatpush1.msra.mxu0 0.0
  %1171 = vmatprep.subr.mxu0 0.0
  %1172 = vmatpush1.msra.mxu0 0.0
  %1173 = vmatprep.subr.mxu0 0.0
  %1174 = vmatpush1.msra.mxu0 0.0
  %1175 = vmatprep.subr.mxu0 0.0
  %1176 = vmatpush1.msra.mxu0 0.0
  %1177 = vmatprep.subr.mxu0 0.0
  %1178 = vmatpush1.msra.mxu0 0.0
  %1179 = vmatprep.subr.mxu0 0.0
  %1180 = vmatpush1.msra.mxu0 0.0
  %1181 = vmatprep.subr.mxu0 0.0
  %1182 = vmatpush1.msra.mxu0 0.0
  %1183 = vmatprep.subr.mxu0 0.0
  %1184 = vmatpush1.msra.mxu0 0.0
  %1185 = vmatprep.subr.mxu0 0.0
  %1186 = vmatpush1.msra.mxu0 0.0
  %1187 = vmatprep.subr.mxu0 0.0
  %1188 = vmatpush1.msra.mxu0 0.0
  %1189 = vmatprep.subr.mxu0 0.0
  %1190 = vmatpush1.msra.mxu0 0.0
  %1191 = vmatprep.subr.mxu0 0.0
  %1192 = vmatpush1.msra.mxu0 0.0
  %1193 = vmatprep.subr.mxu0 0.0
  %1194 = vmatpush1.msra.mxu0 0.0
  %1195 = vmatprep.subr.mxu0 0.0
  %1196 = vmatpush1.msra.mxu0 0.0
  %1197 = vmatprep.subr.mxu0 0.0
  %1198 = vmatpush1.msra.mxu0 0.0
  %1199 = vmatprep.mubr.f32.mxu0 0.0
  %1200 = vmatmul.mubr.f32.gmra.mrb[0].mxu0 %v1130
  %v1201 = vpop.f32.mrb[0].mxu0
  %v1202 = vadd.f32 0.0, %v1201
  %v1203 = vpop.f32.mrb[0].mxu0
  %1204 = vmatprep.mubr.f32.mxu0 0.0
  %1205 = vmatmul.mubr.f32.gmra.mrb[0].mxu0 %v1133
  %v1206 = vpop.f32.mrb[0].mxu0
  %v1207 = vadd.f32 0.0, %v1206
  %v1208 = vpop.f32.mrb[0].mxu0
  %1209 = vdwg.mxu0
  %v1211 = vsel %vm467, %v717, 0
  %v1214 = vsel %vm467, %v794, 0
  %1216 = vmatprep.subr.mxu0 0.0
  %1217 = vmatpush1.msra.mxu0 %v797
  %1218 = vmatprep.subr.mxu0 0.0
  %1219 = vmatpush1.msra.mxu0 0.0
  %1220 = vmatprep.subr.mxu0 0.0
  %1221 = vmatpush1.msra.mxu0 0.0
  %1222 = vmatprep.subr.mxu0 0.0
  %1223 = vmatpush1.msra.mxu0 0.0
  %1224 = vmatprep.subr.mxu0 0.0
  %1225 = vmatpush1.msra.mxu0 0.0
  %1226 = vmatprep.subr.mxu0 0.0
  %1227 = vmatpush1.msra.mxu0 0.0
  %1228 = vmatprep.subr.mxu0 0.0
  %1229 = vmatpush1.msra.mxu0 0.0
  %1230 = vmatprep.subr.mxu0 0.0
  %1231 = vmatpush1.msra.mxu0 0.0
  %1232 = vmatprep.subr.mxu0 0.0
  %1233 = vmatpush1.msra.mxu0 0.0
  %1234 = vmatprep.subr.mxu0 0.0
  %1235 = vmatpush1.msra.mxu0 0.0
  %1236 = vmatprep.subr.mxu0 0.0
  %1237 = vmatpush1.msra.mxu0 0.0
  %1238 = vmatprep.subr.mxu0 0.0
  %1239 = vmatpush1.msra.mxu0 0.0
  %1240 = vmatprep.subr.mxu0 0.0
  %1241 = vmatpush1.msra.mxu0 0.0
  %1242 = vmatprep.subr.mxu0 0.0
  %1243 = vmatpush1.msra.mxu0 0.0
  %1244 = vmatprep.subr.mxu0 0.0
  %1245 = vmatpush1.msra.mxu0 0.0
  %1246 = vmatprep.subr.mxu0 0.0
  %1247 = vmatpush1.msra.mxu0 0.0
  %1248 = vmatprep.subr.mxu0 0.0
  %1249 = vmatpush1.msra.mxu0 0.0
  %1250 = vmatprep.subr.mxu0 0.0
  %1251 = vmatpush1.msra.mxu0 0.0
  %1252 = vmatprep.subr.mxu0 0.0
  %1253 = vmatpush1.msra.mxu0 0.0
  %1254 = vmatprep.subr.mxu0 0.0
  %1255 = vmatpush1.msra.mxu0 0.0
  %1256 = vmatprep.subr.mxu0 0.0
  %1257 = vmatpush1.msra.mxu0 0.0
  %1258 = vmatprep.subr.mxu0 0.0
  %1259 = vmatpush1.msra.mxu0 0.0
  %1260 = vmatprep.subr.mxu0 0.0
  %1261 = vmatpush1.msra.mxu0 0.0
  %1262 = vmatprep.subr.mxu0 0.0
  %1263 = vmatpush1.msra.mxu0 0.0
  %1264 = vmatprep.subr.mxu0 0.0
  %1265 = vmatpush1.msra.mxu0 0.0
  %1266 = vmatprep.subr.mxu0 0.0
  %1267 = vmatpush1.msra.mxu0 0.0
  %1268 = vmatprep.subr.mxu0 0.0
  %1269 = vmatpush1.msra.mxu0 0.0
  %1270 = vmatprep.subr.mxu0 0.0
  %1271 = vmatpush1.msra.mxu0 0.0
  %1272 = vmatprep.subr.mxu0 0.0
  %1273 = vmatpush1.msra.mxu0 0.0
  %1274 = vmatprep.subr.mxu0 0.0
  %1275 = vmatpush1.msra.mxu0 0.0
  %1276 = vmatprep.subr.mxu0 0.0
  %1277 = vmatpush1.msra.mxu0 0.0
  %1278 = vmatprep.subr.mxu0 0.0
  %1279 = vmatpush1.msra.mxu0 0.0
  %1280 = vmatprep.mubr.f32.mxu0 0.0
  %1281 = vmatmul.mubr.f32.gmra.mrb[0].mxu0 %v1211
  %v1282 = vpop.f32.mrb[0].mxu0
  %v1283 = vadd.f32 %v1202, %v1282
  %v1284 = vpop.f32.mrb[0].mxu0
  %1285 = vmatprep.mubr.f32.mxu0 0.0
  %1286 = vmatmul.mubr.f32.gmra.mrb[0].mxu0 %v1214
  %v1287 = vpop.f32.mrb[0].mxu0
  %v1288 = vadd.f32 %v1207, %v1287
  %v1289 = vpop.f32.mrb[0].mxu0
  %1290 = vdwg.mxu0
  %1291 = vrot.lane.b32.xlu0 %v440, 112
  %v1292 = vpop.permute.xlu0 %1291
  %1293 = vrot.lane.b32.xlu0 %v451, 80
  %v1294 = vpop.permute.xlu0 %1293
  %v1295 = vsel %vm467, %v1292, 0
  %v1297 = vsel %vm467, %v1294, 0
  %1299 = vmatprep.subr.mxu0 0.0
  %1300 = vmatpush1.xpose.msra.mxu0 %v1297
  %1301 = vmatprep.subr.mxu0 0.0
  %1302 = vmatpush1.xpose.msra.mxu0 0.0
  %1303 = vmatprep.subr.mxu0 0.0
  %1304 = vmatpush1.xpose.msra.mxu0 0.0
  %1305 = vmatprep.subr.mxu0 0.0
  %1306 = vmatpush1.xpose.msra.mxu0 0.0
  %1307 = vmatprep.subr.mxu0 0.0
  %1308 = vmatpush1.xpose.msra.mxu0 0.0
  %1309 = vmatprep.subr.mxu0 0.0
  %1310 = vmatpush1.xpose.msra.mxu0 0.0
  %1311 = vmatprep.subr.mxu0 0.0
  %1312 = vmatpush1.xpose.msra.mxu0 0.0
  %1313 = vmatprep.subr.mxu0 0.0
  %1314 = vmatpush1.xpose.msra.mxu0 0.0
  %1315 = vmatprep.subr.mxu0 0.0
  %1316 = vmatpush1.xpose.msra.mxu0 0.0
  %1317 = vmatprep.subr.mxu0 0.0
  %1318 = vmatpush1.xpose.msra.mxu0 0.0
  %1319 = vmatprep.subr.mxu0 0.0
  %1320 = vmatpush1.xpose.msra.mxu0 0.0
  %1321 = vmatprep.subr.mxu0 0.0
  %1322 = vmatpush1.xpose.msra.mxu0 0.0
  %1323 = vmatprep.subr.mxu0 0.0
  %1324 = vmatpush1.xpose.msra.mxu0 0.0
  %1325 = vmatprep.subr.mxu0 0.0
  %1326 = vmatpush1.xpose.msra.mxu0 0.0
  %1327 = vmatprep.subr.mxu0 0.0
  %1328 = vmatpush1.xpose.msra.mxu0 0.0
  %1329 = vmatprep.subr.mxu0 0.0
  %1330 = vmatpush1.xpose.msra.mxu0 0.0
  %1331 = vmatprep.subr.mxu0 0.0
  %1332 = vmatpush1.xpose.msra.mxu0 0.0
  %1333 = vmatprep.subr.mxu0 0.0
  %1334 = vmatpush1.xpose.msra.mxu0 0.0
  %1335 = vmatprep.subr.mxu0 0.0
  %1336 = vmatpush1.xpose.msra.mxu0 0.0
  %1337 = vmatprep.subr.mxu0 0.0
  %1338 = vmatpush1.xpose.msra.mxu0 0.0
  %1339 = vmatprep.subr.mxu0 0.0
  %1340 = vmatpush1.xpose.msra.mxu0 0.0
  %1341 = vmatprep.subr.mxu0 0.0
  %1342 = vmatpush1.xpose.msra.mxu0 0.0
  %1343 = vmatprep.subr.mxu0 0.0
  %1344 = vmatpush1.xpose.msra.mxu0 0.0
  %1345 = vmatprep.subr.mxu0 0.0
  %1346 = vmatpush1.xpose.msra.mxu0 0.0
  %1347 = vmatprep.subr.mxu0 0.0
  %1348 = vmatpush1.xpose.msra.mxu0 0.0
  %1349 = vmatprep.subr.mxu0 0.0
  %1350 = vmatpush1.xpose.msra.mxu0 0.0
  %1351 = vmatprep.subr.mxu0 0.0
  %1352 = vmatpush1.xpose.msra.mxu0 0.0
  %1353 = vmatprep.subr.mxu0 0.0
  %1354 = vmatpush1.xpose.msra.mxu0 0.0
  %1355 = vmatprep.subr.mxu0 0.0
  %1356 = vmatpush1.xpose.msra.mxu0 0.0
  %1357 = vmatprep.subr.mxu0 0.0
  %1358 = vmatpush1.xpose.msra.mxu0 0.0
  %1359 = vmatprep.subr.mxu0 0.0
  %1360 = vmatpush1.xpose.msra.mxu0 0.0
  %1361 = vmatprep.subr.mxu0 0.0
  %1362 = vmatpush1.xpose.msra.mxu0 0.0
  %1363 = vmatprep.mubr.f32.mxu0 0.0
  %1364 = vmatmul.mubr.f32.gmra.mrb[0].mxu0 %v1295
  %v1365 = vpop.f32.mrb[0].mxu0
  %v1366 = vadd.f32 0.0, %v1365
  %v1367 = vpop.f32.mrb[0].mxu0
  %1368 = vdwg.mxu0
  %1369 = vrot.lane.b32.xlu0 %v441, 112
  %v1370 = vpop.permute.xlu0 %1369
  %1371 = vrot.lane.b32.xlu0 %v452, 80
  %v1372 = vpop.permute.xlu0 %1371
  %v1373 = vsel %vm467, %v1370, 0
  %v1375 = vsel %vm467, %v1372, 0
  %1377 = vmatprep.subr.mxu0 0.0
  %1378 = vmatpush1.xpose.msra.mxu0 %v1375
  %1379 = vmatprep.subr.mxu0 0.0
  %1380 = vmatpush1.xpose.msra.mxu0 0.0
  %1381 = vmatprep.subr.mxu0 0.0
  %1382 = vmatpush1.xpose.msra.mxu0 0.0
  %1383 = vmatprep.subr.mxu0 0.0
  %1384 = vmatpush1.xpose.msra.mxu0 0.0
  %1385 = vmatprep.subr.mxu0 0.0
  %1386 = vmatpush1.xpose.msra.mxu0 0.0
  %1387 = vmatprep.subr.mxu0 0.0
  %1388 = vmatpush1.xpose.msra.mxu0 0.0
  %1389 = vmatprep.subr.mxu0 0.0
  %1390 = vmatpush1.xpose.msra.mxu0 0.0
  %1391 = vmatprep.subr.mxu0 0.0
  %1392 = vmatpush1.xpose.msra.mxu0 0.0
  %1393 = vmatprep.subr.mxu0 0.0
  %1394 = vmatpush1.xpose.msra.mxu0 0.0
  %1395 = vmatprep.subr.mxu0 0.0
  %1396 = vmatpush1.xpose.msra.mxu0 0.0
  %1397 = vmatprep.subr.mxu0 0.0
  %1398 = vmatpush1.xpose.msra.mxu0 0.0
  %1399 = vmatprep.subr.mxu0 0.0
  %1400 = vmatpush1.xpose.msra.mxu0 0.0
  %1401 = vmatprep.subr.mxu0 0.0
  %1402 = vmatpush1.xpose.msra.mxu0 0.0
  %1403 = vmatprep.subr.mxu0 0.0
  %1404 = vmatpush1.xpose.msra.mxu0 0.0
  %1405 = vmatprep.subr.mxu0 0.0
  %1406 = vmatpush1.xpose.msra.mxu0 0.0
  %1407 = vmatprep.subr.mxu0 0.0
  %1408 = vmatpush1.xpose.msra.mxu0 0.0
  %1409 = vmatprep.subr.mxu0 0.0
  %1410 = vmatpush1.xpose.msra.mxu0 0.0
  %1411 = vmatprep.subr.mxu0 0.0
  %1412 = vmatpush1.xpose.msra.mxu0 0.0
  %1413 = vmatprep.subr.mxu0 0.0
  %1414 = vmatpush1.xpose.msra.mxu0 0.0
  %1415 = vmatprep.subr.mxu0 0.0
  %1416 = vmatpush1.xpose.msra.mxu0 0.0
  %1417 = vmatprep.subr.mxu0 0.0
  %1418 = vmatpush1.xpose.msra.mxu0 0.0
  %1419 = vmatprep.subr.mxu0 0.0
  %1420 = vmatpush1.xpose.msra.mxu0 0.0
  %1421 = vmatprep.subr.mxu0 0.0
  %1422 = vmatpush1.xpose.msra.mxu0 0.0
  %1423 = vmatprep.subr.mxu0 0.0
  %1424 = vmatpush1.xpose.msra.mxu0 0.0
  %1425 = vmatprep.subr.mxu0 0.0
  %1426 = vmatpush1.xpose.msra.mxu0 0.0
  %1427 = vmatprep.subr.mxu0 0.0
  %1428 = vmatpush1.xpose.msra.mxu0 0.0
  %1429 = vmatprep.subr.mxu0 0.0
  %1430 = vmatpush1.xpose.msra.mxu0 0.0
  %1431 = vmatprep.subr.mxu0 0.0
  %1432 = vmatpush1.xpose.msra.mxu0 0.0
  %1433 = vmatprep.subr.mxu0 0.0
  %1434 = vmatpush1.xpose.msra.mxu0 0.0
  %1435 = vmatprep.subr.mxu0 0.0
  %1436 = vmatpush1.xpose.msra.mxu0 0.0
  %1437 = vmatprep.subr.mxu0 0.0
  %1438 = vmatpush1.xpose.msra.mxu0 0.0
  %1439 = vmatprep.subr.mxu0 0.0
  %1440 = vmatpush1.xpose.msra.mxu0 0.0
  %1441 = vmatprep.mubr.f32.mxu0 0.0
  %1442 = vmatmul.mubr.f32.gmra.mrb[0].mxu0 %v1373
  %v1443 = vpop.f32.mrb[0].mxu0
  %v1444 = vadd.f32 0.0, %v1443
  %v1445 = vpop.f32.mrb[0].mxu0
  %1446 = vdwg.mxu0
  %v1447 = vsel %vm467, %v1366, -inf
  %1448 = vmax.xlane.f32.xlu0 %v1447
  %v1449 = vpop.xlane.xlu0 %1448
  %v1450 = vsel %vm467, %v1444, -inf
  %1451 = vmax.xlane.f32.xlu0 %v1450
  %v1452 = vpop.xlane.xlu0 %1451
  %v1453 = vsub.f32 %v1366, %v1449
  %v1454 = vsub.f32 %v1444, %v1452
  %v1455 = vmul.f32 %v1453, 1.442695
  %v1456 = vpow.pop %v1455
  %v1457 = vmul.f32 %v1454, 1.442695
  %v1458 = vpow.pop %v1457
  %v1459 = vsel %vm467, %v1456, 0.0
  %1460 = vadd.xlane.f32.xlu0 %v1459
  %v1461 = vpop.xlane.xlu0 %1460
  %v1462 = vsel %vm467, %v1458, 0.0
  %1463 = vadd.xlane.f32.xlu0 %v1462
  %v1464 = vpop.xlane.xlu0 %1463
  %v1465 = vrcp.pop %v1461
  %v1466 = vrcp.pop %v1464
  %v1467 = vmul.f32 %v1456, %v1465
  %v1468 = vmul.f32 %v1458, %v1466
  %1469 = vrot.lane.b32.xlu0 %v462, 48
  %v1470 = vpop.permute.xlu0 %1469
  %v1473 = vsel %vm467, %v1467, 0
  %1475 = vmatprep.subr.mxu0 0.0
  %1476 = vmatpush1.msra.mxu0 %v1470
  %1477 = vmatprep.subr.mxu0 0.0
  %1478 = vmatpush1.msra.mxu0 0.0
  %1479 = vmatprep.subr.mxu0 0.0
  %1480 = vmatpush1.msra.mxu0 0.0
  %1481 = vmatprep.subr.mxu0 0.0
  %1482 = vmatpush1.msra.mxu0 0.0
  %1483 = vmatprep.subr.mxu0 0.0
  %1484 = vmatpush1.msra.mxu0 0.0
  %1485 = vmatprep.subr.mxu0 0.0
  %1486 = vmatpush1.msra.mxu0 0.0
  %1487 = vmatprep.subr.mxu0 0.0
  %1488 = vmatpush1.msra.mxu0 0.0
  %1489 = vmatprep.subr.mxu0 0.0
  %1490 = vmatpush1.msra.mxu0 0.0
  %1491 = vmatprep.subr.mxu0 0.0
  %1492 = vmatpush1.msra.mxu0 0.0
  %1493 = vmatprep.subr.mxu0 0.0
  %1494 = vmatpush1.msra.mxu0 0.0
  %1495 = vmatprep.subr.mxu0 0.0
  %1496 = vmatpush1.msra.mxu0 0.0
  %1497 = vmatprep.subr.mxu0 0.0
  %1498 = vmatpush1.msra.mxu0 0.0
  %1499 = vmatprep.subr.mxu0 0.0
  %1500 = vmatpush1.msra.mxu0 0.0
  %1501 = vmatprep.subr.mxu0 0.0
  %1502 = vmatpush1.msra.mxu0 0.0
  %1503 = vmatprep.subr.mxu0 0.0
  %1504 = vmatpush1.msra.mxu0 0.0
  %1505 = vmatprep.subr.mxu0 0.0
  %1506 = vmatpush1.msra.mxu0 0.0
  %1507 = vmatprep.subr.mxu0 0.0
  %1508 = vmatpush1.msra.mxu0 0.0
  %1509 = vmatprep.subr.mxu0 0.0
  %1510 = vmatpush1.msra.mxu0 0.0
  %1511 = vmatprep.subr.mxu0 0.0
  %1512 = vmatpush1.msra.mxu0 0.0
  %1513 = vmatprep.subr.mxu0 0.0
  %1514 = vmatpush1.msra.mxu0 0.0
  %1515 = vmatprep.subr.mxu0 0.0
  %1516 = vmatpush1.msra.mxu0 0.0
  %1517 = vmatprep.subr.mxu0 0.0
  %1518 = vmatpush1.msra.mxu0 0.0
  %1519 = vmatprep.subr.mxu0 0.0
  %1520 = vmatpush1.msra.mxu0 0.0
  %1521 = vmatprep.subr.mxu0 0.0
  %1522 = vmatpush1.msra.mxu0 0.0
  %1523 = vmatprep.subr.mxu0 0.0
  %1524 = vmatpush1.msra.mxu0 0.0
  %1525 = vmatprep.subr.mxu0 0.0
  %1526 = vmatpush1.msra.mxu0 0.0
  %1527 = vmatprep.subr.mxu0 0.0
  %1528 = vmatpush1.msra.mxu0 0.0
  %1529 = vmatprep.subr.mxu0 0.0
  %1530 = vmatpush1.msra.mxu0 0.0
  %1531 = vmatprep.subr.mxu0 0.0
  %1532 = vmatpush1.msra.mxu0 0.0
  %1533 = vmatprep.subr.mxu0 0.0
  %1534 = vmatpush1.msra.mxu0 0.0
  %1535 = vmatprep.subr.mxu0 0.0
  %1536 = vmatpush1.msra.mxu0 0.0
  %1537 = vmatprep.subr.mxu0 0.0
  %1538 = vmatpush1.msra.mxu0 0.0
  %1539 = vmatprep.mubr.f32.mxu0 0.0
  %1540 = vmatmul.mubr.f32.gmra.mrb[0].mxu0 %v1473
  %v1541 = vpop.f32.mrb[0].mxu0
  %v1542 = vadd.f32 0.0, %v1541
  %v1543 = vpop.f32.mrb[0].mxu0
  %1544 = vdwg.mxu0
  %1545 = vrot.lane.b32.xlu0 %v463, 48
  %v1546 = vpop.permute.xlu0 %1545
  %v1549 = vsel %vm467, %v1468, 0
  %1551 = vmatprep.subr.mxu0 0.0
  %1552 = vmatpush1.msra.mxu0 %v1546
  %1553 = vmatprep.subr.mxu0 0.0
  %1554 = vmatpush1.msra.mxu0 0.0
  %1555 = vmatprep.subr.mxu0 0.0
  %1556 = vmatpush1.msra.mxu0 0.0
  %1557 = vmatprep.subr.mxu0 0.0
  %1558 = vmatpush1.msra.mxu0 0.0
  %1559 = vmatprep.subr.mxu0 0.0
  %1560 = vmatpush1.msra.mxu0 0.0
  %1561 = vmatprep.subr.mxu0 0.0
  %1562 = vmatpush1.msra.mxu0 0.0
  %1563 = vmatprep.subr.mxu0 0.0
  %1564 = vmatpush1.msra.mxu0 0.0
  %1565 = vmatprep.subr.mxu0 0.0
  %1566 = vmatpush1.msra.mxu0 0.0
  %1567 = vmatprep.subr.mxu0 0.0
  %1568 = vmatpush1.msra.mxu0 0.0
  %1569 = vmatprep.subr.mxu0 0.0
  %1570 = vmatpush1.msra.mxu0 0.0
  %1571 = vmatprep.subr.mxu0 0.0
  %1572 = vmatpush1.msra.mxu0 0.0
  %1573 = vmatprep.subr.mxu0 0.0
  %1574 = vmatpush1.msra.mxu0 0.0
  %1575 = vmatprep.subr.mxu0 0.0
  %1576 = vmatpush1.msra.mxu0 0.0
  %1577 = vmatprep.subr.mxu0 0.0
  %1578 = vmatpush1.msra.mxu0 0.0
  %1579 = vmatprep.subr.mxu0 0.0
  %1580 = vmatpush1.msra.mxu0 0.0
  %1581 = vmatprep.subr.mxu0 0.0
  %1582 = vmatpush1.msra.mxu0 0.0
  %1583 = vmatprep.subr.mxu0 0.0
  %1584 = vmatpush1.msra.mxu0 0.0
  %1585 = vmatprep.subr.mxu0 0.0
  %1586 = vmatpush1.msra.mxu0 0.0
  %1587 = vmatprep.subr.mxu0 0.0
  %1588 = vmatpush1.msra.mxu0 0.0
  %1589 = vmatprep.subr.mxu0 0.0
  %1590 = vmatpush1.msra.mxu0 0.0
  %1591 = vmatprep.subr.mxu0 0.0
  %1592 = vmatpush1.msra.mxu0 0.0
  %1593 = vmatprep.subr.mxu0 0.0
  %1594 = vmatpush1.msra.mxu0 0.0
  %1595 = vmatprep.subr.mxu0 0.0
  %1596 = vmatpush1.msra.mxu0 0.0
  %1597 = vmatprep.subr.mxu0 0.0
  %1598 = vmatpush1.msra.mxu0 0.0
  %1599 = vmatprep.subr.mxu0 0.0
  %1600 = vmatpush1.msra.mxu0 0.0
  %1601 = vmatprep.subr.mxu0 0.0
  %1602 = vmatpush1.msra.mxu0 0.0
  %1603 = vmatprep.subr.mxu0 0.0
  %1604 = vmatpush1.msra.mxu0 0.0
  %1605 = vmatprep.subr.mxu0 0.0
  %1606 = vmatpush1.msra.mxu0 0.0
  %1607 = vmatprep.subr.mxu0 0.0
  %1608 = vmatpush1.msra.mxu0 0.0
  %1609 = vmatprep.subr.mxu0 0.0
  %1610 = vmatpush1.msra.mxu0 0.0
  %1611 = vmatprep.subr.mxu0 0.0
  %1612 = vmatpush1.msra.mxu0 0.0
  %1613 = vmatprep.subr.mxu0 0.0
  %1614 = vmatpush1.msra.mxu0 0.0
  %1615 = vmatprep.mubr.f32.mxu0 0.0
  %1616 = vmatmul.mubr.f32.gmra.mrb[0].mxu0 %v1549
  %v1617 = vpop.f32.mrb[0].mxu0
  %v1618 = vadd.f32 0.0, %v1617
  %v1619 = vpop.f32.mrb[0].mxu0
  %1620 = vdwg.mxu0
  %v1621 = vld [vmem:[%s5 + $0x10] sm:$0xff]
  %v1623 = vsel %vm467, %v1542, 0
  %v1626 = vsel %vm467, %v1618, 0
  %1628 = vmatprep.subr.mxu0 0.0
  %1629 = vmatpush1.msra.mxu0 %v1621
  %1630 = vmatprep.subr.mxu0 0.0
  %1631 = vmatpush1.msra.mxu0 0.0
  %1632 = vmatprep.subr.mxu0 0.0
  %1633 = vmatpush1.msra.mxu0 0.0
  %1634 = vmatprep.subr.mxu0 0.0
  %1635 = vmatpush1.msra.mxu0 0.0
  %1636 = vmatprep.subr.mxu0 0.0
  %1637 = vmatpush1.msra.mxu0 0.0
  %1638 = vmatprep.subr.mxu0 0.0
  %1639 = vmatpush1.msra.mxu0 0.0
  %1640 = vmatprep.subr.mxu0 0.0
  %1641 = vmatpush1.msra.mxu0 0.0
  %1642 = vmatprep.subr.mxu0 0.0
  %1643 = vmatpush1.msra.mxu0 0.0
  %1644 = vmatprep.subr.mxu0 0.0
  %1645 = vmatpush1.msra.mxu0 0.0
  %1646 = vmatprep.subr.mxu0 0.0
  %1647 = vmatpush1.msra.mxu0 0.0
  %1648 = vmatprep.subr.mxu0 0.0
  %1649 = vmatpush1.msra.mxu0 0.0
  %1650 = vmatprep.subr.mxu0 0.0
  %1651 = vmatpush1.msra.mxu0 0.0
  %1652 = vmatprep.subr.mxu0 0.0
  %1653 = vmatpush1.msra.mxu0 0.0
  %1654 = vmatprep.subr.mxu0 0.0
  %1655 = vmatpush1.msra.mxu0 0.0
  %1656 = vmatprep.subr.mxu0 0.0
  %1657 = vmatpush1.msra.mxu0 0.0
  %1658 = vmatprep.subr.mxu0 0.0
  %1659 = vmatpush1.msra.mxu0 0.0
  %1660 = vmatprep.subr.mxu0 0.0
  %1661 = vmatpush1.msra.mxu0 0.0
  %1662 = vmatprep.subr.mxu0 0.0
  %1663 = vmatpush1.msra.mxu0 0.0
  %1664 = vmatprep.subr.mxu0 0.0
  %1665 = vmatpush1.msra.mxu0 0.0
  %1666 = vmatprep.subr.mxu0 0.0
  %1667 = vmatpush1.msra.mxu0 0.0
  %1668 = vmatprep.subr.mxu0 0.0
  %1669 = vmatpush1.msra.mxu0 0.0
  %1670 = vmatprep.subr.mxu0 0.0
  %1671 = vmatpush1.msra.mxu0 0.0
  %1672 = vmatprep.subr.mxu0 0.0
  %1673 = vmatpush1.msra.mxu0 0.0
  %1674 = vmatprep.subr.mxu0 0.0
  %1675 = vmatpush1.msra.mxu0 0.0
  %1676 = vmatprep.subr.mxu0 0.0
  %1677 = vmatpush1.msra.mxu0 0.0
  %1678 = vmatprep.subr.mxu0 0.0
  %1679 = vmatpush1.msra.mxu0 0.0
  %1680 = vmatprep.subr.mxu0 0.0
  %1681 = vmatpush1.msra.mxu0 0.0
  %1682 = vmatprep.subr.mxu0 0.0
  %1683 = vmatpush1.msra.mxu0 0.0
  %1684 = vmatprep.subr.mxu0 0.0
  %1685 = vmatpush1.msra.mxu0 0.0
  %1686 = vmatprep.subr.mxu0 0.0
  %1687 = vmatpush1.msra.mxu0 0.0
  %1688 = vmatprep.subr.mxu0 0.0
  %1689 = vmatpush1.msra.mxu0 0.0
  %1690 = vmatprep.subr.mxu0 0.0
  %1691 = vmatpush1.msra.mxu0 0.0
  %1692 = vmatprep.mubr.f32.mxu0 0.0
  %1693 = vmatmul.mubr.f32.gmra.mrb[0].mxu0 %v1623
  %v1694 = vpop.f32.mrb[0].mxu0
  %v1695 = vadd.f32 0.0, %v1694
  %v1696 = vpop.f32.mrb[0].mxu0
  %1697 = vmatprep.mubr.f32.mxu0 0.0
  %1698 = vmatmul.mubr.f32.gmra.mrb[0].mxu0 %v1626
  %v1699 = vpop.f32.mrb[0].mxu0
  %v1700 = vadd.f32 0.0, %v1699
  %v1701 = vpop.f32.mrb[0].mxu0
  %1702 = vdwg.mxu0
  %v1703 = vadd.f32 %v1283, %v1695
  %v1704 = vadd.f32 %v1288, %v1700
  %1705 = vrot.lane.b32.xlu0 %v440, 104
  %v1706 = vpop.permute.xlu0 %1705
  %1707 = vrot.lane.b32.xlu0 %v451, 72
  %v1708 = vpop.permute.xlu0 %1707
  %v1709 = vsel %vm467, %v1706, 0
  %v1711 = vsel %vm467, %v1708, 0
  %1713 = vmatprep.subr.mxu0 0.0
  %1714 = vmatpush1.xpose.msra.mxu0 %v1711
  %1715 = vmatprep.subr.mxu0 0.0
  %1716 = vmatpush1.xpose.msra.mxu0 0.0
  %1717 = vmatprep.subr.mxu0 0.0
  %1718 = vmatpush1.xpose.msra.mxu0 0.0
  %1719 = vmatprep.subr.mxu0 0.0
  %1720 = vmatpush1.xpose.msra.mxu0 0.0
  %1721 = vmatprep.subr.mxu0 0.0
  %1722 = vmatpush1.xpose.msra.mxu0 0.0
  %1723 = vmatprep.subr.mxu0 0.0
  %1724 = vmatpush1.xpose.msra.mxu0 0.0
  %1725 = vmatprep.subr.mxu0 0.0
  %1726 = vmatpush1.xpose.msra.mxu0 0.0
  %1727 = vmatprep.subr.mxu0 0.0
  %1728 = vmatpush1.xpose.msra.mxu0 0.0
  %1729 = vmatprep.subr.mxu0 0.0
  %1730 = vmatpush1.xpose.msra.mxu0 0.0
  %1731 = vmatprep.subr.mxu0 0.0
  %1732 = vmatpush1.xpose.msra.mxu0 0.0
  %1733 = vmatprep.subr.mxu0 0.0
  %1734 = vmatpush1.xpose.msra.mxu0 0.0
  %1735 = vmatprep.subr.mxu0 0.0
  %1736 = vmatpush1.xpose.msra.mxu0 0.0
  %1737 = vmatprep.subr.mxu0 0.0
  %1738 = vmatpush1.xpose.msra.mxu0 0.0
  %1739 = vmatprep.subr.mxu0 0.0
  %1740 = vmatpush1.xpose.msra.mxu0 0.0
  %1741 = vmatprep.subr.mxu0 0.0
  %1742 = vmatpush1.xpose.msra.mxu0 0.0
  %1743 = vmatprep.subr.mxu0 0.0
  %1744 = vmatpush1.xpose.msra.mxu0 0.0
  %1745 = vmatprep.subr.mxu0 0.0
  %1746 = vmatpush1.xpose.msra.mxu0 0.0
  %1747 = vmatprep.subr.mxu0 0.0
  %1748 = vmatpush1.xpose.msra.mxu0 0.0
  %1749 = vmatprep.subr.mxu0 0.0
  %1750 = vmatpush1.xpose.msra.mxu0 0.0
  %1751 = vmatprep.subr.mxu0 0.0
  %1752 = vmatpush1.xpose.msra.mxu0 0.0
  %1753 = vmatprep.subr.mxu0 0.0
  %1754 = vmatpush1.xpose.msra.mxu0 0.0
  %1755 = vmatprep.subr.mxu0 0.0
  %1756 = vmatpush1.xpose.msra.mxu0 0.0
  %1757 = vmatprep.subr.mxu0 0.0
  %1758 = vmatpush1.xpose.msra.mxu0 0.0
  %1759 = vmatprep.subr.mxu0 0.0
  %1760 = vmatpush1.xpose.msra.mxu0 0.0
  %1761 = vmatprep.subr.mxu0 0.0
  %1762 = vmatpush1.xpose.msra.mxu0 0.0
  %1763 = vmatprep.subr.mxu0 0.0
  %1764 = vmatpush1.xpose.msra.mxu0 0.0
  %1765 = vmatprep.subr.mxu0 0.0
  %1766 = vmatpush1.xpose.msra.mxu0 0.0
  %1767 = vmatprep.subr.mxu0 0.0
  %1768 = vmatpush1.xpose.msra.mxu0 0.0
  %1769 = vmatprep.subr.mxu0 0.0
  %1770 = vmatpush1.xpose.msra.mxu0 0.0
  %1771 = vmatprep.subr.mxu0 0.0
  %1772 = vmatpush1.xpose.msra.mxu0 0.0
  %1773 = vmatprep.subr.mxu0 0.0
  %1774 = vmatpush1.xpose.msra.mxu0 0.0
  %1775 = vmatprep.subr.mxu0 0.0
  %1776 = vmatpush1.xpose.msra.mxu0 0.0
  %1777 = vmatprep.mubr.f32.mxu0 0.0
  %1778 = vmatmul.mubr.f32.gmra.mrb[0].mxu0 %v1709
  %v1779 = vpop.f32.mrb[0].mxu0
  %v1780 = vadd.f32 0.0, %v1779
  %v1781 = vpop.f32.mrb[0].mxu0
  %1782 = vdwg.mxu0
  %1783 = vrot.lane.b32.xlu0 %v441, 104
  %v1784 = vpop.permute.xlu0 %1783
  %1785 = vrot.lane.b32.xlu0 %v452, 72
  %v1786 = vpop.permute.xlu0 %1785
  %v1787 = vsel %vm467, %v1784, 0
  %v1789 = vsel %vm467, %v1786, 0
  %1791 = vmatprep.subr.mxu0 0.0
  %1792 = vmatpush1.xpose.msra.mxu0 %v1789
  %1793 = vmatprep.subr.mxu0 0.0
  %1794 = vmatpush1.xpose.msra.mxu0 0.0
  %1795 = vmatprep.subr.mxu0 0.0
  %1796 = vmatpush1.xpose.msra.mxu0 0.0
  %1797 = vmatprep.subr.mxu0 0.0
  %1798 = vmatpush1.xpose.msra.mxu0 0.0
  %1799 = vmatprep.subr.mxu0 0.0
  %1800 = vmatpush1.xpose.msra.mxu0 0.0
  %1801 = vmatprep.subr.mxu0 0.0
  %1802 = vmatpush1.xpose.msra.mxu0 0.0
  %1803 = vmatprep.subr.mxu0 0.0
  %1804 = vmatpush1.xpose.msra.mxu0 0.0
  %1805 = vmatprep.subr.mxu0 0.0
  %1806 = vmatpush1.xpose.msra.mxu0 0.0
  %1807 = vmatprep.subr.mxu0 0.0
  %1808 = vmatpush1.xpose.msra.mxu0 0.0
  %1809 = vmatprep.subr.mxu0 0.0
  %1810 = vmatpush1.xpose.msra.mxu0 0.0
  %1811 = vmatprep.subr.mxu0 0.0
  %1812 = vmatpush1.xpose.msra.mxu0 0.0
  %1813 = vmatprep.subr.mxu0 0.0
  %1814 = vmatpush1.xpose.msra.mxu0 0.0
  %1815 = vmatprep.subr.mxu0 0.0
  %1816 = vmatpush1.xpose.msra.mxu0 0.0
  %1817 = vmatprep.subr.mxu0 0.0
  %1818 = vmatpush1.xpose.msra.mxu0 0.0
  %1819 = vmatprep.subr.mxu0 0.0
  %1820 = vmatpush1.xpose.msra.mxu0 0.0
  %1821 = vmatprep.subr.mxu0 0.0
  %1822 = vmatpush1.xpose.msra.mxu0 0.0
  %1823 = vmatprep.subr.mxu0 0.0
  %1824 = vmatpush1.xpose.msra.mxu0 0.0
  %1825 = vmatprep.subr.mxu0 0.0
  %1826 = vmatpush1.xpose.msra.mxu0 0.0
  %1827 = vmatprep.subr.mxu0 0.0
  %1828 = vmatpush1.xpose.msra.mxu0 0.0
  %1829 = vmatprep.subr.mxu0 0.0
  %1830 = vmatpush1.xpose.msra.mxu0 0.0
  %1831 = vmatprep.subr.mxu0 0.0
  %1832 = vmatpush1.xpose.msra.mxu0 0.0
  %1833 = vmatprep.subr.mxu0 0.0
  %1834 = vmatpush1.xpose.msra.mxu0 0.0
  %1835 = vmatprep.subr.mxu0 0.0
  %1836 = vmatpush1.xpose.msra.mxu0 0.0
  %1837 = vmatprep.subr.mxu0 0.0
  %1838 = vmatpush1.xpose.msra.mxu0 0.0
  %1839 = vmatprep.subr.mxu0 0.0
  %1840 = vmatpush1.xpose.msra.mxu0 0.0
  %1841 = vmatprep.subr.mxu0 0.0
  %1842 = vmatpush1.xpose.msra.mxu0 0.0
  %1843 = vmatprep.subr.mxu0 0.0
  %1844 = vmatpush1.xpose.msra.mxu0 0.0
  %1845 = vmatprep.subr.mxu0 0.0
  %1846 = vmatpush1.xpose.msra.mxu0 0.0
  %1847 = vmatprep.subr.mxu0 0.0
  %1848 = vmatpush1.xpose.msra.mxu0 0.0
  %1849 = vmatprep.subr.mxu0 0.0
  %1850 = vmatpush1.xpose.msra.mxu0 0.0
  %1851 = vmatprep.subr.mxu0 0.0
  %1852 = vmatpush1.xpose.msra.mxu0 0.0
  %1853 = vmatprep.subr.mxu0 0.0
  %1854 = vmatpush1.xpose.msra.mxu0 0.0
  %1855 = vmatprep.mubr.f32.mxu0 0.0
  %1856 = vmatmul.mubr.f32.gmra.mrb[0].mxu0 %v1787
  %v1857 = vpop.f32.mrb[0].mxu0
  %v1858 = vadd.f32 0.0, %v1857
  %v1859 = vpop.f32.mrb[0].mxu0
  %1860 = vdwg.mxu0
  %v1861 = vsel %vm467, %v1780, -inf
  %1862 = vmax.xlane.f32.xlu0 %v1861
  %v1863 = vpop.xlane.xlu0 %1862
  %v1864 = vsel %vm467, %v1858, -inf
  %1865 = vmax.xlane.f32.xlu0 %v1864
  %v1866 = vpop.xlane.xlu0 %1865
  %v1867 = vsub.f32 %v1780, %v1863
  %v1868 = vsub.f32 %v1858, %v1866
  %v1869 = vmul.f32 %v1867, 1.442695
  %v1870 = vpow.pop %v1869
  %v1871 = vmul.f32 %v1868, 1.442695
  %v1872 = vpow.pop %v1871
  %v1873 = vsel %vm467, %v1870, 0.0
  %1874 = vadd.xlane.f32.xlu0 %v1873
  %v1875 = vpop.xlane.xlu0 %1874
  %v1876 = vsel %vm467, %v1872, 0.0
  %1877 = vadd.xlane.f32.xlu0 %v1876
  %v1878 = vpop.xlane.xlu0 %1877
  %v1879 = vrcp.pop %v1875
  %v1880 = vrcp.pop %v1878
  %v1881 = vmul.f32 %v1870, %v1879
  %v1882 = vmul.f32 %v1872, %v1880
  %1883 = vrot.lane.b32.xlu0 %v462, 40
  %v1884 = vpop.permute.xlu0 %1883
  %v1887 = vsel %vm467, %v1881, 0
  %1889 = vmatprep.subr.mxu0 0.0
  %1890 = vmatpush1.msra.mxu0 %v1884
  %1891 = vmatprep.subr.mxu0 0.0
  %1892 = vmatpush1.msra.mxu0 0.0
  %1893 = vmatprep.subr.mxu0 0.0
  %1894 = vmatpush1.msra.mxu0 0.0
  %1895 = vmatprep.subr.mxu0 0.0
  %1896 = vmatpush1.msra.mxu0 0.0
  %1897 = vmatprep.subr.mxu0 0.0
  %1898 = vmatpush1.msra.mxu0 0.0
  %1899 = vmatprep.subr.mxu0 0.0
  %1900 = vmatpush1.msra.mxu0 0.0
  %1901 = vmatprep.subr.mxu0 0.0
  %1902 = vmatpush1.msra.mxu0 0.0
  %1903 = vmatprep.subr.mxu0 0.0
  %1904 = vmatpush1.msra.mxu0 0.0
  %1905 = vmatprep.subr.mxu0 0.0
  %1906 = vmatpush1.msra.mxu0 0.0
  %1907 = vmatprep.subr.mxu0 0.0
  %1908 = vmatpush1.msra.mxu0 0.0
  %1909 = vmatprep.subr.mxu0 0.0
  %1910 = vmatpush1.msra.mxu0 0.0
  %1911 = vmatprep.subr.mxu0 0.0
  %1912 = vmatpush1.msra.mxu0 0.0
  %1913 = vmatprep.subr.mxu0 0.0
  %1914 = vmatpush1.msra.mxu0 0.0
  %1915 = vmatprep.subr.mxu0 0.0
  %1916 = vmatpush1.msra.mxu0 0.0
  %1917 = vmatprep.subr.mxu0 0.0
  %1918 = vmatpush1.msra.mxu0 0.0
  %1919 = vmatprep.subr.mxu0 0.0
  %1920 = vmatpush1.msra.mxu0 0.0
  %1921 = vmatprep.subr.mxu0 0.0
  %1922 = vmatpush1.msra.mxu0 0.0
  %1923 = vmatprep.subr.mxu0 0.0
  %1924 = vmatpush1.msra.mxu0 0.0
  %1925 = vmatprep.subr.mxu0 0.0
  %1926 = vmatpush1.msra.mxu0 0.0
  %1927 = vmatprep.subr.mxu0 0.0
  %1928 = vmatpush1.msra.mxu0 0.0
  %1929 = vmatprep.subr.mxu0 0.0
  %1930 = vmatpush1.msra.mxu0 0.0
  %1931 = vmatprep.subr.mxu0 0.0
  %1932 = vmatpush1.msra.mxu0 0.0
  %1933 = vmatprep.subr.mxu0 0.0
  %1934 = vmatpush1.msra.mxu0 0.0
  %1935 = vmatprep.subr.mxu0 0.0
  %1936 = vmatpush1.msra.mxu0 0.0
  %1937 = vmatprep.subr.mxu0 0.0
  %1938 = vmatpush1.msra.mxu0 0.0
  %1939 = vmatprep.subr.mxu0 0.0
  %1940 = vmatpush1.msra.mxu0 0.0
  %1941 = vmatprep.subr.mxu0 0.0
  %1942 = vmatpush1.msra.mxu0 0.0
  %1943 = vmatprep.subr.mxu0 0.0
  %1944 = vmatpush1.msra.mxu0 0.0
  %1945 = vmatprep.subr.mxu0 0.0
  %1946 = vmatpush1.msra.mxu0 0.0
  %1947 = vmatprep.subr.mxu0 0.0
  %1948 = vmatpush1.msra.mxu0 0.0
  %1949 = vmatprep.subr.mxu0 0.0
  %1950 = vmatpush1.msra.mxu0 0.0
  %1951 = vmatprep.subr.mxu0 0.0
  %1952 = vmatpush1.msra.mxu0 0.0
  %1953 = vmatprep.mubr.f32.mxu0 0.0
  %1954 = vmatmul.mubr.f32.gmra.mrb[0].mxu0 %v1887
  %v1955 = vpop.f32.mrb[0].mxu0
  %v1956 = vadd.f32 0.0, %v1955
  %v1957 = vpop.f32.mrb[0].mxu0
  %1958 = vdwg.mxu0
  %1959 = vrot.lane.b32.xlu0 %v463, 40
  %v1960 = vpop.permute.xlu0 %1959
  %v1963 = vsel %vm467, %v1882, 0
  %1965 = vmatprep.subr.mxu0 0.0
  %1966 = vmatpush1.msra.mxu0 %v1960
  %1967 = vmatprep.subr.mxu0 0.0
  %1968 = vmatpush1.msra.mxu0 0.0
  %1969 = vmatprep.subr.mxu0 0.0
  %1970 = vmatpush1.msra.mxu0 0.0
  %1971 = vmatprep.subr.mxu0 0.0
  %1972 = vmatpush1.msra.mxu0 0.0
  %1973 = vmatprep.subr.mxu0 0.0
  %1974 = vmatpush1.msra.mxu0 0.0
  %1975 = vmatprep.subr.mxu0 0.0
  %1976 = vmatpush1.msra.mxu0 0.0
  %1977 = vmatprep.subr.mxu0 0.0
  %1978 = vmatpush1.msra.mxu0 0.0
  %1979 = vmatprep.subr.mxu0 0.0
  %1980 = vmatpush1.msra.mxu0 0.0
  %1981 = vmatprep.subr.mxu0 0.0
  %1982 = vmatpush1.msra.mxu0 0.0
  %1983 = vmatprep.subr.mxu0 0.0
  %1984 = vmatpush1.msra.mxu0 0.0
  %1985 = vmatprep.subr.mxu0 0.0
  %1986 = vmatpush1.msra.mxu0 0.0
  %1987 = vmatprep.subr.mxu0 0.0
  %1988 = vmatpush1.msra.mxu0 0.0
  %1989 = vmatprep.subr.mxu0 0.0
  %1990 = vmatpush1.msra.mxu0 0.0
  %1991 = vmatprep.subr.mxu0 0.0
  %1992 = vmatpush1.msra.mxu0 0.0
  %1993 = vmatprep.subr.mxu0 0.0
  %1994 = vmatpush1.msra.mxu0 0.0
  %1995 = vmatprep.subr.mxu0 0.0
  %1996 = vmatpush1.msra.mxu0 0.0
  %1997 = vmatprep.subr.mxu0 0.0
  %1998 = vmatpush1.msra.mxu0 0.0
  %1999 = vmatprep.subr.mxu0 0.0
  %2000 = vmatpush1.msra.mxu0 0.0
  %2001 = vmatprep.subr.mxu0 0.0
  %2002 = vmatpush1.msra.mxu0 0.0
  %2003 = vmatprep.subr.mxu0 0.0
  %2004 = vmatpush1.msra.mxu0 0.0
  %2005 = vmatprep.subr.mxu0 0.0
  %2006 = vmatpush1.msra.mxu0 0.0
  %2007 = vmatprep.subr.mxu0 0.0
  %2008 = vmatpush1.msra.mxu0 0.0
  %2009 = vmatprep.subr.mxu0 0.0
  %2010 = vmatpush1.msra.mxu0 0.0
  %2011 = vmatprep.subr.mxu0 0.0
  %2012 = vmatpush1.msra.mxu0 0.0
  %2013 = vmatprep.subr.mxu0 0.0
  %2014 = vmatpush1.msra.mxu0 0.0
  %2015 = vmatprep.subr.mxu0 0.0
  %2016 = vmatpush1.msra.mxu0 0.0
  %2017 = vmatprep.subr.mxu0 0.0
  %2018 = vmatpush1.msra.mxu0 0.0
  %2019 = vmatprep.subr.mxu0 0.0
  %2020 = vmatpush1.msra.mxu0 0.0
  %2021 = vmatprep.subr.mxu0 0.0
  %2022 = vmatpush1.msra.mxu0 0.0
  %2023 = vmatprep.subr.mxu0 0.0
  %2024 = vmatpush1.msra.mxu0 0.0
  %2025 = vmatprep.subr.mxu0 0.0
  %2026 = vmatpush1.msra.mxu0 0.0
  %2027 = vmatprep.subr.mxu0 0.0
  %2028 = vmatpush1.msra.mxu0 0.0
  %2029 = vmatprep.mubr.f32.mxu0 0.0
  %2030 = vmatmul.mubr.f32.gmra.mrb[0].mxu0 %v1963
  %v2031 = vpop.f32.mrb[0].mxu0
  %v2032 = vadd.f32 0.0, %v2031
  %v2033 = vpop.f32.mrb[0].mxu0
  %2034 = vdwg.mxu0
  %v2035 = vld [vmem:[%s5 + $0x18] sm:$0xff]
  %v2037 = vsel %vm467, %v1956, 0
  %v2040 = vsel %vm467, %v2032, 0
  %2042 = vmatprep.subr.mxu0 0.0
  %2043 = vmatpush1.msra.mxu0 %v2035
  %2044 = vmatprep.subr.mxu0 0.0
  %2045 = vmatpush1.msra.mxu0 0.0
  %2046 = vmatprep.subr.mxu0 0.0
  %2047 = vmatpush1.msra.mxu0 0.0
  %2048 = vmatprep.subr.mxu0 0.0
  %2049 = vmatpush1.msra.mxu0 0.0
  %2050 = vmatprep.subr.mxu0 0.0
  %2051 = vmatpush1.msra.mxu0 0.0
  %2052 = vmatprep.subr.mxu0 0.0
  %2053 = vmatpush1.msra.mxu0 0.0
  %2054 = vmatprep.subr.mxu0 0.0
  %2055 = vmatpush1.msra.mxu0 0.0
  %2056 = vmatprep.subr.mxu0 0.0
  %2057 = vmatpush1.msra.mxu0 0.0
  %2058 = vmatprep.subr.mxu0 0.0
  %2059 = vmatpush1.msra.mxu0 0.0
  %2060 = vmatprep.subr.mxu0 0.0
  %2061 = vmatpush1.msra.mxu0 0.0
  %2062 = vmatprep.subr.mxu0 0.0
  %2063 = vmatpush1.msra.mxu0 0.0
  %2064 = vmatprep.subr.mxu0 0.0
  %2065 = vmatpush1.msra.mxu0 0.0
  %2066 = vmatprep.subr.mxu0 0.0
  %2067 = vmatpush1.msra.mxu0 0.0
  %2068 = vmatprep.subr.mxu0 0.0
  %2069 = vmatpush1.msra.mxu0 0.0
  %2070 = vmatprep.subr.mxu0 0.0
  %2071 = vmatpush1.msra.mxu0 0.0
  %2072 = vmatprep.subr.mxu0 0.0
  %2073 = vmatpush1.msra.mxu0 0.0
  %2074 = vmatprep.subr.mxu0 0.0
  %2075 = vmatpush1.msra.mxu0 0.0
  %2076 = vmatprep.subr.mxu0 0.0
  %2077 = vmatpush1.msra.mxu0 0.0
  %2078 = vmatprep.subr.mxu0 0.0
  %2079 = vmatpush1.msra.mxu0 0.0
  %2080 = vmatprep.subr.mxu0 0.0
  %2081 = vmatpush1.msra.mxu0 0.0
  %2082 = vmatprep.subr.mxu0 0.0
  %2083 = vmatpush1.msra.mxu0 0.0
  %2084 = vmatprep.subr.mxu0 0.0
  %2085 = vmatpush1.msra.mxu0 0.0
  %2086 = vmatprep.subr.mxu0 0.0
  %2087 = vmatpush1.msra.mxu0 0.0
  %2088 = vmatprep.subr.mxu0 0.0
  %2089 = vmatpush1.msra.mxu0 0.0
  %2090 = vmatprep.subr.mxu0 0.0
  %2091 = vmatpush1.msra.mxu0 0.0
  %2092 = vmatprep.subr.mxu0 0.0
  %2093 = vmatpush1.msra.mxu0 0.0
  %2094 = vmatprep.subr.mxu0 0.0
  %2095 = vmatpush1.msra.mxu0 0.0
  %2096 = vmatprep.subr.mxu0 0.0
  %2097 = vmatpush1.msra.mxu0 0.0
  %2098 = vmatprep.subr.mxu0 0.0
  %2099 = vmatpush1.msra.mxu0 0.0
  %2100 = vmatprep.subr.mxu0 0.0
  %2101 = vmatpush1.msra.mxu0 0.0
  %2102 = vmatprep.subr.mxu0 0.0
  %2103 = vmatpush1.msra.mxu0 0.0
  %2104 = vmatprep.subr.mxu0 0.0
  %2105 = vmatpush1.msra.mxu0 0.0
  %2106 = vmatprep.mubr.f32.mxu0 0.0
  %2107 = vmatmul.mubr.f32.gmra.mrb[0].mxu0 %v2037
  %v2108 = vpop.f32.mrb[0].mxu0
  %v2109 = vadd.f32 0.0, %v2108
  %v2110 = vpop.f32.mrb[0].mxu0
  %2111 = vmatprep.mubr.f32.mxu0 0.0
  %2112 = vmatmul.mubr.f32.gmra.mrb[0].mxu0 %v2040
  %v2113 = vpop.f32.mrb[0].mxu0
  %v2114 = vadd.f32 0.0, %v2113
  %v2115 = vpop.f32.mrb[0].mxu0
  %2116 = vdwg.mxu0
  %v2117 = vadd.f32 %v1703, %v2109
  %v2118 = vadd.f32 %v1704, %v2114
  %v2119 = vld [vmem:[%s3 + $0xa] sm:$0x1]
  %v2120 = vlaneseq
  %v2121 = vshrl.u32 %v2120, 7
  %v2122 = vsub.s32 0, %v2121
  %v2123 = vrot.slane %v2119, %v2122
  %v2124 = vadd.f32 %v2117, %v2123
  %v2125 = vadd.f32 %v2118, %v2123
  %v2126 = vadd.f32 %v346, %v2124
  %v2127 = vadd.f32 %v347, %v2125
  %v2128 = vsel %vm144, %v2126, 0.0
  %2129 = vadd.xlane.f32.xlu0 %v2128
  %v2130 = vpop.xlane.xlu0 %2129
  %v2131 = vsel %vm144, %v2127, 0.0
  %2132 = vadd.xlane.f32.xlu0 %v2131
  %v2133 = vpop.xlane.xlu0 %2132
  %v2134 = vmul.f32 %v2130, %v151
  %v2135 = vmul.f32 %v2133, %v151
  %v2136 = vsub.f32 %v2126, %v2134
  %v2137 = vsub.f32 %v2127, %v2135
  %v2138 = vmul.f32 %v2136, %v2136
  %v2139 = vmul.f32 %v2137, %v2137
  %v2140 = vsel %vm144, %v2138, 0.0
  %2141 = vadd.xlane.f32.xlu0 %v2140
  %v2142 = vpop.xlane.xlu0 %2141
  %v2143 = vsel %vm144, %v2139, 0.0
  %2144 = vadd.xlane.f32.xlu0 %v2143
  %v2145 = vpop.xlane.xlu0 %2144
  %v2146 = vmul.f32 %v2142, %v151
  %v2147 = vmul.f32 %v2145, %v151
  %v2148 = vadd.f32 %v2146, 1e-05
  %v2149 = vadd.f32 %v2147, 1e-05
  %v2150 = vrsqrt.pop %v2148
  %v2151 = vrsqrt.pop %v2149
  %v2152 = vmul.f32 %v2136, %v2150
  %v2153 = vmul.f32 %v2137, %v2151
  %v2154 = vld [vmem:[%s3 + $0xb] sm:$0x1]
  %v2155 = vlaneseq
  %v2156 = vshrl.u32 %v2155, 7
  %v2157 = vsub.s32 0, %v2156
  %v2158 = vrot.slane %v2154, %v2157
  %v2159 = vmul.f32 %v2152, %v2158
  %v2160 = vmul.f32 %v2153, %v2158
  %v2161 = vld [vmem:[%s3 + $0xc] sm:$0x1]
  %v2162 = vlaneseq
  %v2163 = vshrl.u32 %v2162, 7
  %v2164 = vsub.s32 0, %v2163
  %v2165 = vrot.slane %v2161, %v2164
  %v2166 = vadd.f32 %v2159, %v2165
  %v2167 = vadd.f32 %v2160, %v2165
  %v2168 = vld [vmem:[%s6] sm:$0xff]
  %v2169 = vld [vmem:[%s6 + $0x8] sm:$0xff]
  %v2170 = vld [vmem:[%s6 + $0x10] sm:$0xff]
  %v2171 = vld [vmem:[%s6 + $0x18] sm:$0xff]
  %v2172 = vld [vmem:[%s7] sm:$0x1]
  %v2173 = vlaneseq
  %v2174 = vshrl.u32 %v2173, 7
  %v2175 = vsub.s32 0, %v2174
  %v2176 = vrot.slane %v2172, %v2175
  %v2178 = vsel %vm144, %v2166, 0
  %v2181 = vsel %vm144, %v2167, 0
  %2183 = vmatprep.subr.mxu0 0.0
  %2184 = vmatpush1.msra.mxu0 %v2168
  %2185 = vmatprep.subr.mxu0 0.0
  %2186 = vmatpush1.msra.mxu0 %v2169
  %2187 = vmatprep.subr.mxu0 0.0
  %2188 = vmatpush1.msra.mxu0 %v2170
  %2189 = vmatprep.subr.mxu0 0.0
  %2190 = vmatpush1.msra.mxu0 %v2171
  %2191 = vmatprep.subr.mxu0 0.0
  %2192 = vmatpush1.msra.mxu0 0.0
  %2193 = vmatprep.subr.mxu0 0.0
  %2194 = vmatpush1.msra.mxu0 0.0
  %2195 = vmatprep.subr.mxu0 0.0
  %2196 = vmatpush1.msra.mxu0 0.0
  %2197 = vmatprep.subr.mxu0 0.0
  %2198 = vmatpush1.msra.mxu0 0.0
  %2199 = vmatprep.subr.mxu0 0.0
  %2200 = vmatpush1.msra.mxu0 0.0
  %2201 = vmatprep.subr.mxu0 0.0
  %2202 = vmatpush1.msra.mxu0 0.0
  %2203 = vmatprep.subr.mxu0 0.0
  %2204 = vmatpush1.msra.mxu0 0.0
  %2205 = vmatprep.subr.mxu0 0.0
  %2206 = vmatpush1.msra.mxu0 0.0
  %2207 = vmatprep.subr.mxu0 0.0
  %2208 = vmatpush1.msra.mxu0 0.0
  %2209 = vmatprep.subr.mxu0 0.0
  %2210 = vmatpush1.msra.mxu0 0.0
  %2211 = vmatprep.subr.mxu0 0.0
  %2212 = vmatpush1.msra.mxu0 0.0
  %2213 = vmatprep.subr.mxu0 0.0
  %2214 = vmatpush1.msra.mxu0 0.0
  %2215 = vmatprep.subr.mxu0 0.0
  %2216 = vmatpush1.msra.mxu0 0.0
  %2217 = vmatprep.subr.mxu0 0.0
  %2218 = vmatpush1.msra.mxu0 0.0
  %2219 = vmatprep.subr.mxu0 0.0
  %2220 = vmatpush1.msra.mxu0 0.0
  %2221 = vmatprep.subr.mxu0 0.0
  %2222 = vmatpush1.msra.mxu0 0.0
  %2223 = vmatprep.subr.mxu0 0.0
  %2224 = vmatpush1.msra.mxu0 0.0
  %2225 = vmatprep.subr.mxu0 0.0
  %2226 = vmatpush1.msra.mxu0 0.0
  %2227 = vmatprep.subr.mxu0 0.0
  %2228 = vmatpush1.msra.mxu0 0.0
  %2229 = vmatprep.subr.mxu0 0.0
  %2230 = vmatpush1.msra.mxu0 0.0
  %2231 = vmatprep.subr.mxu0 0.0
  %2232 = vmatpush1.msra.mxu0 0.0
  %2233 = vmatprep.subr.mxu0 0.0
  %2234 = vmatpush1.msra.mxu0 0.0
  %2235 = vmatprep.subr.mxu0 0.0
  %2236 = vmatpush1.msra.mxu0 0.0
  %2237 = vmatprep.subr.mxu0 0.0
  %2238 = vmatpush1.msra.mxu0 0.0
  %2239 = vmatprep.subr.mxu0 0.0
  %2240 = vmatpush1.msra.mxu0 0.0
  %2241 = vmatprep.subr.mxu0 0.0
  %2242 = vmatpush1.msra.mxu0 0.0
  %2243 = vmatprep.subr.mxu0 0.0
  %2244 = vmatpush1.msra.mxu0 0.0
  %2245 = vmatprep.subr.mxu0 0.0
  %2246 = vmatpush1.msra.mxu0 0.0
  %2247 = vmatprep.mubr.f32.mxu0 0.0
  %2248 = vmatmul.mubr.f32.gmra.mrb[0].mxu0 %v2178
  %v2249 = vpop.f32.mrb[0].mxu0
  %v2250 = vadd.f32 %v2176, %v2249
  %v2251 = vpop.f32.mrb[0].mxu0
  %2252 = vmatprep.mubr.f32.mxu0 0.0
  %2253 = vmatmul.mubr.f32.gmra.mrb[0].mxu0 %v2181
  %v2254 = vpop.f32.mrb[0].mxu0
  %v2255 = vadd.f32 %v2176, %v2254
  %v2256 = vpop.f32.mrb[0].mxu0
  %2257 = vdwg.mxu0
  %v2258 = vmax.f32 %v2250, 0.0
  %v2259 = vmax.f32 %v2255, 0.0
  %v2260 = vld [vmem:[%s8] sm:$0xff]
  %v2261 = vld [vmem:[%s8 + $0x8] sm:$0xff]
  %v2262 = vld [vmem:[%s8 + $0x10] sm:$0xff]
  %v2263 = vld [vmem:[%s8 + $0x18] sm:$0xff]
  %v2264 = vld [vmem:[%s8 + $0x20] sm:$0xff]
  %v2265 = vld [vmem:[%s8 + $0x28] sm:$0xff]
  %v2266 = vld [vmem:[%s8 + $0x30] sm:$0xff]
  %v2267 = vld [vmem:[%s8 + $0x38] sm:$0xff]
  %v2268 = vld [vmem:[%s8 + $0x40] sm:$0xff]
  %v2269 = vld [vmem:[%s8 + $0x48] sm:$0xff]
  %v2270 = vld [vmem:[%s8 + $0x50] sm:$0xff]
  %v2271 = vld [vmem:[%s8 + $0x58] sm:$0xff]
  %v2272 = vld [vmem:[%s8 + $0x60] sm:$0xff]
  %v2273 = vld [vmem:[%s8 + $0x68] sm:$0xff]
  %v2274 = vld [vmem:[%s8 + $0x70] sm:$0xff]
  %v2275 = vld [vmem:[%s8 + $0x78] sm:$0xff]
  %v2276 = vld [vmem:[%s3 + $0xd] sm:$0x1]
  %v2277 = vlaneseq
  %v2278 = vshrl.u32 %v2277, 7
  %v2279 = vsub.s32 0, %v2278
  %v2280 = vrot.slane %v2276, %v2279
  %2281 = vmatprep.subr.mxu0 0.0
  %2282 = vmatpush1.msra.mxu0 %v2260
  %2283 = vmatprep.subr.mxu0 0.0
  %2284 = vmatpush1.msra.mxu0 %v2261
  %2285 = vmatprep.subr.mxu0 0.0
  %2286 = vmatpush1.msra.mxu0 %v2262
  %2287 = vmatprep.subr.mxu0 0.0
  %2288 = vmatpush1.msra.mxu0 %v2263
  %2289 = vmatprep.subr.mxu0 0.0
  %2290 = vmatpush1.msra.mxu0 %v2264
  %2291 = vmatprep.subr.mxu0 0.0
  %2292 = vmatpush1.msra.mxu0 %v2265
  %2293 = vmatprep.subr.mxu0 0.0
  %2294 = vmatpush1.msra.mxu0 %v2266
  %2295 = vmatprep.subr.mxu0 0.0
  %2296 = vmatpush1.msra.mxu0 %v2267
  %2297 = vmatprep.subr.mxu0 0.0
  %2298 = vmatpush1.msra.mxu0 %v2268
  %2299 = vmatprep.subr.mxu0 0.0
  %2300 = vmatpush1.msra.mxu0 %v2269
  %2301 = vmatprep.subr.mxu0 0.0
  %2302 = vmatpush1.msra.mxu0 %v2270
  %2303 = vmatprep.subr.mxu0 0.0
  %2304 = vmatpush1.msra.mxu0 %v2271
  %2305 = vmatprep.subr.mxu0 0.0
  %2306 = vmatpush1.msra.mxu0 %v2272
  %2307 = vmatprep.subr.mxu0 0.0
  %2308 = vmatpush1.msra.mxu0 %v2273
  %2309 = vmatprep.subr.mxu0 0.0
  %2310 = vmatpush1.msra.mxu0 %v2274
  %2311 = vmatprep.subr.mxu0 0.0
  %2312 = vmatpush1.msra.mxu0 %v2275
  %2313 = vmatprep.subr.mxu0 0.0
  %2314 = vmatpush1.msra.mxu0 0.0
  %2315 = vmatprep.subr.mxu0 0.0
  %2316 = vmatpush1.msra.mxu0 0.0
  %2317 = vmatprep.subr.mxu0 0.0
  %2318 = vmatpush1.msra.mxu0 0.0
  %2319 = vmatprep.subr.mxu0 0.0
  %2320 = vmatpush1.msra.mxu0 0.0
  %2321 = vmatprep.subr.mxu0 0.0
  %2322 = vmatpush1.msra.mxu0 0.0
  %2323 = vmatprep.subr.mxu0 0.0
  %2324 = vmatpush1.msra.mxu0 0.0
  %2325 = vmatprep.subr.mxu0 0.0
  %2326 = vmatpush1.msra.mxu0 0.0
  %2327 = vmatprep.subr.mxu0 0.0
  %2328 = vmatpush1.msra.mxu0 0.0
  %2329 = vmatprep.subr.mxu0 0.0
  %2330 = vmatpush1.msra.mxu0 0.0
  %2331 = vmatprep.subr.mxu0 0.0
  %2332 = vmatpush1.msra.mxu0 0.0
  %2333 = vmatprep.subr.mxu0 0.0
  %2334 = vmatpush1.msra.mxu0 0.0
  %2335 = vmatprep.subr.mxu0 0.0
  %2336 = vmatpush1.msra.mxu0 0.0
  %2337 = vmatprep.subr.mxu0 0.0
  %2338 = vmatpush1.msra.mxu0 0.0
  %2339 = vmatprep.subr.mxu0 0.0
  %2340 = vmatpush1.msra.mxu0 0.0
  %2341 = vmatprep.subr.mxu0 0.0
  %2342 = vmatpush1.msra.mxu0 0.0
  %2343 = vmatprep.subr.mxu0 0.0
  %2344 = vmatpush1.msra.mxu0 0.0
  %2345 = vmatprep.mubr.f32.mxu0 0.0
  %2346 = vmatmul.mubr.f32.gmra.mrb[0].mxu0 %v2258
  %v2347 = vpop.f32.mrb[0].mxu0
  %v2348 = vadd.f32 %v2280, %v2347
  %v2349 = vpop.f32.mrb[0].mxu0
  %2350 = vmatprep.mubr.f32.mxu0 0.0
  %2351 = vmatmul.mubr.f32.gmra.mrb[0].mxu0 %v2259
  %v2352 = vpop.f32.mrb[0].mxu0
  %v2353 = vadd.f32 %v2280, %v2352
  %v2354 = vpop.f32.mrb[0].mxu0
  %2355 = vdwg.mxu0
  %v2356 = vadd.f32 %v2166, %v2348
  %v2357 = vadd.f32 %v2167, %v2353
  %v2358 = vsel %vm144, %v2356, 0.0
  %2359 = vadd.xlane.f32.xlu0 %v2358
  %v2360 = vpop.xlane.xlu0 %2359
  %v2361 = vsel %vm144, %v2357, 0.0
  %2362 = vadd.xlane.f32.xlu0 %v2361
  %v2363 = vpop.xlane.xlu0 %2362
  %v2364 = vmul.f32 %v2360, %v151
  %v2365 = vmul.f32 %v2363, %v151
  %v2366 = vsub.f32 %v2356, %v2364
  %v2367 = vsub.f32 %v2357, %v2365
  %v2368 = vmul.f32 %v2366, %v2366
  %v2369 = vmul.f32 %v2367, %v2367
  %v2370 = vsel %vm144, %v2368, 0.0
  %2371 = vadd.xlane.f32.xlu0 %v2370
  %v2372 = vpop.xlane.xlu0 %2371
  %v2373 = vsel %vm144, %v2369, 0.0
  %2374 = vadd.xlane.f32.xlu0 %v2373
  %v2375 = vpop.xlane.xlu0 %2374
  %v2376 = vmul.f32 %v2372, %v151
  %v2377 = vmul.f32 %v2375, %v151
  %v2378 = vadd.f32 %v2376, 1e-05
  %v2379 = vadd.f32 %v2377, 1e-05
  %v2380 = vrsqrt.pop %v2378
  %v2381 = vrsqrt.pop %v2379
  %v2382 = vmul.f32 %v2366, %v2380
  %v2383 = vmul.f32 %v2367, %v2381
  %v2384 = vld [vmem:[%s3 + $0xe] sm:$0x1]
  %v2385 = vlaneseq
  %v2386 = vshrl.u32 %v2385, 7
  %v2387 = vsub.s32 0, %v2386
  %v2388 = vrot.slane %v2384, %v2387
  %v2389 = vmul.f32 %v2382, %v2388
  %v2390 = vmul.f32 %v2383, %v2388
  %v2391 = vld [vmem:[%s3 + $0xf] sm:$0x1]
  %v2392 = vlaneseq
  %v2393 = vshrl.u32 %v2392, 7
  %v2394 = vsub.s32 0, %v2393
  %v2395 = vrot.slane %v2391, %v2394
  %v2396 = vadd.f32 %v2389, %v2395
  %v2397 = vadd.f32 %v2390, %v2395
  %s2398 = scalar_lea.vmem %s4, 32
  %v2399 = vld [vmem:[%s2398] sm:$0xff]
  %v2400 = vld [vmem:[%s2398 + $0x8] sm:$0xff]
  %v2401 = vld [vmem:[%s2398 + $0x10] sm:$0xff]
  %v2402 = vld [vmem:[%s2398 + $0x18] sm:$0xff]
  %v2404 = vsel %vm144, %v2396, 0
  %v2407 = vsel %vm144, %v2397, 0
  %2409 = vmatprep.subr.mxu0 0.0
  %2410 = vmatpush1.msra.mxu0 %v2399
  %2411 = vmatprep.subr.mxu0 0.0
  %2412 = vmatpush1.msra.mxu0 %v2400
  %2413 = vmatprep.subr.mxu0 0.0
  %2414 = vmatpush1.msra.mxu0 %v2401
  %2415 = vmatprep.subr.mxu0 0.0
  %2416 = vmatpush1.msra.mxu0 %v2402
  %2417 = vmatprep.subr.mxu0 0.0
  %2418 = vmatpush1.msra.mxu0 0.0
  %2419 = vmatprep.subr.mxu0 0.0
  %2420 = vmatpush1.msra.mxu0 0.0
  %2421 = vmatprep.subr.mxu0 0.0
  %2422 = vmatpush1.msra.mxu0 0.0
  %2423 = vmatprep.subr.mxu0 0.0
  %2424 = vmatpush1.msra.mxu0 0.0
  %2425 = vmatprep.subr.mxu0 0.0
  %2426 = vmatpush1.msra.mxu0 0.0
  %2427 = vmatprep.subr.mxu0 0.0
  %2428 = vmatpush1.msra.mxu0 0.0
  %2429 = vmatprep.subr.mxu0 0.0
  %2430 = vmatpush1.msra.mxu0 0.0
  %2431 = vmatprep.subr.mxu0 0.0
  %2432 = vmatpush1.msra.mxu0 0.0
  %2433 = vmatprep.subr.mxu0 0.0
  %2434 = vmatpush1.msra.mxu0 0.0
  %2435 = vmatprep.subr.mxu0 0.0
  %2436 = vmatpush1.msra.mxu0 0.0
  %2437 = vmatprep.subr.mxu0 0.0
  %2438 = vmatpush1.msra.mxu0 0.0
  %2439 = vmatprep.subr.mxu0 0.0
  %2440 = vmatpush1.msra.mxu0 0.0
  %2441 = vmatprep.subr.mxu0 0.0
  %2442 = vmatpush1.msra.mxu0 0.0
  %2443 = vmatprep.subr.mxu0 0.0
  %2444 = vmatpush1.msra.mxu0 0.0
  %2445 = vmatprep.subr.mxu0 0.0
  %2446 = vmatpush1.msra.mxu0 0.0
  %2447 = vmatprep.subr.mxu0 0.0
  %2448 = vmatpush1.msra.mxu0 0.0
  %2449 = vmatprep.subr.mxu0 0.0
  %2450 = vmatpush1.msra.mxu0 0.0
  %2451 = vmatprep.subr.mxu0 0.0
  %2452 = vmatpush1.msra.mxu0 0.0
  %2453 = vmatprep.subr.mxu0 0.0
  %2454 = vmatpush1.msra.mxu0 0.0
  %2455 = vmatprep.subr.mxu0 0.0
  %2456 = vmatpush1.msra.mxu0 0.0
  %2457 = vmatprep.subr.mxu0 0.0
  %2458 = vmatpush1.msra.mxu0 0.0
  %2459 = vmatprep.subr.mxu0 0.0
  %2460 = vmatpush1.msra.mxu0 0.0
  %2461 = vmatprep.subr.mxu0 0.0
  %2462 = vmatpush1.msra.mxu0 0.0
  %2463 = vmatprep.subr.mxu0 0.0
  %2464 = vmatpush1.msra.mxu0 0.0
  %2465 = vmatprep.subr.mxu0 0.0
  %2466 = vmatpush1.msra.mxu0 0.0
  %2467 = vmatprep.subr.mxu0 0.0
  %2468 = vmatpush1.msra.mxu0 0.0
  %2469 = vmatprep.subr.mxu0 0.0
  %2470 = vmatpush1.msra.mxu0 0.0
  %2471 = vmatprep.subr.mxu0 0.0
  %2472 = vmatpush1.msra.mxu0 0.0
  %2473 = vmatprep.mubr.f32.mxu0 0.0
  %2474 = vmatmul.mubr.f32.gmra.mrb[0].mxu0 %v2404
  %v2475 = vpop.f32.mrb[0].mxu0
  %v2476 = vadd.f32 0.0, %v2475
  %v2477 = vpop.f32.mrb[0].mxu0
  %2478 = vmatprep.mubr.f32.mxu0 0.0
  %2479 = vmatmul.mubr.f32.gmra.mrb[0].mxu0 %v2407
  %v2480 = vpop.f32.mrb[0].mxu0
  %v2481 = vadd.f32 0.0, %v2480
  %v2482 = vpop.f32.mrb[0].mxu0
  %2483 = vdwg.mxu0
  %v2484 = vld [vmem:[%s3 + $0x10] sm:$0x1]
  %v2485 = vlaneseq
  %v2486 = vshrl.u32 %v2485, 7
  %v2487 = vsub.s32 0, %v2486
  %v2488 = vrot.slane %v2484, %v2487
  %v2489 = vadd.f32 %v2476, %v2488
  %v2490 = vadd.f32 %v2481, %v2488
  %v2491 = vmul.f32 %v2489, 0.35355338
  %v2492 = vmul.f32 %v2490, 0.35355338
  %v2493 = vld [vmem:[%s3 + $0x11] sm:$0x1]
  %v2494 = vlaneseq
  %v2495 = vshrl.u32 %v2494, 7
  %v2496 = vsub.s32 0, %v2495
  %v2497 = vrot.slane %v2493, %v2496
  %2499 = vrot.lane.b32.xlu0 %v2497, 32
  %v2500 = vpop.permute.xlu0 %2499
  %v2502 = vadd.f32 %v2476, %v2500
  %v2503 = vadd.f32 %v2481, %v2500
  %v2504 = vld [vmem:[%s3 + $0x12] sm:$0x1]
  %v2505 = vlaneseq
  %v2506 = vshrl.u32 %v2505, 7
  %v2507 = vsub.s32 0, %v2506
  %v2508 = vrot.slane %v2504, %v2507
  %2510 = vrot.lane.b32.xlu0 %v2508, 64
  %v2511 = vpop.permute.xlu0 %2510
  %v2513 = vadd.f32 %v2476, %v2511
  %v2514 = vadd.f32 %v2481, %v2511
  %2516 = vrot.lane.b32.xlu0 %v2502, 96
  %v2517 = vpop.permute.xlu0 %2516
  %v2519 = vsel %vm467, %v2491, 0
  %v2521 = vsel %vm467, %v2517, 0
  %2523 = vmatprep.subr.mxu0 0.0
  %2524 = vmatpush1.xpose.msra.mxu0 %v2521
  %2525 = vmatprep.subr.mxu0 0.0
  %2526 = vmatpush1.xpose.msra.mxu0 0.0
  %2527 = vmatprep.subr.mxu0 0.0
  %2528 = vmatpush1.xpose.msra.mxu0 0.0
  %2529 = vmatprep.subr.mxu0 0.0
  %2530 = vmatpush1.xpose.msra.mxu0 0.0
  %2531 = vmatprep.subr.mxu0 0.0
  %2532 = vmatpush1.xpose.msra.mxu0 0.0
  %2533 = vmatprep.subr.mxu0 0.0
  %2534 = vmatpush1.xpose.msra.mxu0 0.0
  %2535 = vmatprep.subr.mxu0 0.0
  %2536 = vmatpush1.xpose.msra.mxu0 0.0
  %2537 = vmatprep.subr.mxu0 0.0
  %2538 = vmatpush1.xpose.msra.mxu0 0.0
  %2539 = vmatprep.subr.mxu0 0.0
  %2540 = vmatpush1.xpose.msra.mxu0 0.0
  %2541 = vmatprep.subr.mxu0 0.0
  %2542 = vmatpush1.xpose.msra.mxu0 0.0
  %2543 = vmatprep.subr.mxu0 0.0
  %2544 = vmatpush1.xpose.msra.mxu0 0.0
  %2545 = vmatprep.subr.mxu0 0.0
  %2546 = vmatpush1.xpose.msra.mxu0 0.0
  %2547 = vmatprep.subr.mxu0 0.0
  %2548 = vmatpush1.xpose.msra.mxu0 0.0
  %2549 = vmatprep.subr.mxu0 0.0
  %2550 = vmatpush1.xpose.msra.mxu0 0.0
  %2551 = vmatprep.subr.mxu0 0.0
  %2552 = vmatpush1.xpose.msra.mxu0 0.0
  %2553 = vmatprep.subr.mxu0 0.0
  %2554 = vmatpush1.xpose.msra.mxu0 0.0
  %2555 = vmatprep.subr.mxu0 0.0
  %2556 = vmatpush1.xpose.msra.mxu0 0.0
  %2557 = vmatprep.subr.mxu0 0.0
  %2558 = vmatpush1.xpose.msra.mxu0 0.0
  %2559 = vmatprep.subr.mxu0 0.0
  %2560 = vmatpush1.xpose.msra.mxu0 0.0
  %2561 = vmatprep.subr.mxu0 0.0
  %2562 = vmatpush1.xpose.msra.mxu0 0.0
  %2563 = vmatprep.subr.mxu0 0.0
  %2564 = vmatpush1.xpose.msra.mxu0 0.0
  %2565 = vmatprep.subr.mxu0 0.0
  %2566 = vmatpush1.xpose.msra.mxu0 0.0
  %2567 = vmatprep.subr.mxu0 0.0
  %2568 = vmatpush1.xpose.msra.mxu0 0.0
  %2569 = vmatprep.subr.mxu0 0.0
  %2570 = vmatpush1.xpose.msra.mxu0 0.0
  %2571 = vmatprep.subr.mxu0 0.0
  %2572 = vmatpush1.xpose.msra.mxu0 0.0
  %2573 = vmatprep.subr.mxu0 0.0
  %2574 = vmatpush1.xpose.msra.mxu0 0.0
  %2575 = vmatprep.subr.mxu0 0.0
  %2576 = vmatpush1.xpose.msra.mxu0 0.0
  %2577 = vmatprep.subr.mxu0 0.0
  %2578 = vmatpush1.xpose.msra.mxu0 0.0
  %2579 = vmatprep.subr.mxu0 0.0
  %2580 = vmatpush1.xpose.msra.mxu0 0.0
  %2581 = vmatprep.subr.mxu0 0.0
  %2582 = vmatpush1.xpose.msra.mxu0 0.0
  %2583 = vmatprep.subr.mxu0 0.0
  %2584 = vmatpush1.xpose.msra.mxu0 0.0
  %2585 = vmatprep.subr.mxu0 0.0
  %2586 = vmatpush1.xpose.msra.mxu0 0.0
  %2587 = vmatprep.mubr.f32.mxu0 0.0
  %2588 = vmatmul.mubr.f32.gmra.mrb[0].mxu0 %v2519
  %v2589 = vpop.f32.mrb[0].mxu0
  %v2590 = vadd.f32 0.0, %v2589
  %v2591 = vpop.f32.mrb[0].mxu0
  %2592 = vdwg.mxu0
  %2594 = vrot.lane.b32.xlu0 %v2503, 96
  %v2595 = vpop.permute.xlu0 %2594
  %v2597 = vsel %vm467, %v2492, 0
  %v2599 = vsel %vm467, %v2595, 0
  %2601 = vmatprep.subr.mxu0 0.0
  %2602 = vmatpush1.xpose.msra.mxu0 %v2599
  %2603 = vmatprep.subr.mxu0 0.0
  %2604 = vmatpush1.xpose.msra.mxu0 0.0
  %2605 = vmatprep.subr.mxu0 0.0
  %2606 = vmatpush1.xpose.msra.mxu0 0.0
  %2607 = vmatprep.subr.mxu0 0.0
  %2608 = vmatpush1.xpose.msra.mxu0 0.0
  %2609 = vmatprep.subr.mxu0 0.0
  %2610 = vmatpush1.xpose.msra.mxu0 0.0
  %2611 = vmatprep.subr.mxu0 0.0
  %2612 = vmatpush1.xpose.msra.mxu0 0.0
  %2613 = vmatprep.subr.mxu0 0.0
  %2614 = vmatpush1.xpose.msra.mxu0 0.0
  %2615 = vmatprep.subr.mxu0 0.0
  %2616 = vmatpush1.xpose.msra.mxu0 0.0
  %2617 = vmatprep.subr.mxu0 0.0
  %2618 = vmatpush1.xpose.msra.mxu0 0.0
  %2619 = vmatprep.subr.mxu0 0.0
  %2620 = vmatpush1.xpose.msra.mxu0 0.0
  %2621 = vmatprep.subr.mxu0 0.0
  %2622 = vmatpush1.xpose.msra.mxu0 0.0
  %2623 = vmatprep.subr.mxu0 0.0
  %2624 = vmatpush1.xpose.msra.mxu0 0.0
  %2625 = vmatprep.subr.mxu0 0.0
  %2626 = vmatpush1.xpose.msra.mxu0 0.0
  %2627 = vmatprep.subr.mxu0 0.0
  %2628 = vmatpush1.xpose.msra.mxu0 0.0
  %2629 = vmatprep.subr.mxu0 0.0
  %2630 = vmatpush1.xpose.msra.mxu0 0.0
  %2631 = vmatprep.subr.mxu0 0.0
  %2632 = vmatpush1.xpose.msra.mxu0 0.0
  %2633 = vmatprep.subr.mxu0 0.0
  %2634 = vmatpush1.xpose.msra.mxu0 0.0
  %2635 = vmatprep.subr.mxu0 0.0
  %2636 = vmatpush1.xpose.msra.mxu0 0.0
  %2637 = vmatprep.subr.mxu0 0.0
  %2638 = vmatpush1.xpose.msra.mxu0 0.0
  %2639 = vmatprep.subr.mxu0 0.0
  %2640 = vmatpush1.xpose.msra.mxu0 0.0
  %2641 = vmatprep.subr.mxu0 0.0
  %2642 = vmatpush1.xpose.msra.mxu0 0.0
  %2643 = vmatprep.subr.mxu0 0.0
  %2644 = vmatpush1.xpose.msra.mxu0 0.0
  %2645 = vmatprep.subr.mxu0 0.0
  %2646 = vmatpush1.xpose.msra.mxu0 0.0
  %2647 = vmatprep.subr.mxu0 0.0
  %2648 = vmatpush1.xpose.msra.mxu0 0.0
  %2649 = vmatprep.subr.mxu0 0.0
  %2650 = vmatpush1.xpose.msra.mxu0 0.0
  %2651 = vmatprep.subr.mxu0 0.0
  %2652 = vmatpush1.xpose.msra.mxu0 0.0
  %2653 = vmatprep.subr.mxu0 0.0
  %2654 = vmatpush1.xpose.msra.mxu0 0.0
  %2655 = vmatprep.subr.mxu0 0.0
  %2656 = vmatpush1.xpose.msra.mxu0 0.0
  %2657 = vmatprep.subr.mxu0 0.0
  %2658 = vmatpush1.xpose.msra.mxu0 0.0
  %2659 = vmatprep.subr.mxu0 0.0
  %2660 = vmatpush1.xpose.msra.mxu0 0.0
  %2661 = vmatprep.subr.mxu0 0.0
  %2662 = vmatpush1.xpose.msra.mxu0 0.0
  %2663 = vmatprep.subr.mxu0 0.0
  %2664 = vmatpush1.xpose.msra.mxu0 0.0
  %2665 = vmatprep.mubr.f32.mxu0 0.0
  %2666 = vmatmul.mubr.f32.gmra.mrb[0].mxu0 %v2597
  %v2667 = vpop.f32.mrb[0].mxu0
  %v2668 = vadd.f32 0.0, %v2667
  %v2669 = vpop.f32.mrb[0].mxu0
  %2670 = vdwg.mxu0
  %v2671 = vsel %vm467, %v2590, -inf
  %2672 = vmax.xlane.f32.xlu0 %v2671
  %v2673 = vpop.xlane.xlu0 %2672
  %v2674 = vsel %vm467, %v2668, -inf
  %2675 = vmax.xlane.f32.xlu0 %v2674
  %v2676 = vpop.xlane.xlu0 %2675
  %v2677 = vsub.f32 %v2590, %v2673
  %v2678 = vsub.f32 %v2668, %v2676
  %v2679 = vmul.f32 %v2677, 1.442695
  %v2680 = vpow.pop %v2679
  %v2681 = vmul.f32 %v2678, 1.442695
  %v2682 = vpow.pop %v2681
  %v2683 = vsel %vm467, %v2680, 0.0
  %2684 = vadd.xlane.f32.xlu0 %v2683
  %v2685 = vpop.xlane.xlu0 %2684
  %v2686 = vsel %vm467, %v2682, 0.0
  %2687 = vadd.xlane.f32.xlu0 %v2686
  %v2688 = vpop.xlane.xlu0 %2687
  %v2689 = vrcp.pop %v2685
  %v2690 = vrcp.pop %v2688
  %v2691 = vmul.f32 %v2680, %v2689
  %v2692 = vmul.f32 %v2682, %v2690
  %2694 = vrot.lane.b32.xlu0 %v2513, 64
  %v2695 = vpop.permute.xlu0 %2694
  %v2698 = vsel %vm467, %v2691, 0
  %2700 = vmatprep.subr.mxu0 0.0
  %2701 = vmatpush1.msra.mxu0 %v2695
  %2702 = vmatprep.subr.mxu0 0.0
  %2703 = vmatpush1.msra.mxu0 0.0
  %2704 = vmatprep.subr.mxu0 0.0
  %2705 = vmatpush1.msra.mxu0 0.0
  %2706 = vmatprep.subr.mxu0 0.0
  %2707 = vmatpush1.msra.mxu0 0.0
  %2708 = vmatprep.subr.mxu0 0.0
  %2709 = vmatpush1.msra.mxu0 0.0
  %2710 = vmatprep.subr.mxu0 0.0
  %2711 = vmatpush1.msra.mxu0 0.0
  %2712 = vmatprep.subr.mxu0 0.0
  %2713 = vmatpush1.msra.mxu0 0.0
  %2714 = vmatprep.subr.mxu0 0.0
  %2715 = vmatpush1.msra.mxu0 0.0
  %2716 = vmatprep.subr.mxu0 0.0
  %2717 = vmatpush1.msra.mxu0 0.0
  %2718 = vmatprep.subr.mxu0 0.0
  %2719 = vmatpush1.msra.mxu0 0.0
  %2720 = vmatprep.subr.mxu0 0.0
  %2721 = vmatpush1.msra.mxu0 0.0
  %2722 = vmatprep.subr.mxu0 0.0
  %2723 = vmatpush1.msra.mxu0 0.0
  %2724 = vmatprep.subr.mxu0 0.0
  %2725 = vmatpush1.msra.mxu0 0.0
  %2726 = vmatprep.subr.mxu0 0.0
  %2727 = vmatpush1.msra.mxu0 0.0
  %2728 = vmatprep.subr.mxu0 0.0
  %2729 = vmatpush1.msra.mxu0 0.0
  %2730 = vmatprep.subr.mxu0 0.0
  %2731 = vmatpush1.msra.mxu0 0.0
  %2732 = vmatprep.subr.mxu0 0.0
  %2733 = vmatpush1.msra.mxu0 0.0
  %2734 = vmatprep.subr.mxu0 0.0
  %2735 = vmatpush1.msra.mxu0 0.0
  %2736 = vmatprep.subr.mxu0 0.0
  %2737 = vmatpush1.msra.mxu0 0.0
  %2738 = vmatprep.subr.mxu0 0.0
  %2739 = vmatpush1.msra.mxu0 0.0
  %2740 = vmatprep.subr.mxu0 0.0
  %2741 = vmatpush1.msra.mxu0 0.0
  %2742 = vmatprep.subr.mxu0 0.0
  %2743 = vmatpush1.msra.mxu0 0.0
  %2744 = vmatprep.subr.mxu0 0.0
  %2745 = vmatpush1.msra.mxu0 0.0
  %2746 = vmatprep.subr.mxu0 0.0
  %2747 = vmatpush1.msra.mxu0 0.0
  %2748 = vmatprep.subr.mxu0 0.0
  %2749 = vmatpush1.msra.mxu0 0.0
  %2750 = vmatprep.subr.mxu0 0.0
  %2751 = vmatpush1.msra.mxu0 0.0
  %2752 = vmatprep.subr.mxu0 0.0
  %2753 = vmatpush1.msra.mxu0 0.0
  %2754 = vmatprep.subr.mxu0 0.0
  %2755 = vmatpush1.msra.mxu0 0.0
  %2756 = vmatprep.subr.mxu0 0.0
  %2757 = vmatpush1.msra.mxu0 0.0
  %2758 = vmatprep.subr.mxu0 0.0
  %2759 = vmatpush1.msra.mxu0 0.0
  %2760 = vmatprep.subr.mxu0 0.0
  %2761 = vmatpush1.msra.mxu0 0.0
  %2762 = vmatprep.subr.mxu0 0.0
  %2763 = vmatpush1.msra.mxu0 0.0
  %2764 = vmatprep.mubr.f32.mxu0 0.0
  %2765 = vmatmul.mubr.f32.gmra.mrb[0].mxu0 %v2698
  %v2766 = vpop.f32.mrb[0].mxu0
  %v2767 = vadd.f32 0.0, %v2766
  %v2768 = vpop.f32.mrb[0].mxu0
  %2769 = vdwg.mxu0
  %2771 = vrot.lane.b32.xlu0 %v2514, 64
  %v2772 = vpop.permute.xlu0 %2771
  %v2775 = vsel %vm467, %v2692, 0
  %2777 = vmatprep.subr.mxu0 0.0
  %2778 = vmatpush1.msra.mxu0 %v2772
  %2779 = vmatprep.subr.mxu0 0.0
  %2780 = vmatpush1.msra.mxu0 0.0
  %2781 = vmatprep.subr.mxu0 0.0
  %2782 = vmatpush1.msra.mxu0 0.0
  %2783 = vmatprep.subr.mxu0 0.0
  %2784 = vmatpush1.msra.mxu0 0.0
  %2785 = vmatprep.subr.mxu0 0.0
  %2786 = vmatpush1.msra.mxu0 0.0
  %2787 = vmatprep.subr.mxu0 0.0
  %2788 = vmatpush1.msra.mxu0 0.0
  %2789 = vmatprep.subr.mxu0 0.0
  %2790 = vmatpush1.msra.mxu0 0.0
  %2791 = vmatprep.subr.mxu0 0.0
  %2792 = vmatpush1.msra.mxu0 0.0
  %2793 = vmatprep.subr.mxu0 0.0
  %2794 = vmatpush1.msra.mxu0 0.0
  %2795 = vmatprep.subr.mxu0 0.0
  %2796 = vmatpush1.msra.mxu0 0.0
  %2797 = vmatprep.subr.mxu0 0.0
  %2798 = vmatpush1.msra.mxu0 0.0
  %2799 = vmatprep.subr.mxu0 0.0
  %2800 = vmatpush1.msra.mxu0 0.0
  %2801 = vmatprep.subr.mxu0 0.0
  %2802 = vmatpush1.msra.mxu0 0.0
  %2803 = vmatprep.subr.mxu0 0.0
  %2804 = vmatpush1.msra.mxu0 0.0
  %2805 = vmatprep.subr.mxu0 0.0
  %2806 = vmatpush1.msra.mxu0 0.0
  %2807 = vmatprep.subr.mxu0 0.0
  %2808 = vmatpush1.msra.mxu0 0.0
  %2809 = vmatprep.subr.mxu0 0.0
  %2810 = vmatpush1.msra.mxu0 0.0
  %2811 = vmatprep.subr.mxu0 0.0
  %2812 = vmatpush1.msra.mxu0 0.0
  %2813 = vmatprep.subr.mxu0 0.0
  %2814 = vmatpush1.msra.mxu0 0.0
  %2815 = vmatprep.subr.mxu0 0.0
  %2816 = vmatpush1.msra.mxu0 0.0
  %2817 = vmatprep.subr.mxu0 0.0
  %2818 = vmatpush1.msra.mxu0 0.0
  %2819 = vmatprep.subr.mxu0 0.0
  %2820 = vmatpush1.msra.mxu0 0.0
  %2821 = vmatprep.subr.mxu0 0.0
  %2822 = vmatpush1.msra.mxu0 0.0
  %2823 = vmatprep.subr.mxu0 0.0
  %2824 = vmatpush1.msra.mxu0 0.0
  %2825 = vmatprep.subr.mxu0 0.0
  %2826 = vmatpush1.msra.mxu0 0.0
  %2827 = vmatprep.subr.mxu0 0.0
  %2828 = vmatpush1.msra.mxu0 0.0
  %2829 = vmatprep.subr.mxu0 0.0
  %2830 = vmatpush1.msra.mxu0 0.0
  %2831 = vmatprep.subr.mxu0 0.0
  %2832 = vmatpush1.msra.mxu0 0.0
  %2833 = vmatprep.subr.mxu0 0.0
  %2834 = vmatpush1.msra.mxu0 0.0
  %2835 = vmatprep.subr.mxu0 0.0
  %2836 = vmatpush1.msra.mxu0 0.0
  %2837 = vmatprep.subr.mxu0 0.0
  %2838 = vmatpush1.msra.mxu0 0.0
  %2839 = vmatprep.subr.mxu0 0.0
  %2840 = vmatpush1.msra.mxu0 0.0
  %2841 = vmatprep.mubr.f32.mxu0 0.0
  %2842 = vmatmul.mubr.f32.gmra.mrb[0].mxu0 %v2775
  %v2843 = vpop.f32.mrb[0].mxu0
  %v2844 = vadd.f32 0.0, %v2843
  %v2845 = vpop.f32.mrb[0].mxu0
  %2846 = vdwg.mxu0
  %s2847 = scalar_lea.vmem %s5, 32
  %v2848 = vld [vmem:[%s2847] sm:$0xff]
  %2849 = vrot.lane.b32.xlu0 %v2491, 120
  %v2850 = vpop.permute.xlu0 %2849
  %2851 = vrot.lane.b32.xlu0 %v2502, 88
  %v2852 = vpop.permute.xlu0 %2851
  %v2853 = vsel %vm467, %v2850, 0
  %v2855 = vsel %vm467, %v2852, 0
  %2857 = vmatprep.subr.mxu0 0.0
  %2858 = vmatpush1.xpose.msra.mxu0 %v2855
  %2859 = vmatprep.subr.mxu0 0.0
  %2860 = vmatpush1.xpose.msra.mxu0 0.0
  %2861 = vmatprep.subr.mxu0 0.0
  %2862 = vmatpush1.xpose.msra.mxu0 0.0
  %2863 = vmatprep.subr.mxu0 0.0
  %2864 = vmatpush1.xpose.msra.mxu0 0.0
  %2865 = vmatprep.subr.mxu0 0.0
  %2866 = vmatpush1.xpose.msra.mxu0 0.0
  %2867 = vmatprep.subr.mxu0 0.0
  %2868 = vmatpush1.xpose.msra.mxu0 0.0
  %2869 = vmatprep.subr.mxu0 0.0
  %2870 = vmatpush1.xpose.msra.mxu0 0.0
  %2871 = vmatprep.subr.mxu0 0.0
  %2872 = vmatpush1.xpose.msra.mxu0 0.0
  %2873 = vmatprep.subr.mxu0 0.0
  %2874 = vmatpush1.xpose.msra.mxu0 0.0
  %2875 = vmatprep.subr.mxu0 0.0
  %2876 = vmatpush1.xpose.msra.mxu0 0.0
  %2877 = vmatprep.subr.mxu0 0.0
  %2878 = vmatpush1.xpose.msra.mxu0 0.0
  %2879 = vmatprep.subr.mxu0 0.0
  %2880 = vmatpush1.xpose.msra.mxu0 0.0
  %2881 = vmatprep.subr.mxu0 0.0
  %2882 = vmatpush1.xpose.msra.mxu0 0.0
  %2883 = vmatprep.subr.mxu0 0.0
  %2884 = vmatpush1.xpose.msra.mxu0 0.0
  %2885 = vmatprep.subr.mxu0 0.0
  %2886 = vmatpush1.xpose.msra.mxu0 0.0
  %2887 = vmatprep.subr.mxu0 0.0
  %2888 = vmatpush1.xpose.msra.mxu0 0.0
  %2889 = vmatprep.subr.mxu0 0.0
  %2890 = vmatpush1.xpose.msra.mxu0 0.0
  %2891 = vmatprep.subr.mxu0 0.0
  %2892 = vmatpush1.xpose.msra.mxu0 0.0
  %2893 = vmatprep.subr.mxu0 0.0
  %2894 = vmatpush1.xpose.msra.mxu0 0.0
  %2895 = vmatprep.subr.mxu0 0.0
  %2896 = vmatpush1.xpose.msra.mxu0 0.0
  %2897 = vmatprep.subr.mxu0 0.0
  %2898 = vmatpush1.xpose.msra.mxu0 0.0
  %2899 = vmatprep.subr.mxu0 0.0
  %2900 = vmatpush1.xpose.msra.mxu0 0.0
  %2901 = vmatprep.subr.mxu0 0.0
  %2902 = vmatpush1.xpose.msra.mxu0 0.0
  %2903 = vmatprep.subr.mxu0 0.0
  %2904 = vmatpush1.xpose.msra.mxu0 0.0
  %2905 = vmatprep.subr.mxu0 0.0
  %2906 = vmatpush1.xpose.msra.mxu0 0.0
  %2907 = vmatprep.subr.mxu0 0.0
  %2908 = vmatpush1.xpose.msra.mxu0 0.0
  %2909 = vmatprep.subr.mxu0 0.0
  %2910 = vmatpush1.xpose.msra.mxu0 0.0
  %2911 = vmatprep.subr.mxu0 0.0
  %2912 = vmatpush1.xpose.msra.mxu0 0.0
  %2913 = vmatprep.subr.mxu0 0.0
  %2914 = vmatpush1.xpose.msra.mxu0 0.0
  %2915 = vmatprep.subr.mxu0 0.0
  %2916 = vmatpush1.xpose.msra.mxu0 0.0
  %2917 = vmatprep.subr.mxu0 0.0
  %2918 = vmatpush1.xpose.msra.mxu0 0.0
  %2919 = vmatprep.subr.mxu0 0.0
  %2920 = vmatpush1.xpose.msra.mxu0 0.0
  %2921 = vmatprep.mubr.f32.mxu0 0.0
  %2922 = vmatmul.mubr.f32.gmra.mrb[0].mxu0 %v2853
  %v2923 = vpop.f32.mrb[0].mxu0
  %v2924 = vadd.f32 0.0, %v2923
  %v2925 = vpop.f32.mrb[0].mxu0
  %2926 = vdwg.mxu0
  %2927 = vrot.lane.b32.xlu0 %v2492, 120
  %v2928 = vpop.permute.xlu0 %2927
  %2929 = vrot.lane.b32.xlu0 %v2503, 88
  %v2930 = vpop.permute.xlu0 %2929
  %v2931 = vsel %vm467, %v2928, 0
  %v2933 = vsel %vm467, %v2930, 0
  %2935 = vmatprep.subr.mxu0 0.0
  %2936 = vmatpush1.xpose.msra.mxu0 %v2933
  %2937 = vmatprep.subr.mxu0 0.0
  %2938 = vmatpush1.xpose.msra.mxu0 0.0
  %2939 = vmatprep.subr.mxu0 0.0
  %2940 = vmatpush1.xpose.msra.mxu0 0.0
  %2941 = vmatprep.subr.mxu0 0.0
  %2942 = vmatpush1.xpose.msra.mxu0 0.0
  %2943 = vmatprep.subr.mxu0 0.0
  %2944 = vmatpush1.xpose.msra.mxu0 0.0
  %2945 = vmatprep.subr.mxu0 0.0
  %2946 = vmatpush1.xpose.msra.mxu0 0.0
  %2947 = vmatprep.subr.mxu0 0.0
  %2948 = vmatpush1.xpose.msra.mxu0 0.0
  %2949 = vmatprep.subr.mxu0 0.0
  %2950 = vmatpush1.xpose.msra.mxu0 0.0
  %2951 = vmatprep.subr.mxu0 0.0
  %2952 = vmatpush1.xpose.msra.mxu0 0.0
  %2953 = vmatprep.subr.mxu0 0.0
  %2954 = vmatpush1.xpose.msra.mxu0 0.0
  %2955 = vmatprep.subr.mxu0 0.0
  %2956 = vmatpush1.xpose.msra.mxu0 0.0
  %2957 = vmatprep.subr.mxu0 0.0
  %2958 = vmatpush1.xpose.msra.mxu0 0.0
  %2959 = vmatprep.subr.mxu0 0.0
  %2960 = vmatpush1.xpose.msra.mxu0 0.0
  %2961 = vmatprep.subr.mxu0 0.0
  %2962 = vmatpush1.xpose.msra.mxu0 0.0
  %2963 = vmatprep.subr.mxu0 0.0
  %2964 = vmatpush1.xpose.msra.mxu0 0.0
  %2965 = vmatprep.subr.mxu0 0.0
  %2966 = vmatpush1.xpose.msra.mxu0 0.0
  %2967 = vmatprep.subr.mxu0 0.0
  %2968 = vmatpush1.xpose.msra.mxu0 0.0
  %2969 = vmatprep.subr.mxu0 0.0
  %2970 = vmatpush1.xpose.msra.mxu0 0.0
  %2971 = vmatprep.subr.mxu0 0.0
  %2972 = vmatpush1.xpose.msra.mxu0 0.0
  %2973 = vmatprep.subr.mxu0 0.0
  %2974 = vmatpush1.xpose.msra.mxu0 0.0
  %2975 = vmatprep.subr.mxu0 0.0
  %2976 = vmatpush1.xpose.msra.mxu0 0.0
  %2977 = vmatprep.subr.mxu0 0.0
  %2978 = vmatpush1.xpose.msra.mxu0 0.0
  %2979 = vmatprep.subr.mxu0 0.0
  %2980 = vmatpush1.xpose.msra.mxu0 0.0
  %2981 = vmatprep.subr.mxu0 0.0
  %2982 = vmatpush1.xpose.msra.mxu0 0.0
  %2983 = vmatprep.subr.mxu0 0.0
  %2984 = vmatpush1.xpose.msra.mxu0 0.0
  %2985 = vmatprep.subr.mxu0 0.0
  %2986 = vmatpush1.xpose.msra.mxu0 0.0
  %2987 = vmatprep.subr.mxu0 0.0
  %2988 = vmatpush1.xpose.msra.mxu0 0.0
  %2989 = vmatprep.subr.mxu0 0.0
  %2990 = vmatpush1.xpose.msra.mxu0 0.0
  %2991 = vmatprep.subr.mxu0 0.0
  %2992 = vmatpush1.xpose.msra.mxu0 0.0
  %2993 = vmatprep.subr.mxu0 0.0
  %2994 = vmatpush1.xpose.msra.mxu0 0.0
  %2995 = vmatprep.subr.mxu0 0.0
  %2996 = vmatpush1.xpose.msra.mxu0 0.0
  %2997 = vmatprep.subr.mxu0 0.0
  %2998 = vmatpush1.xpose.msra.mxu0 0.0
  %2999 = vmatprep.mubr.f32.mxu0 0.0
  %3000 = vmatmul.mubr.f32.gmra.mrb[0].mxu0 %v2931
  %v3001 = vpop.f32.mrb[0].mxu0
  %v3002 = vadd.f32 0.0, %v3001
  %v3003 = vpop.f32.mrb[0].mxu0
  %3004 = vdwg.mxu0
  %v3005 = vsel %vm467, %v2924, -inf
  %3006 = vmax.xlane.f32.xlu0 %v3005
  %v3007 = vpop.xlane.xlu0 %3006
  %v3008 = vsel %vm467, %v3002, -inf
  %3009 = vmax.xlane.f32.xlu0 %v3008
  %v3010 = vpop.xlane.xlu0 %3009
  %v3011 = vsub.f32 %v2924, %v3007
  %v3012 = vsub.f32 %v3002, %v3010
  %v3013 = vmul.f32 %v3011, 1.442695
  %v3014 = vpow.pop %v3013
  %v3015 = vmul.f32 %v3012, 1.442695
  %v3016 = vpow.pop %v3015
  %v3017 = vsel %vm467, %v3014, 0.0
  %3018 = vadd.xlane.f32.xlu0 %v3017
  %v3019 = vpop.xlane.xlu0 %3018
  %v3020 = vsel %vm467, %v3016, 0.0
  %3021 = vadd.xlane.f32.xlu0 %v3020
  %v3022 = vpop.xlane.xlu0 %3021
  %v3023 = vrcp.pop %v3019
  %v3024 = vrcp.pop %v3022
  %v3025 = vmul.f32 %v3014, %v3023
  %v3026 = vmul.f32 %v3016, %v3024
  %3027 = vrot.lane.b32.xlu0 %v2513, 56
  %v3028 = vpop.permute.xlu0 %3027
  %v3031 = vsel %vm467, %v3025, 0
  %3033 = vmatprep.subr.mxu0 0.0
  %3034 = vmatpush1.msra.mxu0 %v3028
  %3035 = vmatprep.subr.mxu0 0.0
  %3036 = vmatpush1.msra.mxu0 0.0
  %3037 = vmatprep.subr.mxu0 0.0
  %3038 = vmatpush1.msra.mxu0 0.0
  %3039 = vmatprep.subr.mxu0 0.0
  %3040 = vmatpush1.msra.mxu0 0.0
  %3041 = vmatprep.subr.mxu0 0.0
  %3042 = vmatpush1.msra.mxu0 0.0
  %3043 = vmatprep.subr.mxu0 0.0
  %3044 = vmatpush1.msra.mxu0 0.0
  %3045 = vmatprep.subr.mxu0 0.0
  %3046 = vmatpush1.msra.mxu0 0.0
  %3047 = vmatprep.subr.mxu0 0.0
  %3048 = vmatpush1.msra.mxu0 0.0
  %3049 = vmatprep.subr.mxu0 0.0
  %3050 = vmatpush1.msra.mxu0 0.0
  %3051 = vmatprep.subr.mxu0 0.0
  %3052 = vmatpush1.msra.mxu0 0.0
  %3053 = vmatprep.subr.mxu0 0.0
  %3054 = vmatpush1.msra.mxu0 0.0
  %3055 = vmatprep.subr.mxu0 0.0
  %3056 = vmatpush1.msra.mxu0 0.0
  %3057 = vmatprep.subr.mxu0 0.0
  %3058 = vmatpush1.msra.mxu0 0.0
  %3059 = vmatprep.subr.mxu0 0.0
  %3060 = vmatpush1.msra.mxu0 0.0
  %3061 = vmatprep.subr.mxu0 0.0
  %3062 = vmatpush1.msra.mxu0 0.0
  %3063 = vmatprep.subr.mxu0 0.0
  %3064 = vmatpush1.msra.mxu0 0.0
  %3065 = vmatprep.subr.mxu0 0.0
  %3066 = vmatpush1.msra.mxu0 0.0
  %3067 = vmatprep.subr.mxu0 0.0
  %3068 = vmatpush1.msra.mxu0 0.0
  %3069 = vmatprep.subr.mxu0 0.0
  %3070 = vmatpush1.msra.mxu0 0.0
  %3071 = vmatprep.subr.mxu0 0.0
  %3072 = vmatpush1.msra.mxu0 0.0
  %3073 = vmatprep.subr.mxu0 0.0
  %3074 = vmatpush1.msra.mxu0 0.0
  %3075 = vmatprep.subr.mxu0 0.0
  %3076 = vmatpush1.msra.mxu0 0.0
  %3077 = vmatprep.subr.mxu0 0.0
  %3078 = vmatpush1.msra.mxu0 0.0
  %3079 = vmatprep.subr.mxu0 0.0
  %3080 = vmatpush1.msra.mxu0 0.0
  %3081 = vmatprep.subr.mxu0 0.0
  %3082 = vmatpush1.msra.mxu0 0.0
  %3083 = vmatprep.subr.mxu0 0.0
  %3084 = vmatpush1.msra.mxu0 0.0
  %3085 = vmatprep.subr.mxu0 0.0
  %3086 = vmatpush1.msra.mxu0 0.0
  %3087 = vmatprep.subr.mxu0 0.0
  %3088 = vmatpush1.msra.mxu0 0.0
  %3089 = vmatprep.subr.mxu0 0.0
  %3090 = vmatpush1.msra.mxu0 0.0
  %3091 = vmatprep.subr.mxu0 0.0
  %3092 = vmatpush1.msra.mxu0 0.0
  %3093 = vmatprep.subr.mxu0 0.0
  %3094 = vmatpush1.msra.mxu0 0.0
  %3095 = vmatprep.subr.mxu0 0.0
  %3096 = vmatpush1.msra.mxu0 0.0
  %3097 = vmatprep.mubr.f32.mxu0 0.0
  %3098 = vmatmul.mubr.f32.gmra.mrb[0].mxu0 %v3031
  %v3099 = vpop.f32.mrb[0].mxu0
  %v3100 = vadd.f32 0.0, %v3099
  %v3101 = vpop.f32.mrb[0].mxu0
  %3102 = vdwg.mxu0
  %3103 = vrot.lane.b32.xlu0 %v2514, 56
  %v3104 = vpop.permute.xlu0 %3103
  %v3107 = vsel %vm467, %v3026, 0
  %3109 = vmatprep.subr.mxu0 0.0
  %3110 = vmatpush1.msra.mxu0 %v3104
  %3111 = vmatprep.subr.mxu0 0.0
  %3112 = vmatpush1.msra.mxu0 0.0
  %3113 = vmatprep.subr.mxu0 0.0
  %3114 = vmatpush1.msra.mxu0 0.0
  %3115 = vmatprep.subr.mxu0 0.0
  %3116 = vmatpush1.msra.mxu0 0.0
  %3117 = vmatprep.subr.mxu0 0.0
  %3118 = vmatpush1.msra.mxu0 0.0
  %3119 = vmatprep.subr.mxu0 0.0
  %3120 = vmatpush1.msra.mxu0 0.0
  %3121 = vmatprep.subr.mxu0 0.0
  %3122 = vmatpush1.msra.mxu0 0.0
  %3123 = vmatprep.subr.mxu0 0.0
  %3124 = vmatpush1.msra.mxu0 0.0
  %3125 = vmatprep.subr.mxu0 0.0
  %3126 = vmatpush1.msra.mxu0 0.0
  %3127 = vmatprep.subr.mxu0 0.0
  %3128 = vmatpush1.msra.mxu0 0.0
  %3129 = vmatprep.subr.mxu0 0.0
  %3130 = vmatpush1.msra.mxu0 0.0
  %3131 = vmatprep.subr.mxu0 0.0
  %3132 = vmatpush1.msra.mxu0 0.0
  %3133 = vmatprep.subr.mxu0 0.0
  %3134 = vmatpush1.msra.mxu0 0.0
  %3135 = vmatprep.subr.mxu0 0.0
  %3136 = vmatpush1.msra.mxu0 0.0
  %3137 = vmatprep.subr.mxu0 0.0
  %3138 = vmatpush1.msra.mxu0 0.0
  %3139 = vmatprep.subr.mxu0 0.0
  %3140 = vmatpush1.msra.mxu0 0.0
  %3141 = vmatprep.subr.mxu0 0.0
  %3142 = vmatpush1.msra.mxu0 0.0
  %3143 = vmatprep.subr.mxu0 0.0
  %3144 = vmatpush1.msra.mxu0 0.0
  %3145 = vmatprep.subr.mxu0 0.0
  %3146 = vmatpush1.msra.mxu0 0.0
  %3147 = vmatprep.subr.mxu0 0.0
  %3148 = vmatpush1.msra.mxu0 0.0
  %3149 = vmatprep.subr.mxu0 0.0
  %3150 = vmatpush1.msra.mxu0 0.0
  %3151 = vmatprep.subr.mxu0 0.0
  %3152 = vmatpush1.msra.mxu0 0.0
  %3153 = vmatprep.subr.mxu0 0.0
  %3154 = vmatpush1.msra.mxu0 0.0
  %3155 = vmatprep.subr.mxu0 0.0
  %3156 = vmatpush1.msra.mxu0 0.0
  %3157 = vmatprep.subr.mxu0 0.0
  %3158 = vmatpush1.msra.mxu0 0.0
  %3159 = vmatprep.subr.mxu0 0.0
  %3160 = vmatpush1.msra.mxu0 0.0
  %3161 = vmatprep.subr.mxu0 0.0
  %3162 = vmatpush1.msra.mxu0 0.0
  %3163 = vmatprep.subr.mxu0 0.0
  %3164 = vmatpush1.msra.mxu0 0.0
  %3165 = vmatprep.subr.mxu0 0.0
  %3166 = vmatpush1.msra.mxu0 0.0
  %3167 = vmatprep.subr.mxu0 0.0
  %3168 = vmatpush1.msra.mxu0 0.0
  %3169 = vmatprep.subr.mxu0 0.0
  %3170 = vmatpush1.msra.mxu0 0.0
  %3171 = vmatprep.subr.mxu0 0.0
  %3172 = vmatpush1.msra.mxu0 0.0
  %3173 = vmatprep.mubr.f32.mxu0 0.0
  %3174 = vmatmul.mubr.f32.gmra.mrb[0].mxu0 %v3107
  %v3175 = vpop.f32.mrb[0].mxu0
  %v3176 = vadd.f32 0.0, %v3175
  %v3177 = vpop.f32.mrb[0].mxu0
  %3178 = vdwg.mxu0
  %v3179 = vld [vmem:[%s2847 + $0x8] sm:$0xff]
  %v3181 = vsel %vm467, %v3100, 0
  %v3184 = vsel %vm467, %v3176, 0
  %3186 = vmatprep.subr.mxu0 0.0
  %3187 = vmatpush1.msra.mxu0 %v3179
  %3188 = vmatprep.subr.mxu0 0.0
  %3189 = vmatpush1.msra.mxu0 0.0
  %3190 = vmatprep.subr.mxu0 0.0
  %3191 = vmatpush1.msra.mxu0 0.0
  %3192 = vmatprep.subr.mxu0 0.0
  %3193 = vmatpush1.msra.mxu0 0.0
  %3194 = vmatprep.subr.mxu0 0.0
  %3195 = vmatpush1.msra.mxu0 0.0
  %3196 = vmatprep.subr.mxu0 0.0
  %3197 = vmatpush1.msra.mxu0 0.0
  %3198 = vmatprep.subr.mxu0 0.0
  %3199 = vmatpush1.msra.mxu0 0.0
  %3200 = vmatprep.subr.mxu0 0.0
  %3201 = vmatpush1.msra.mxu0 0.0
  %3202 = vmatprep.subr.mxu0 0.0
  %3203 = vmatpush1.msra.mxu0 0.0
  %3204 = vmatprep.subr.mxu0 0.0
  %3205 = vmatpush1.msra.mxu0 0.0
  %3206 = vmatprep.subr.mxu0 0.0
  %3207 = vmatpush1.msra.mxu0 0.0
  %3208 = vmatprep.subr.mxu0 0.0
  %3209 = vmatpush1.msra.mxu0 0.0
  %3210 = vmatprep.subr.mxu0 0.0
  %3211 = vmatpush1.msra.mxu0 0.0
  %3212 = vmatprep.subr.mxu0 0.0
  %3213 = vmatpush1.msra.mxu0 0.0
  %3214 = vmatprep.subr.mxu0 0.0
  %3215 = vmatpush1.msra.mxu0 0.0
  %3216 = vmatprep.subr.mxu0 0.0
  %3217 = vmatpush1.msra.mxu0 0.0
  %3218 = vmatprep.subr.mxu0 0.0
  %3219 = vmatpush1.msra.mxu0 0.0
  %3220 = vmatprep.subr.mxu0 0.0
  %3221 = vmatpush1.msra.mxu0 0.0
  %3222 = vmatprep.subr.mxu0 0.0
  %3223 = vmatpush1.msra.mxu0 0.0
  %3224 = vmatprep.subr.mxu0 0.0
  %3225 = vmatpush1.msra.mxu0 0.0
  %3226 = vmatprep.subr.mxu0 0.0
  %3227 = vmatpush1.msra.mxu0 0.0
  %3228 = vmatprep.subr.mxu0 0.0
  %3229 = vmatpush1.msra.mxu0 0.0
  %3230 = vmatprep.subr.mxu0 0.0
  %3231 = vmatpush1.msra.mxu0 0.0
  %3232 = vmatprep.subr.mxu0 0.0
  %3233 = vmatpush1.msra.mxu0 0.0
  %3234 = vmatprep.subr.mxu0 0.0
  %3235 = vmatpush1.msra.mxu0 0.0
  %3236 = vmatprep.subr.mxu0 0.0
  %3237 = vmatpush1.msra.mxu0 0.0
  %3238 = vmatprep.subr.mxu0 0.0
  %3239 = vmatpush1.msra.mxu0 0.0
  %3240 = vmatprep.subr.mxu0 0.0
  %3241 = vmatpush1.msra.mxu0 0.0
  %3242 = vmatprep.subr.mxu0 0.0
  %3243 = vmatpush1.msra.mxu0 0.0
  %3244 = vmatprep.subr.mxu0 0.0
  %3245 = vmatpush1.msra.mxu0 0.0
  %3246 = vmatprep.subr.mxu0 0.0
  %3247 = vmatpush1.msra.mxu0 0.0
  %3248 = vmatprep.subr.mxu0 0.0
  %3249 = vmatpush1.msra.mxu0 0.0
  %3250 = vmatprep.mubr.f32.mxu0 0.0
  %3251 = vmatmul.mubr.f32.gmra.mrb[0].mxu0 %v3181
  %v3252 = vpop.f32.mrb[0].mxu0
  %v3253 = vadd.f32 0.0, %v3252
  %v3254 = vpop.f32.mrb[0].mxu0
  %3255 = vmatprep.mubr.f32.mxu0 0.0
  %3256 = vmatmul.mubr.f32.gmra.mrb[0].mxu0 %v3184
  %v3257 = vpop.f32.mrb[0].mxu0
  %v3258 = vadd.f32 0.0, %v3257
  %v3259 = vpop.f32.mrb[0].mxu0
  %3260 = vdwg.mxu0
  %v3262 = vsel %vm467, %v2767, 0
  %v3265 = vsel %vm467, %v2844, 0
  %3267 = vmatprep.subr.mxu0 0.0
  %3268 = vmatpush1.msra.mxu0 %v2848
  %3269 = vmatprep.subr.mxu0 0.0
  %3270 = vmatpush1.msra.mxu0 0.0
  %3271 = vmatprep.subr.mxu0 0.0
  %3272 = vmatpush1.msra.mxu0 0.0
  %3273 = vmatprep.subr.mxu0 0.0
  %3274 = vmatpush1.msra.mxu0 0.0
  %3275 = vmatprep.subr.mxu0 0.0
  %3276 = vmatpush1.msra.mxu0 0.0
  %3277 = vmatprep.subr.mxu0 0.0
  %3278 = vmatpush1.msra.mxu0 0.0
  %3279 = vmatprep.subr.mxu0 0.0
  %3280 = vmatpush1.msra.mxu0 0.0
  %3281 = vmatprep.subr.mxu0 0.0
  %3282 = vmatpush1.msra.mxu0 0.0
  %3283 = vmatprep.subr.mxu0 0.0
  %3284 = vmatpush1.msra.mxu0 0.0
  %3285 = vmatprep.subr.mxu0 0.0
  %3286 = vmatpush1.msra.mxu0 0.0
  %3287 = vmatprep.subr.mxu0 0.0
  %3288 = vmatpush1.msra.mxu0 0.0
  %3289 = vmatprep.subr.mxu0 0.0
  %3290 = vmatpush1.msra.mxu0 0.0
  %3291 = vmatprep.subr.mxu0 0.0
  %3292 = vmatpush1.msra.mxu0 0.0
  %3293 = vmatprep.subr.mxu0 0.0
  %3294 = vmatpush1.msra.mxu0 0.0
  %3295 = vmatprep.subr.mxu0 0.0
  %3296 = vmatpush1.msra.mxu0 0.0
  %3297 = vmatprep.subr.mxu0 0.0
  %3298 = vmatpush1.msra.mxu0 0.0
  %3299 = vmatprep.subr.mxu0 0.0
  %3300 = vmatpush1.msra.mxu0 0.0
  %3301 = vmatprep.subr.mxu0 0.0
  %3302 = vmatpush1.msra.mxu0 0.0
  %3303 = vmatprep.subr.mxu0 0.0
  %3304 = vmatpush1.msra.mxu0 0.0
  %3305 = vmatprep.subr.mxu0 0.0
  %3306 = vmatpush1.msra.mxu0 0.0
  %3307 = vmatprep.subr.mxu0 0.0
  %3308 = vmatpush1.msra.mxu0 0.0
  %3309 = vmatprep.subr.mxu0 0.0
  %3310 = vmatpush1.msra.mxu0 0.0
  %3311 = vmatprep.subr.mxu0 0.0
  %3312 = vmatpush1.msra.mxu0 0.0
  %3313 = vmatprep.subr.mxu0 0.0
  %3314 = vmatpush1.msra.mxu0 0.0
  %3315 = vmatprep.subr.mxu0 0.0
  %3316 = vmatpush1.msra.mxu0 0.0
  %3317 = vmatprep.subr.mxu0 0.0
  %3318 = vmatpush1.msra.mxu0 0.0
  %3319 = vmatprep.subr.mxu0 0.0
  %3320 = vmatpush1.msra.mxu0 0.0
  %3321 = vmatprep.subr.mxu0 0.0
  %3322 = vmatpush1.msra.mxu0 0.0
  %3323 = vmatprep.subr.mxu0 0.0
  %3324 = vmatpush1.msra.mxu0 0.0
  %3325 = vmatprep.subr.mxu0 0.0
  %3326 = vmatpush1.msra.mxu0 0.0
  %3327 = vmatprep.subr.mxu0 0.0
  %3328 = vmatpush1.msra.mxu0 0.0
  %3329 = vmatprep.subr.mxu0 0.0
  %3330 = vmatpush1.msra.mxu0 0.0
  %3331 = vmatprep.mubr.f32.mxu0 0.0
  %3332 = vmatmul.mubr.f32.gmra.mrb[0].mxu0 %v3262
  %v3333 = vpop.f32.mrb[0].mxu0
  %v3334 = vadd.f32 %v3253, %v3333
  %v3335 = vpop.f32.mrb[0].mxu0
  %3336 = vmatprep.mubr.f32.mxu0 0.0
  %3337 = vmatmul.mubr.f32.gmra.mrb[0].mxu0 %v3265
  %v3338 = vpop.f32.mrb[0].mxu0
  %v3339 = vadd.f32 %v3258, %v3338
  %v3340 = vpop.f32.mrb[0].mxu0
  %3341 = vdwg.mxu0
  %3342 = vrot.lane.b32.xlu0 %v2491, 112
  %v3343 = vpop.permute.xlu0 %3342
  %3344 = vrot.lane.b32.xlu0 %v2502, 80
  %v3345 = vpop.permute.xlu0 %3344
  %v3346 = vsel %vm467, %v3343, 0
  %v3348 = vsel %vm467, %v3345, 0
  %3350 = vmatprep.subr.mxu0 0.0
  %3351 = vmatpush1.xpose.msra.mxu0 %v3348
  %3352 = vmatprep.subr.mxu0 0.0
  %3353 = vmatpush1.xpose.msra.mxu0 0.0
  %3354 = vmatprep.subr.mxu0 0.0
  %3355 = vmatpush1.xpose.msra.mxu0 0.0
  %3356 = vmatprep.subr.mxu0 0.0
  %3357 = vmatpush1.xpose.msra.mxu0 0.0
  %3358 = vmatprep.subr.mxu0 0.0
  %3359 = vmatpush1.xpose.msra.mxu0 0.0
  %3360 = vmatprep.subr.mxu0 0.0
  %3361 = vmatpush1.xpose.msra.mxu0 0.0
  %3362 = vmatprep.subr.mxu0 0.0
  %3363 = vmatpush1.xpose.msra.mxu0 0.0
  %3364 = vmatprep.subr.mxu0 0.0
  %3365 = vmatpush1.xpose.msra.mxu0 0.0
  %3366 = vmatprep.subr.mxu0 0.0
  %3367 = vmatpush1.xpose.msra.mxu0 0.0
  %3368 = vmatprep.subr.mxu0 0.0
  %3369 = vmatpush1.xpose.msra.mxu0 0.0
  %3370 = vmatprep.subr.mxu0 0.0
  %3371 = vmatpush1.xpose.msra.mxu0 0.0
  %3372 = vmatprep.subr.mxu0 0.0
  %3373 = vmatpush1.xpose.msra.mxu0 0.0
  %3374 = vmatprep.subr.mxu0 0.0
  %3375 = vmatpush1.xpose.msra.mxu0 0.0
  %3376 = vmatprep.subr.mxu0 0.0
  %3377 = vmatpush1.xpose.msra.mxu0 0.0
  %3378 = vmatprep.subr.mxu0 0.0
  %3379 = vmatpush1.xpose.msra.mxu0 0.0
  %3380 = vmatprep.subr.mxu0 0.0
  %3381 = vmatpush1.xpose.msra.mxu0 0.0
  %3382 = vmatprep.subr.mxu0 0.0
  %3383 = vmatpush1.xpose.msra.mxu0 0.0
  %3384 = vmatprep.subr.mxu0 0.0
  %3385 = vmatpush1.xpose.msra.mxu0 0.0
  %3386 = vmatprep.subr.mxu0 0.0
  %3387 = vmatpush1.xpose.msra.mxu0 0.0
  %3388 = vmatprep.subr.mxu0 0.0
  %3389 = vmatpush1.xpose.msra.mxu0 0.0
  %3390 = vmatprep.subr.mxu0 0.0
  %3391 = vmatpush1.xpose.msra.mxu0 0.0
  %3392 = vmatprep.subr.mxu0 0.0
  %3393 = vmatpush1.xpose.msra.mxu0 0.0
  %3394 = vmatprep.subr.mxu0 0.0
  %3395 = vmatpush1.xpose.msra.mxu0 0.0
  %3396 = vmatprep.subr.mxu0 0.0
  %3397 = vmatpush1.xpose.msra.mxu0 0.0
  %3398 = vmatprep.subr.mxu0 0.0
  %3399 = vmatpush1.xpose.msra.mxu0 0.0
  %3400 = vmatprep.subr.mxu0 0.0
  %3401 = vmatpush1.xpose.msra.mxu0 0.0
  %3402 = vmatprep.subr.mxu0 0.0
  %3403 = vmatpush1.xpose.msra.mxu0 0.0
  %3404 = vmatprep.subr.mxu0 0.0
  %3405 = vmatpush1.xpose.msra.mxu0 0.0
  %3406 = vmatprep.subr.mxu0 0.0
  %3407 = vmatpush1.xpose.msra.mxu0 0.0
  %3408 = vmatprep.subr.mxu0 0.0
  %3409 = vmatpush1.xpose.msra.mxu0 0.0
  %3410 = vmatprep.subr.mxu0 0.0
  %3411 = vmatpush1.xpose.msra.mxu0 0.0
  %3412 = vmatprep.subr.mxu0 0.0
  %3413 = vmatpush1.xpose.msra.mxu0 0.0
  %3414 = vmatprep.mubr.f32.mxu0 0.0
  %3415 = vmatmul.mubr.f32.gmra.mrb[0].mxu0 %v3346
  %v3416 = vpop.f32.mrb[0].mxu0
  %v3417 = vadd.f32 0.0, %v3416
  %v3418 = vpop.f32.mrb[0].mxu0
  %3419 = vdwg.mxu0
  %3420 = vrot.lane.b32.xlu0 %v2492, 112
  %v3421 = vpop.permute.xlu0 %3420
  %3422 = vrot.lane.b32.xlu0 %v2503, 80
  %v3423 = vpop.permute.xlu0 %3422
  %v3424 = vsel %vm467, %v3421, 0
  %v3426 = vsel %vm467, %v3423, 0
  %3428 = vmatprep.subr.mxu0 0.0
  %3429 = vmatpush1.xpose.msra.mxu0 %v3426
  %3430 = vmatprep.subr.mxu0 0.0
  %3431 = vmatpush1.xpose.msra.mxu0 0.0
  %3432 = vmatprep.subr.mxu0 0.0
  %3433 = vmatpush1.xpose.msra.mxu0 0.0
  %3434 = vmatprep.subr.mxu0 0.0
  %3435 = vmatpush1.xpose.msra.mxu0 0.0
  %3436 = vmatprep.subr.mxu0 0.0
  %3437 = vmatpush1.xpose.msra.mxu0 0.0
  %3438 = vmatprep.subr.mxu0 0.0
  %3439 = vmatpush1.xpose.msra.mxu0 0.0
  %3440 = vmatprep.subr.mxu0 0.0
  %3441 = vmatpush1.xpose.msra.mxu0 0.0
  %3442 = vmatprep.subr.mxu0 0.0
  %3443 = vmatpush1.xpose.msra.mxu0 0.0
  %3444 = vmatprep.subr.mxu0 0.0
  %3445 = vmatpush1.xpose.msra.mxu0 0.0
  %3446 = vmatprep.subr.mxu0 0.0
  %3447 = vmatpush1.xpose.msra.mxu0 0.0
  %3448 = vmatprep.subr.mxu0 0.0
  %3449 = vmatpush1.xpose.msra.mxu0 0.0
  %3450 = vmatprep.subr.mxu0 0.0
  %3451 = vmatpush1.xpose.msra.mxu0 0.0
  %3452 = vmatprep.subr.mxu0 0.0
  %3453 = vmatpush1.xpose.msra.mxu0 0.0
  %3454 = vmatprep.subr.mxu0 0.0
  %3455 = vmatpush1.xpose.msra.mxu0 0.0
  %3456 = vmatprep.subr.mxu0 0.0
  %3457 = vmatpush1.xpose.msra.mxu0 0.0
  %3458 = vmatprep.subr.mxu0 0.0
  %3459 = vmatpush1.xpose.msra.mxu0 0.0
  %3460 = vmatprep.subr.mxu0 0.0
  %3461 = vmatpush1.xpose.msra.mxu0 0.0
  %3462 = vmatprep.subr.mxu0 0.0
  %3463 = vmatpush1.xpose.msra.mxu0 0.0
  %3464 = vmatprep.subr.mxu0 0.0
  %3465 = vmatpush1.xpose.msra.mxu0 0.0
  %3466 = vmatprep.subr.mxu0 0.0
  %3467 = vmatpush1.xpose.msra.mxu0 0.0
  %3468 = vmatprep.subr.mxu0 0.0
  %3469 = vmatpush1.xpose.msra.mxu0 0.0
  %3470 = vmatprep.subr.mxu0 0.0
  %3471 = vmatpush1.xpose.msra.mxu0 0.0
  %3472 = vmatprep.subr.mxu0 0.0
  %3473 = vmatpush1.xpose.msra.mxu0 0.0
  %3474 = vmatprep.subr.mxu0 0.0
  %3475 = vmatpush1.xpose.msra.mxu0 0.0
  %3476 = vmatprep.subr.mxu0 0.0
  %3477 = vmatpush1.xpose.msra.mxu0 0.0
  %3478 = vmatprep.subr.mxu0 0.0
  %3479 = vmatpush1.xpose.msra.mxu0 0.0
  %3480 = vmatprep.subr.mxu0 0.0
  %3481 = vmatpush1.xpose.msra.mxu0 0.0
  %3482 = vmatprep.subr.mxu0 0.0
  %3483 = vmatpush1.xpose.msra.mxu0 0.0
  %3484 = vmatprep.subr.mxu0 0.0
  %3485 = vmatpush1.xpose.msra.mxu0 0.0
  %3486 = vmatprep.subr.mxu0 0.0
  %3487 = vmatpush1.xpose.msra.mxu0 0.0
  %3488 = vmatprep.subr.mxu0 0.0
  %3489 = vmatpush1.xpose.msra.mxu0 0.0
  %3490 = vmatprep.subr.mxu0 0.0
  %3491 = vmatpush1.xpose.msra.mxu0 0.0
  %3492 = vmatprep.mubr.f32.mxu0 0.0
  %3493 = vmatmul.mubr.f32.gmra.mrb[0].mxu0 %v3424
  %v3494 = vpop.f32.mrb[0].mxu0
  %v3495 = vadd.f32 0.0, %v3494
  %v3496 = vpop.f32.mrb[0].mxu0
  %3497 = vdwg.mxu0
  %v3498 = vsel %vm467, %v3417, -inf
  %3499 = vmax.xlane.f32.xlu0 %v3498
  %v3500 = vpop.xlane.xlu0 %3499
  %v3501 = vsel %vm467, %v3495, -inf
  %3502 = vmax.xlane.f32.xlu0 %v3501
  %v3503 = vpop.xlane.xlu0 %3502
  %v3504 = vsub.f32 %v3417, %v3500
  %v3505 = vsub.f32 %v3495, %v3503
  %v3506 = vmul.f32 %v3504, 1.442695
  %v3507 = vpow.pop %v3506
  %v3508 = vmul.f32 %v3505, 1.442695
  %v3509 = vpow.pop %v3508
  %v3510 = vsel %vm467, %v3507, 0.0
  %3511 = vadd.xlane.f32.xlu0 %v3510
  %v3512 = vpop.xlane.xlu0 %3511
  %v3513 = vsel %vm467, %v3509, 0.0
  %3514 = vadd.xlane.f32.xlu0 %v3513
  %v3515 = vpop.xlane.xlu0 %3514
  %v3516 = vrcp.pop %v3512
  %v3517 = vrcp.pop %v3515
  %v3518 = vmul.f32 %v3507, %v3516
  %v3519 = vmul.f32 %v3509, %v3517
  %3520 = vrot.lane.b32.xlu0 %v2513, 48
  %v3521 = vpop.permute.xlu0 %3520
  %v3524 = vsel %vm467, %v3518, 0
  %3526 = vmatprep.subr.mxu0 0.0
  %3527 = vmatpush1.msra.mxu0 %v3521
  %3528 = vmatprep.subr.mxu0 0.0
  %3529 = vmatpush1.msra.mxu0 0.0
  %3530 = vmatprep.subr.mxu0 0.0
  %3531 = vmatpush1.msra.mxu0 0.0
  %3532 = vmatprep.subr.mxu0 0.0
  %3533 = vmatpush1.msra.mxu0 0.0
  %3534 = vmatprep.subr.mxu0 0.0
  %3535 = vmatpush1.msra.mxu0 0.0
  %3536 = vmatprep.subr.mxu0 0.0
  %3537 = vmatpush1.msra.mxu0 0.0
  %3538 = vmatprep.subr.mxu0 0.0
  %3539 = vmatpush1.msra.mxu0 0.0
  %3540 = vmatprep.subr.mxu0 0.0
  %3541 = vmatpush1.msra.mxu0 0.0
  %3542 = vmatprep.subr.mxu0 0.0
  %3543 = vmatpush1.msra.mxu0 0.0
  %3544 = vmatprep.subr.mxu0 0.0
  %3545 = vmatpush1.msra.mxu0 0.0
  %3546 = vmatprep.subr.mxu0 0.0
  %3547 = vmatpush1.msra.mxu0 0.0
  %3548 = vmatprep.subr.mxu0 0.0
  %3549 = vmatpush1.msra.mxu0 0.0
  %3550 = vmatprep.subr.mxu0 0.0
  %3551 = vmatpush1.msra.mxu0 0.0
  %3552 = vmatprep.subr.mxu0 0.0
  %3553 = vmatpush1.msra.mxu0 0.0
  %3554 = vmatprep.subr.mxu0 0.0
  %3555 = vmatpush1.msra.mxu0 0.0
  %3556 = vmatprep.subr.mxu0 0.0
  %3557 = vmatpush1.msra.mxu0 0.0
  %3558 = vmatprep.subr.mxu0 0.0
  %3559 = vmatpush1.msra.mxu0 0.0
  %3560 = vmatprep.subr.mxu0 0.0
  %3561 = vmatpush1.msra.mxu0 0.0
  %3562 = vmatprep.subr.mxu0 0.0
  %3563 = vmatpush1.msra.mxu0 0.0
  %3564 = vmatprep.subr.mxu0 0.0
  %3565 = vmatpush1.msra.mxu0 0.0
  %3566 = vmatprep.subr.mxu0 0.0
  %3567 = vmatpush1.msra.mxu0 0.0
  %3568 = vmatprep.subr.mxu0 0.0
  %3569 = vmatpush1.msra.mxu0 0.0
  %3570 = vmatprep.subr.mxu0 0.0
  %3571 = vmatpush1.msra.mxu0 0.0
  %3572 = vmatprep.subr.mxu0 0.0
  %3573 = vmatpush1.msra.mxu0 0.0
  %3574 = vmatprep.subr.mxu0 0.0
  %3575 = vmatpush1.msra.mxu0 0.0
  %3576 = vmatprep.subr.mxu0 0.0
  %3577 = vmatpush1.msra.mxu0 0.0
  %3578 = vmatprep.subr.mxu0 0.0
  %3579 = vmatpush1.msra.mxu0 0.0
  %3580 = vmatprep.subr.mxu0 0.0
  %3581 = vmatpush1.msra.mxu0 0.0
  %3582 = vmatprep.subr.mxu0 0.0
  %3583 = vmatpush1.msra.mxu0 0.0
  %3584 = vmatprep.subr.mxu0 0.0
  %3585 = vmatpush1.msra.mxu0 0.0
  %3586 = vmatprep.subr.mxu0 0.0
  %3587 = vmatpush1.msra.mxu0 0.0
  %3588 = vmatprep.subr.mxu0 0.0
  %3589 = vmatpush1.msra.mxu0 0.0
  %3590 = vmatprep.mubr.f32.mxu0 0.0
  %3591 = vmatmul.mubr.f32.gmra.mrb[0].mxu0 %v3524
  %v3592 = vpop.f32.mrb[0].mxu0
  %v3593 = vadd.f32 0.0, %v3592
  %v3594 = vpop.f32.mrb[0].mxu0
  %3595 = vdwg.mxu0
  %3596 = vrot.lane.b32.xlu0 %v2514, 48
  %v3597 = vpop.permute.xlu0 %3596
  %v3600 = vsel %vm467, %v3519, 0
  %3602 = vmatprep.subr.mxu0 0.0
  %3603 = vmatpush1.msra.mxu0 %v3597
  %3604 = vmatprep.subr.mxu0 0.0
  %3605 = vmatpush1.msra.mxu0 0.0
  %3606 = vmatprep.subr.mxu0 0.0
  %3607 = vmatpush1.msra.mxu0 0.0
  %3608 = vmatprep.subr.mxu0 0.0
  %3609 = vmatpush1.msra.mxu0 0.0
  %3610 = vmatprep.subr.mxu0 0.0
  %3611 = vmatpush1.msra.mxu0 0.0
  %3612 = vmatprep.subr.mxu0 0.0
  %3613 = vmatpush1.msra.mxu0 0.0
  %3614 = vmatprep.subr.mxu0 0.0
  %3615 = vmatpush1.msra.mxu0 0.0
  %3616 = vmatprep.subr.mxu0 0.0
  %3617 = vmatpush1.msra.mxu0 0.0
  %3618 = vmatprep.subr.mxu0 0.0
  %3619 = vmatpush1.msra.mxu0 0.0
  %3620 = vmatprep.subr.mxu0 0.0
  %3621 = vmatpush1.msra.mxu0 0.0
  %3622 = vmatprep.subr.mxu0 0.0
  %3623 = vmatpush1.msra.mxu0 0.0
  %3624 = vmatprep.subr.mxu0 0.0
  %3625 = vmatpush1.msra.mxu0 0.0
  %3626 = vmatprep.subr.mxu0 0.0
  %3627 = vmatpush1.msra.mxu0 0.0
  %3628 = vmatprep.subr.mxu0 0.0
  %3629 = vmatpush1.msra.mxu0 0.0
  %3630 = vmatprep.subr.mxu0 0.0
  %3631 = vmatpush1.msra.mxu0 0.0
  %3632 = vmatprep.subr.mxu0 0.0
  %3633 = vmatpush1.msra.mxu0 0.0
  %3634 = vmatprep.subr.mxu0 0.0
  %3635 = vmatpush1.msra.mxu0 0.0
  %3636 = vmatprep.subr.mxu0 0.0
  %3637 = vmatpush1.msra.mxu0 0.0
  %3638 = vmatprep.subr.mxu0 0.0
  %3639 = vmatpush1.msra.mxu0 0.0
  %3640 = vmatprep.subr.mxu0 0.0
  %3641 = vmatpush1.msra.mxu0 0.0
  %3642 = vmatprep.subr.mxu0 0.0
  %3643 = vmatpush1.msra.mxu0 0.0
  %3644 = vmatprep.subr.mxu0 0.0
  %3645 = vmatpush1.msra.mxu0 0.0
  %3646 = vmatprep.subr.mxu0 0.0
  %3647 = vmatpush1.msra.mxu0 0.0
  %3648 = vmatprep.subr.mxu0 0.0
  %3649 = vmatpush1.msra.mxu0 0.0
  %3650 = vmatprep.subr.mxu0 0.0
  %3651 = vmatpush1.msra.mxu0 0.0
  %3652 = vmatprep.subr.mxu0 0.0
  %3653 = vmatpush1.msra.mxu0 0.0
  %3654 = vmatprep.subr.mxu0 0.0
  %3655 = vmatpush1.msra.mxu0 0.0
  %3656 = vmatprep.subr.mxu0 0.0
  %3657 = vmatpush1.msra.mxu0 0.0
  %3658 = vmatprep.subr.mxu0 0.0
  %3659 = vmatpush1.msra.mxu0 0.0
  %3660 = vmatprep.subr.mxu0 0.0
  %3661 = vmatpush1.msra.mxu0 0.0
  %3662 = vmatprep.subr.mxu0 0.0
  %3663 = vmatpush1.msra.mxu0 0.0
  %3664 = vmatprep.subr.mxu0 0.0
  %3665 = vmatpush1.msra.mxu0 0.0
  %3666 = vmatprep.mubr.f32.mxu0 0.0
  %3667 = vmatmul.mubr.f32.gmra.mrb[0].mxu0 %v3600
  %v3668 = vpop.f32.mrb[0].mxu0
  %v3669 = vadd.f32 0.0, %v3668
  %v3670 = vpop.f32.mrb[0].mxu0
  %3671 = vdwg.mxu0
  %v3672 = vld [vmem:[%s2847 + $0x10] sm:$0xff]
  %v3674 = vsel %vm467, %v3593, 0
  %v3677 = vsel %vm467, %v3669, 0
  %3679 = vmatprep.subr.mxu0 0.0
  %3680 = vmatpush1.msra.mxu0 %v3672
  %3681 = vmatprep.subr.mxu0 0.0
  %3682 = vmatpush1.msra.mxu0 0.0
  %3683 = vmatprep.subr.mxu0 0.0
  %3684 = vmatpush1.msra.mxu0 0.0
  %3685 = vmatprep.subr.mxu0 0.0
  %3686 = vmatpush1.msra.mxu0 0.0
  %3687 = vmatprep.subr.mxu0 0.0
  %3688 = vmatpush1.msra.mxu0 0.0
  %3689 = vmatprep.subr.mxu0 0.0
  %3690 = vmatpush1.msra.mxu0 0.0
  %3691 = vmatprep.subr.mxu0 0.0
  %3692 = vmatpush1.msra.mxu0 0.0
  %3693 = vmatprep.subr.mxu0 0.0
  %3694 = vmatpush1.msra.mxu0 0.0
  %3695 = vmatprep.subr.mxu0 0.0
  %3696 = vmatpush1.msra.mxu0 0.0
  %3697 = vmatprep.subr.mxu0 0.0
  %3698 = vmatpush1.msra.mxu0 0.0
  %3699 = vmatprep.subr.mxu0 0.0
  %3700 = vmatpush1.msra.mxu0 0.0
  %3701 = vmatprep.subr.mxu0 0.0
  %3702 = vmatpush1.msra.mxu0 0.0
  %3703 = vmatprep.subr.mxu0 0.0
  %3704 = vmatpush1.msra.mxu0 0.0
  %3705 = vmatprep.subr.mxu0 0.0
  %3706 = vmatpush1.msra.mxu0 0.0
  %3707 = vmatprep.subr.mxu0 0.0
  %3708 = vmatpush1.msra.mxu0 0.0
  %3709 = vmatprep.subr.mxu0 0.0
  %3710 = vmatpush1.msra.mxu0 0.0
  %3711 = vmatprep.subr.mxu0 0.0
  %3712 = vmatpush1.msra.mxu0 0.0
  %3713 = vmatprep.subr.mxu0 0.0
  %3714 = vmatpush1.msra.mxu0 0.0
  %3715 = vmatprep.subr.mxu0 0.0
  %3716 = vmatpush1.msra.mxu0 0.0
  %3717 = vmatprep.subr.mxu0 0.0
  %3718 = vmatpush1.msra.mxu0 0.0
  %3719 = vmatprep.subr.mxu0 0.0
  %3720 = vmatpush1.msra.mxu0 0.0
  %3721 = vmatprep.subr.mxu0 0.0
  %3722 = vmatpush1.msra.mxu0 0.0
  %3723 = vmatprep.subr.mxu0 0.0
  %3724 = vmatpush1.msra.mxu0 0.0
  %3725 = vmatprep.subr.mxu0 0.0
  %3726 = vmatpush1.msra.mxu0 0.0
  %3727 = vmatprep.subr.mxu0 0.0
  %3728 = vmatpush1.msra.mxu0 0.0
  %3729 = vmatprep.subr.mxu0 0.0
  %3730 = vmatpush1.msra.mxu0 0.0
  %3731 = vmatprep.subr.mxu0 0.0
  %3732 = vmatpush1.msra.mxu0 0.0
  %3733 = vmatprep.subr.mxu0 0.0
  %3734 = vmatpush1.msra.mxu0 0.0
  %3735 = vmatprep.subr.mxu0 0.0
  %3736 = vmatpush1.msra.mxu0 0.0
  %3737 = vmatprep.subr.mxu0 0.0
  %3738 = vmatpush1.msra.mxu0 0.0
  %3739 = vmatprep.subr.mxu0 0.0
  %3740 = vmatpush1.msra.mxu0 0.0
  %3741 = vmatprep.subr.mxu0 0.0
  %3742 = vmatpush1.msra.mxu0 0.0
  %3743 = vmatprep.mubr.f32.mxu0 0.0
  %3744 = vmatmul.mubr.f32.gmra.mrb[0].mxu0 %v3674
  %v3745 = vpop.f32.mrb[0].mxu0
  %v3746 = vadd.f32 0.0, %v3745
  %v3747 = vpop.f32.mrb[0].mxu0
  %3748 = vmatprep.mubr.f32.mxu0 0.0
  %3749 = vmatmul.mubr.f32.gmra.mrb[0].mxu0 %v3677
  %v3750 = vpop.f32.mrb[0].mxu0
  %v3751 = vadd.f32 0.0, %v3750
  %v3752 = vpop.f32.mrb[0].mxu0
  %3753 = vdwg.mxu0
  %v3754 = vadd.f32 %v3334, %v3746
  %v3755 = vadd.f32 %v3339, %v3751
  %3756 = vrot.lane.b32.xlu0 %v2491, 104
  %v3757 = vpop.permute.xlu0 %3756
  %3758 = vrot.lane.b32.xlu0 %v2502, 72
  %v3759 = vpop.permute.xlu0 %3758
  %v3760 = vsel %vm467, %v3757, 0
  %v3762 = vsel %vm467, %v3759, 0
  %3764 = vmatprep.subr.mxu0 0.0
  %3765 = vmatpush1.xpose.msra.mxu0 %v3762
  %3766 = vmatprep.subr.mxu0 0.0
  %3767 = vmatpush1.xpose.msra.mxu0 0.0
  %3768 = vmatprep.subr.mxu0 0.0
  %3769 = vmatpush1.xpose.msra.mxu0 0.0
  %3770 = vmatprep.subr.mxu0 0.0
  %3771 = vmatpush1.xpose.msra.mxu0 0.0
  %3772 = vmatprep.subr.mxu0 0.0
  %3773 = vmatpush1.xpose.msra.mxu0 0.0
  %3774 = vmatprep.subr.mxu0 0.0
  %3775 = vmatpush1.xpose.msra.mxu0 0.0
  %3776 = vmatprep.subr.mxu0 0.0
  %3777 = vmatpush1.xpose.msra.mxu0 0.0
  %3778 = vmatprep.subr.mxu0 0.0
  %3779 = vmatpush1.xpose.msra.mxu0 0.0
  %3780 = vmatprep.subr.mxu0 0.0
  %3781 = vmatpush1.xpose.msra.mxu0 0.0
  %3782 = vmatprep.subr.mxu0 0.0
  %3783 = vmatpush1.xpose.msra.mxu0 0.0
  %3784 = vmatprep.subr.mxu0 0.0
  %3785 = vmatpush1.xpose.msra.mxu0 0.0
  %3786 = vmatprep.subr.mxu0 0.0
  %3787 = vmatpush1.xpose.msra.mxu0 0.0
  %3788 = vmatprep.subr.mxu0 0.0
  %3789 = vmatpush1.xpose.msra.mxu0 0.0
  %3790 = vmatprep.subr.mxu0 0.0
  %3791 = vmatpush1.xpose.msra.mxu0 0.0
  %3792 = vmatprep.subr.mxu0 0.0
  %3793 = vmatpush1.xpose.msra.mxu0 0.0
  %3794 = vmatprep.subr.mxu0 0.0
  %3795 = vmatpush1.xpose.msra.mxu0 0.0
  %3796 = vmatprep.subr.mxu0 0.0
  %3797 = vmatpush1.xpose.msra.mxu0 0.0
  %3798 = vmatprep.subr.mxu0 0.0
  %3799 = vmatpush1.xpose.msra.mxu0 0.0
  %3800 = vmatprep.subr.mxu0 0.0
  %3801 = vmatpush1.xpose.msra.mxu0 0.0
  %3802 = vmatprep.subr.mxu0 0.0
  %3803 = vmatpush1.xpose.msra.mxu0 0.0
  %3804 = vmatprep.subr.mxu0 0.0
  %3805 = vmatpush1.xpose.msra.mxu0 0.0
  %3806 = vmatprep.subr.mxu0 0.0
  %3807 = vmatpush1.xpose.msra.mxu0 0.0
  %3808 = vmatprep.subr.mxu0 0.0
  %3809 = vmatpush1.xpose.msra.mxu0 0.0
  %3810 = vmatprep.subr.mxu0 0.0
  %3811 = vmatpush1.xpose.msra.mxu0 0.0
  %3812 = vmatprep.subr.mxu0 0.0
  %3813 = vmatpush1.xpose.msra.mxu0 0.0
  %3814 = vmatprep.subr.mxu0 0.0
  %3815 = vmatpush1.xpose.msra.mxu0 0.0
  %3816 = vmatprep.subr.mxu0 0.0
  %3817 = vmatpush1.xpose.msra.mxu0 0.0
  %3818 = vmatprep.subr.mxu0 0.0
  %3819 = vmatpush1.xpose.msra.mxu0 0.0
  %3820 = vmatprep.subr.mxu0 0.0
  %3821 = vmatpush1.xpose.msra.mxu0 0.0
  %3822 = vmatprep.subr.mxu0 0.0
  %3823 = vmatpush1.xpose.msra.mxu0 0.0
  %3824 = vmatprep.subr.mxu0 0.0
  %3825 = vmatpush1.xpose.msra.mxu0 0.0
  %3826 = vmatprep.subr.mxu0 0.0
  %3827 = vmatpush1.xpose.msra.mxu0 0.0
  %3828 = vmatprep.mubr.f32.mxu0 0.0
  %3829 = vmatmul.mubr.f32.gmra.mrb[0].mxu0 %v3760
  %v3830 = vpop.f32.mrb[0].mxu0
  %v3831 = vadd.f32 0.0, %v3830
  %v3832 = vpop.f32.mrb[0].mxu0
  %3833 = vdwg.mxu0
  %3834 = vrot.lane.b32.xlu0 %v2492, 104
  %v3835 = vpop.permute.xlu0 %3834
  %3836 = vrot.lane.b32.xlu0 %v2503, 72
  %v3837 = vpop.permute.xlu0 %3836
  %v3838 = vsel %vm467, %v3835, 0
  %v3840 = vsel %vm467, %v3837, 0
  %3842 = vmatprep.subr.mxu0 0.0
  %3843 = vmatpush1.xpose.msra.mxu0 %v3840
  %3844 = vmatprep.subr.mxu0 0.0
  %3845 = vmatpush1.xpose.msra.mxu0 0.0
  %3846 = vmatprep.subr.mxu0 0.0
  %3847 = vmatpush1.xpose.msra.mxu0 0.0
  %3848 = vmatprep.subr.mxu0 0.0
  %3849 = vmatpush1.xpose.msra.mxu0 0.0
  %3850 = vmatprep.subr.mxu0 0.0
  %3851 = vmatpush1.xpose.msra.mxu0 0.0
  %3852 = vmatprep.subr.mxu0 0.0
  %3853 = vmatpush1.xpose.msra.mxu0 0.0
  %3854 = vmatprep.subr.mxu0 0.0
  %3855 = vmatpush1.xpose.msra.mxu0 0.0
  %3856 = vmatprep.subr.mxu0 0.0
  %3857 = vmatpush1.xpose.msra.mxu0 0.0
  %3858 = vmatprep.subr.mxu0 0.0
  %3859 = vmatpush1.xpose.msra.mxu0 0.0
  %3860 = vmatprep.subr.mxu0 0.0
  %3861 = vmatpush1.xpose.msra.mxu0 0.0
  %3862 = vmatprep.subr.mxu0 0.0
  %3863 = vmatpush1.xpose.msra.mxu0 0.0
  %3864 = vmatprep.subr.mxu0 0.0
  %3865 = vmatpush1.xpose.msra.mxu0 0.0
  %3866 = vmatprep.subr.mxu0 0.0
  %3867 = vmatpush1.xpose.msra.mxu0 0.0
  %3868 = vmatprep.subr.mxu0 0.0
  %3869 = vmatpush1.xpose.msra.mxu0 0.0
  %3870 = vmatprep.subr.mxu0 0.0
  %3871 = vmatpush1.xpose.msra.mxu0 0.0
  %3872 = vmatprep.subr.mxu0 0.0
  %3873 = vmatpush1.xpose.msra.mxu0 0.0
  %3874 = vmatprep.subr.mxu0 0.0
  %3875 = vmatpush1.xpose.msra.mxu0 0.0
  %3876 = vmatprep.subr.mxu0 0.0
  %3877 = vmatpush1.xpose.msra.mxu0 0.0
  %3878 = vmatprep.subr.mxu0 0.0
  %3879 = vmatpush1.xpose.msra.mxu0 0.0
  %3880 = vmatprep.subr.mxu0 0.0
  %3881 = vmatpush1.xpose.msra.mxu0 0.0
  %3882 = vmatprep.subr.mxu0 0.0
  %3883 = vmatpush1.xpose.msra.mxu0 0.0
  %3884 = vmatprep.subr.mxu0 0.0
  %3885 = vmatpush1.xpose.msra.mxu0 0.0
  %3886 = vmatprep.subr.mxu0 0.0
  %3887 = vmatpush1.xpose.msra.mxu0 0.0
  %3888 = vmatprep.subr.mxu0 0.0
  %3889 = vmatpush1.xpose.msra.mxu0 0.0
  %3890 = vmatprep.subr.mxu0 0.0
  %3891 = vmatpush1.xpose.msra.mxu0 0.0
  %3892 = vmatprep.subr.mxu0 0.0
  %3893 = vmatpush1.xpose.msra.mxu0 0.0
  %3894 = vmatprep.subr.mxu0 0.0
  %3895 = vmatpush1.xpose.msra.mxu0 0.0
  %3896 = vmatprep.subr.mxu0 0.0
  %3897 = vmatpush1.xpose.msra.mxu0 0.0
  %3898 = vmatprep.subr.mxu0 0.0
  %3899 = vmatpush1.xpose.msra.mxu0 0.0
  %3900 = vmatprep.subr.mxu0 0.0
  %3901 = vmatpush1.xpose.msra.mxu0 0.0
  %3902 = vmatprep.subr.mxu0 0.0
  %3903 = vmatpush1.xpose.msra.mxu0 0.0
  %3904 = vmatprep.subr.mxu0 0.0
  %3905 = vmatpush1.xpose.msra.mxu0 0.0
  %3906 = vmatprep.mubr.f32.mxu0 0.0
  %3907 = vmatmul.mubr.f32.gmra.mrb[0].mxu0 %v3838
  %v3908 = vpop.f32.mrb[0].mxu0
  %v3909 = vadd.f32 0.0, %v3908
  %v3910 = vpop.f32.mrb[0].mxu0
  %3911 = vdwg.mxu0
  %v3912 = vsel %vm467, %v3831, -inf
  %3913 = vmax.xlane.f32.xlu0 %v3912
  %v3914 = vpop.xlane.xlu0 %3913
  %v3915 = vsel %vm467, %v3909, -inf
  %3916 = vmax.xlane.f32.xlu0 %v3915
  %v3917 = vpop.xlane.xlu0 %3916
  %v3918 = vsub.f32 %v3831, %v3914
  %v3919 = vsub.f32 %v3909, %v3917
  %v3920 = vmul.f32 %v3918, 1.442695
  %v3921 = vpow.pop %v3920
  %v3922 = vmul.f32 %v3919, 1.442695
  %v3923 = vpow.pop %v3922
  %v3924 = vsel %vm467, %v3921, 0.0
  %3925 = vadd.xlane.f32.xlu0 %v3924
  %v3926 = vpop.xlane.xlu0 %3925
  %v3927 = vsel %vm467, %v3923, 0.0
  %3928 = vadd.xlane.f32.xlu0 %v3927
  %v3929 = vpop.xlane.xlu0 %3928
  %v3930 = vrcp.pop %v3926
  %v3931 = vrcp.pop %v3929
  %v3932 = vmul.f32 %v3921, %v3930
  %v3933 = vmul.f32 %v3923, %v3931
  %3934 = vrot.lane.b32.xlu0 %v2513, 40
  %v3935 = vpop.permute.xlu0 %3934
  %v3938 = vsel %vm467, %v3932, 0
  %3940 = vmatprep.subr.mxu0 0.0
  %3941 = vmatpush1.msra.mxu0 %v3935
  %3942 = vmatprep.subr.mxu0 0.0
  %3943 = vmatpush1.msra.mxu0 0.0
  %3944 = vmatprep.subr.mxu0 0.0
  %3945 = vmatpush1.msra.mxu0 0.0
  %3946 = vmatprep.subr.mxu0 0.0
  %3947 = vmatpush1.msra.mxu0 0.0
  %3948 = vmatprep.subr.mxu0 0.0
  %3949 = vmatpush1.msra.mxu0 0.0
  %3950 = vmatprep.subr.mxu0 0.0
  %3951 = vmatpush1.msra.mxu0 0.0
  %3952 = vmatprep.subr.mxu0 0.0
  %3953 = vmatpush1.msra.mxu0 0.0
  %3954 = vmatprep.subr.mxu0 0.0
  %3955 = vmatpush1.msra.mxu0 0.0
  %3956 = vmatprep.subr.mxu0 0.0
  %3957 = vmatpush1.msra.mxu0 0.0
  %3958 = vmatprep.subr.mxu0 0.0
  %3959 = vmatpush1.msra.mxu0 0.0
  %3960 = vmatprep.subr.mxu0 0.0
  %3961 = vmatpush1.msra.mxu0 0.0
  %3962 = vmatprep.subr.mxu0 0.0
  %3963 = vmatpush1.msra.mxu0 0.0
  %3964 = vmatprep.subr.mxu0 0.0
  %3965 = vmatpush1.msra.mxu0 0.0
  %3966 = vmatprep.subr.mxu0 0.0
  %3967 = vmatpush1.msra.mxu0 0.0
  %3968 = vmatprep.subr.mxu0 0.0
  %3969 = vmatpush1.msra.mxu0 0.0
  %3970 = vmatprep.subr.mxu0 0.0
  %3971 = vmatpush1.msra.mxu0 0.0
  %3972 = vmatprep.subr.mxu0 0.0
  %3973 = vmatpush1.msra.mxu0 0.0
  %3974 = vmatprep.subr.mxu0 0.0
  %3975 = vmatpush1.msra.mxu0 0.0
  %3976 = vmatprep.subr.mxu0 0.0
  %3977 = vmatpush1.msra.mxu0 0.0
  %3978 = vmatprep.subr.mxu0 0.0
  %3979 = vmatpush1.msra.mxu0 0.0
  %3980 = vmatprep.subr.mxu0 0.0
  %3981 = vmatpush1.msra.mxu0 0.0
  %3982 = vmatprep.subr.mxu0 0.0
  %3983 = vmatpush1.msra.mxu0 0.0
  %3984 = vmatprep.subr.mxu0 0.0
  %3985 = vmatpush1.msra.mxu0 0.0
  %3986 = vmatprep.subr.mxu0 0.0
  %3987 = vmatpush1.msra.mxu0 0.0
  %3988 = vmatprep.subr.mxu0 0.0
  %3989 = vmatpush1.msra.mxu0 0.0
  %3990 = vmatprep.subr.mxu0 0.0
  %3991 = vmatpush1.msra.mxu0 0.0
  %3992 = vmatprep.subr.mxu0 0.0
  %3993 = vmatpush1.msra.mxu0 0.0
  %3994 = vmatprep.subr.mxu0 0.0
  %3995 = vmatpush1.msra.mxu0 0.0
  %3996 = vmatprep.subr.mxu0 0.0
  %3997 = vmatpush1.msra.mxu0 0.0
  %3998 = vmatprep.subr.mxu0 0.0
  %3999 = vmatpush1.msra.mxu0 0.0
  %4000 = vmatprep.subr.mxu0 0.0
  %4001 = vmatpush1.msra.mxu0 0.0
  %4002 = vmatprep.subr.mxu0 0.0
  %4003 = vmatpush1.msra.mxu0 0.0
  %4004 = vmatprep.mubr.f32.mxu0 0.0
  %4005 = vmatmul.mubr.f32.gmra.mrb[0].mxu0 %v3938
  %v4006 = vpop.f32.mrb[0].mxu0
  %v4007 = vadd.f32 0.0, %v4006
  %v4008 = vpop.f32.mrb[0].mxu0
  %4009 = vdwg.mxu0
  %4010 = vrot.lane.b32.xlu0 %v2514, 40
  %v4011 = vpop.permute.xlu0 %4010
  %v4014 = vsel %vm467, %v3933, 0
  %4016 = vmatprep.subr.mxu0 0.0
  %4017 = vmatpush1.msra.mxu0 %v4011
  %4018 = vmatprep.subr.mxu0 0.0
  %4019 = vmatpush1.msra.mxu0 0.0
  %4020 = vmatprep.subr.mxu0 0.0
  %4021 = vmatpush1.msra.mxu0 0.0
  %4022 = vmatprep.subr.mxu0 0.0
  %4023 = vmatpush1.msra.mxu0 0.0
  %4024 = vmatprep.subr.mxu0 0.0
  %4025 = vmatpush1.msra.mxu0 0.0
  %4026 = vmatprep.subr.mxu0 0.0
  %4027 = vmatpush1.msra.mxu0 0.0
  %4028 = vmatprep.subr.mxu0 0.0
  %4029 = vmatpush1.msra.mxu0 0.0
  %4030 = vmatprep.subr.mxu0 0.0
  %4031 = vmatpush1.msra.mxu0 0.0
  %4032 = vmatprep.subr.mxu0 0.0
  %4033 = vmatpush1.msra.mxu0 0.0
  %4034 = vmatprep.subr.mxu0 0.0
  %4035 = vmatpush1.msra.mxu0 0.0
  %4036 = vmatprep.subr.mxu0 0.0
  %4037 = vmatpush1.msra.mxu0 0.0
  %4038 = vmatprep.subr.mxu0 0.0
  %4039 = vmatpush1.msra.mxu0 0.0
  %4040 = vmatprep.subr.mxu0 0.0
  %4041 = vmatpush1.msra.mxu0 0.0
  %4042 = vmatprep.subr.mxu0 0.0
  %4043 = vmatpush1.msra.mxu0 0.0
  %4044 = vmatprep.subr.mxu0 0.0
  %4045 = vmatpush1.msra.mxu0 0.0
  %4046 = vmatprep.subr.mxu0 0.0
  %4047 = vmatpush1.msra.mxu0 0.0
  %4048 = vmatprep.subr.mxu0 0.0
  %4049 = vmatpush1.msra.mxu0 0.0
  %4050 = vmatprep.subr.mxu0 0.0
  %4051 = vmatpush1.msra.mxu0 0.0
  %4052 = vmatprep.subr.mxu0 0.0
  %4053 = vmatpush1.msra.mxu0 0.0
  %4054 = vmatprep.subr.mxu0 0.0
  %4055 = vmatpush1.msra.mxu0 0.0
  %4056 = vmatprep.subr.mxu0 0.0
  %4057 = vmatpush1.msra.mxu0 0.0
  %4058 = vmatprep.subr.mxu0 0.0
  %4059 = vmatpush1.msra.mxu0 0.0
  %4060 = vmatprep.subr.mxu0 0.0
  %4061 = vmatpush1.msra.mxu0 0.0
  %4062 = vmatprep.subr.mxu0 0.0
  %4063 = vmatpush1.msra.mxu0 0.0
  %4064 = vmatprep.subr.mxu0 0.0
  %4065 = vmatpush1.msra.mxu0 0.0
  %4066 = vmatprep.subr.mxu0 0.0
  %4067 = vmatpush1.msra.mxu0 0.0
  %4068 = vmatprep.subr.mxu0 0.0
  %4069 = vmatpush1.msra.mxu0 0.0
  %4070 = vmatprep.subr.mxu0 0.0
  %4071 = vmatpush1.msra.mxu0 0.0
  %4072 = vmatprep.subr.mxu0 0.0
  %4073 = vmatpush1.msra.mxu0 0.0
  %4074 = vmatprep.subr.mxu0 0.0
  %4075 = vmatpush1.msra.mxu0 0.0
  %4076 = vmatprep.subr.mxu0 0.0
  %4077 = vmatpush1.msra.mxu0 0.0
  %4078 = vmatprep.subr.mxu0 0.0
  %4079 = vmatpush1.msra.mxu0 0.0
  %4080 = vmatprep.mubr.f32.mxu0 0.0
  %4081 = vmatmul.mubr.f32.gmra.mrb[0].mxu0 %v4014
  %v4082 = vpop.f32.mrb[0].mxu0
  %v4083 = vadd.f32 0.0, %v4082
  %v4084 = vpop.f32.mrb[0].mxu0
  %4085 = vdwg.mxu0
  %v4086 = vld [vmem:[%s2847 + $0x18] sm:$0xff]
  %v4088 = vsel %vm467, %v4007, 0
  %v4091 = vsel %vm467, %v4083, 0
  %4093 = vmatprep.subr.mxu0 0.0
  %4094 = vmatpush1.msra.mxu0 %v4086
  %4095 = vmatprep.subr.mxu0 0.0
  %4096 = vmatpush1.msra.mxu0 0.0
  %4097 = vmatprep.subr.mxu0 0.0
  %4098 = vmatpush1.msra.mxu0 0.0
  %4099 = vmatprep.subr.mxu0 0.0
  %4100 = vmatpush1.msra.mxu0 0.0
  %4101 = vmatprep.subr.mxu0 0.0
  %4102 = vmatpush1.msra.mxu0 0.0
  %4103 = vmatprep.subr.mxu0 0.0
  %4104 = vmatpush1.msra.mxu0 0.0
  %4105 = vmatprep.subr.mxu0 0.0
  %4106 = vmatpush1.msra.mxu0 0.0
  %4107 = vmatprep.subr.mxu0 0.0
  %4108 = vmatpush1.msra.mxu0 0.0
  %4109 = vmatprep.subr.mxu0 0.0
  %4110 = vmatpush1.msra.mxu0 0.0
  %4111 = vmatprep.subr.mxu0 0.0
  %4112 = vmatpush1.msra.mxu0 0.0
  %4113 = vmatprep.subr.mxu0 0.0
  %4114 = vmatpush1.msra.mxu0 0.0
  %4115 = vmatprep.subr.mxu0 0.0
  %4116 = vmatpush1.msra.mxu0 0.0
  %4117 = vmatprep.subr.mxu0 0.0
  %4118 = vmatpush1.msra.mxu0 0.0
  %4119 = vmatprep.subr.mxu0 0.0
  %4120 = vmatpush1.msra.mxu0 0.0
  %4121 = vmatprep.subr.mxu0 0.0
  %4122 = vmatpush1.msra.mxu0 0.0
  %4123 = vmatprep.subr.mxu0 0.0
  %4124 = vmatpush1.msra.mxu0 0.0
  %4125 = vmatprep.subr.mxu0 0.0
  %4126 = vmatpush1.msra.mxu0 0.0
  %4127 = vmatprep.subr.mxu0 0.0
  %4128 = vmatpush1.msra.mxu0 0.0
  %4129 = vmatprep.subr.mxu0 0.0
  %4130 = vmatpush1.msra.mxu0 0.0
  %4131 = vmatprep.subr.mxu0 0.0
  %4132 = vmatpush1.msra.mxu0 0.0
  %4133 = vmatprep.subr.mxu0 0.0
  %4134 = vmatpush1.msra.mxu0 0.0
  %4135 = vmatprep.subr.mxu0 0.0
  %4136 = vmatpush1.msra.mxu0 0.0
  %4137 = vmatprep.subr.mxu0 0.0
  %4138 = vmatpush1.msra.mxu0 0.0
  %4139 = vmatprep.subr.mxu0 0.0
  %4140 = vmatpush1.msra.mxu0 0.0
  %4141 = vmatprep.subr.mxu0 0.0
  %4142 = vmatpush1.msra.mxu0 0.0
  %4143 = vmatprep.subr.mxu0 0.0
  %4144 = vmatpush1.msra.mxu0 0.0
  %4145 = vmatprep.subr.mxu0 0.0
  %4146 = vmatpush1.msra.mxu0 0.0
  %4147 = vmatprep.subr.mxu0 0.0
  %4148 = vmatpush1.msra.mxu0 0.0
  %4149 = vmatprep.subr.mxu0 0.0
  %4150 = vmatpush1.msra.mxu0 0.0
  %4151 = vmatprep.subr.mxu0 0.0
  %4152 = vmatpush1.msra.mxu0 0.0
  %4153 = vmatprep.subr.mxu0 0.0
  %4154 = vmatpush1.msra.mxu0 0.0
  %4155 = vmatprep.subr.mxu0 0.0
  %4156 = vmatpush1.msra.mxu0 0.0
  %4157 = vmatprep.mubr.f32.mxu0 0.0
  %4158 = vmatmul.mubr.f32.gmra.mrb[0].mxu0 %v4088
  %v4159 = vpop.f32.mrb[0].mxu0
  %v4160 = vadd.f32 0.0, %v4159
  %v4161 = vpop.f32.mrb[0].mxu0
  %4162 = vmatprep.mubr.f32.mxu0 0.0
  %4163 = vmatmul.mubr.f32.gmra.mrb[0].mxu0 %v4091
  %v4164 = vpop.f32.mrb[0].mxu0
  %v4165 = vadd.f32 0.0, %v4164
  %v4166 = vpop.f32.mrb[0].mxu0
  %4167 = vdwg.mxu0
  %v4168 = vadd.f32 %v3754, %v4160
  %v4169 = vadd.f32 %v3755, %v4165
  %v4170 = vld [vmem:[%s3 + $0x13] sm:$0x1]
  %v4171 = vlaneseq
  %v4172 = vshrl.u32 %v4171, 7
  %v4173 = vsub.s32 0, %v4172
  %v4174 = vrot.slane %v4170, %v4173
  %v4175 = vadd.f32 %v4168, %v4174
  %v4176 = vadd.f32 %v4169, %v4174
  %v4177 = vadd.f32 %v2396, %v4175
  %v4178 = vadd.f32 %v2397, %v4176
  %v4179 = vsel %vm144, %v4177, 0.0
  %4180 = vadd.xlane.f32.xlu0 %v4179
  %v4181 = vpop.xlane.xlu0 %4180
  %v4182 = vsel %vm144, %v4178, 0.0
  %4183 = vadd.xlane.f32.xlu0 %v4182
  %v4184 = vpop.xlane.xlu0 %4183
  %v4185 = vmul.f32 %v4181, %v151
  %v4186 = vmul.f32 %v4184, %v151
  %v4187 = vsub.f32 %v4177, %v4185
  %v4188 = vsub.f32 %v4178, %v4186
  %v4189 = vmul.f32 %v4187, %v4187
  %v4190 = vmul.f32 %v4188, %v4188
  %v4191 = vsel %vm144, %v4189, 0.0
  %4192 = vadd.xlane.f32.xlu0 %v4191
  %v4193 = vpop.xlane.xlu0 %4192
  %v4194 = vsel %vm144, %v4190, 0.0
  %4195 = vadd.xlane.f32.xlu0 %v4194
  %v4196 = vpop.xlane.xlu0 %4195
  %v4197 = vmul.f32 %v4193, %v151
  %v4198 = vmul.f32 %v4196, %v151
  %v4199 = vadd.f32 %v4197, 1e-05
  %v4200 = vadd.f32 %v4198, 1e-05
  %v4201 = vrsqrt.pop %v4199
  %v4202 = vrsqrt.pop %v4200
  %v4203 = vmul.f32 %v4187, %v4201
  %v4204 = vmul.f32 %v4188, %v4202
  %v4205 = vld [vmem:[%s3 + $0x14] sm:$0x1]
  %v4206 = vlaneseq
  %v4207 = vshrl.u32 %v4206, 7
  %v4208 = vsub.s32 0, %v4207
  %v4209 = vrot.slane %v4205, %v4208
  %v4210 = vmul.f32 %v4203, %v4209
  %v4211 = vmul.f32 %v4204, %v4209
  %v4212 = vld [vmem:[%s3 + $0x15] sm:$0x1]
  %v4213 = vlaneseq
  %v4214 = vshrl.u32 %v4213, 7
  %v4215 = vsub.s32 0, %v4214
  %v4216 = vrot.slane %v4212, %v4215
  %v4217 = vadd.f32 %v4210, %v4216
  %v4218 = vadd.f32 %v4211, %v4216
  %s4219 = scalar_lea.vmem %s6, 32
  %v4220 = vld [vmem:[%s4219] sm:$0xff]
  %v4221 = vld [vmem:[%s4219 + $0x8] sm:$0xff]
  %v4222 = vld [vmem:[%s4219 + $0x10] sm:$0xff]
  %v4223 = vld [vmem:[%s4219 + $0x18] sm:$0xff]
  %v4224 = vld [vmem:[%s7 + $0x1] sm:$0x1]
  %v4225 = vlaneseq
  %v4226 = vshrl.u32 %v4225, 7
  %v4227 = vsub.s32 0, %v4226
  %v4228 = vrot.slane %v4224, %v4227
  %v4230 = vsel %vm144, %v4217, 0
  %v4233 = vsel %vm144, %v4218, 0
  %4235 = vmatprep.subr.mxu0 0.0
  %4236 = vmatpush1.msra.mxu0 %v4220
  %4237 = vmatprep.subr.mxu0 0.0
  %4238 = vmatpush1.msra.mxu0 %v4221
  %4239 = vmatprep.subr.mxu0 0.0
  %4240 = vmatpush1.msra.mxu0 %v4222
  %4241 = vmatprep.subr.mxu0 0.0
  %4242 = vmatpush1.msra.mxu0 %v4223
  %4243 = vmatprep.subr.mxu0 0.0
  %4244 = vmatpush1.msra.mxu0 0.0
  %4245 = vmatprep.subr.mxu0 0.0
  %4246 = vmatpush1.msra.mxu0 0.0
  %4247 = vmatprep.subr.mxu0 0.0
  %4248 = vmatpush1.msra.mxu0 0.0
  %4249 = vmatprep.subr.mxu0 0.0
  %4250 = vmatpush1.msra.mxu0 0.0
  %4251 = vmatprep.subr.mxu0 0.0
  %4252 = vmatpush1.msra.mxu0 0.0
  %4253 = vmatprep.subr.mxu0 0.0
  %4254 = vmatpush1.msra.mxu0 0.0
  %4255 = vmatprep.subr.mxu0 0.0
  %4256 = vmatpush1.msra.mxu0 0.0
  %4257 = vmatprep.subr.mxu0 0.0
  %4258 = vmatpush1.msra.mxu0 0.0
  %4259 = vmatprep.subr.mxu0 0.0
  %4260 = vmatpush1.msra.mxu0 0.0
  %4261 = vmatprep.subr.mxu0 0.0
  %4262 = vmatpush1.msra.mxu0 0.0
  %4263 = vmatprep.subr.mxu0 0.0
  %4264 = vmatpush1.msra.mxu0 0.0
  %4265 = vmatprep.subr.mxu0 0.0
  %4266 = vmatpush1.msra.mxu0 0.0
  %4267 = vmatprep.subr.mxu0 0.0
  %4268 = vmatpush1.msra.mxu0 0.0
  %4269 = vmatprep.subr.mxu0 0.0
  %4270 = vmatpush1.msra.mxu0 0.0
  %4271 = vmatprep.subr.mxu0 0.0
  %4272 = vmatpush1.msra.mxu0 0.0
  %4273 = vmatprep.subr.mxu0 0.0
  %4274 = vmatpush1.msra.mxu0 0.0
  %4275 = vmatprep.subr.mxu0 0.0
  %4276 = vmatpush1.msra.mxu0 0.0
  %4277 = vmatprep.subr.mxu0 0.0
  %4278 = vmatpush1.msra.mxu0 0.0
  %4279 = vmatprep.subr.mxu0 0.0
  %4280 = vmatpush1.msra.mxu0 0.0
  %4281 = vmatprep.subr.mxu0 0.0
  %4282 = vmatpush1.msra.mxu0 0.0
  %4283 = vmatprep.subr.mxu0 0.0
  %4284 = vmatpush1.msra.mxu0 0.0
  %4285 = vmatprep.subr.mxu0 0.0
  %4286 = vmatpush1.msra.mxu0 0.0
  %4287 = vmatprep.subr.mxu0 0.0
  %4288 = vmatpush1.msra.mxu0 0.0
  %4289 = vmatprep.subr.mxu0 0.0
  %4290 = vmatpush1.msra.mxu0 0.0
  %4291 = vmatprep.subr.mxu0 0.0
  %4292 = vmatpush1.msra.mxu0 0.0
  %4293 = vmatprep.subr.mxu0 0.0
  %4294 = vmatpush1.msra.mxu0 0.0
  %4295 = vmatprep.subr.mxu0 0.0
  %4296 = vmatpush1.msra.mxu0 0.0
  %4297 = vmatprep.subr.mxu0 0.0
  %4298 = vmatpush1.msra.mxu0 0.0
  %4299 = vmatprep.mubr.f32.mxu0 0.0
  %4300 = vmatmul.mubr.f32.gmra.mrb[0].mxu0 %v4230
  %v4301 = vpop.f32.mrb[0].mxu0
  %v4302 = vadd.f32 %v4228, %v4301
  %v4303 = vpop.f32.mrb[0].mxu0
  %4304 = vmatprep.mubr.f32.mxu0 0.0
  %4305 = vmatmul.mubr.f32.gmra.mrb[0].mxu0 %v4233
  %v4306 = vpop.f32.mrb[0].mxu0
  %v4307 = vadd.f32 %v4228, %v4306
  %v4308 = vpop.f32.mrb[0].mxu0
  %4309 = vdwg.mxu0
  %v4310 = vmax.f32 %v4302, 0.0
  %v4311 = vmax.f32 %v4307, 0.0
  %s4312 = scalar_lea.vmem %s8, 128
  %v4313 = vld [vmem:[%s4312] sm:$0xff]
  %v4314 = vld [vmem:[%s4312 + $0x8] sm:$0xff]
  %v4315 = vld [vmem:[%s4312 + $0x10] sm:$0xff]
  %v4316 = vld [vmem:[%s4312 + $0x18] sm:$0xff]
  %v4317 = vld [vmem:[%s4312 + $0x20] sm:$0xff]
  %v4318 = vld [vmem:[%s4312 + $0x28] sm:$0xff]
  %v4319 = vld [vmem:[%s4312 + $0x30] sm:$0xff]
  %v4320 = vld [vmem:[%s4312 + $0x38] sm:$0xff]
  %v4321 = vld [vmem:[%s4312 + $0x40] sm:$0xff]
  %v4322 = vld [vmem:[%s4312 + $0x48] sm:$0xff]
  %v4323 = vld [vmem:[%s4312 + $0x50] sm:$0xff]
  %v4324 = vld [vmem:[%s4312 + $0x58] sm:$0xff]
  %v4325 = vld [vmem:[%s4312 + $0x60] sm:$0xff]
  %v4326 = vld [vmem:[%s4312 + $0x68] sm:$0xff]
  %v4327 = vld [vmem:[%s4312 + $0x70] sm:$0xff]
  %v4328 = vld [vmem:[%s4312 + $0x78] sm:$0xff]
  %v4329 = vld [vmem:[%s3 + $0x16] sm:$0x1]
  %v4330 = vlaneseq
  %v4331 = vshrl.u32 %v4330, 7
  %v4332 = vsub.s32 0, %v4331
  %v4333 = vrot.slane %v4329, %v4332
  %4334 = vmatprep.subr.mxu0 0.0
  %4335 = vmatpush1.msra.mxu0 %v4313
  %4336 = vmatprep.subr.mxu0 0.0
  %4337 = vmatpush1.msra.mxu0 %v4314
  %4338 = vmatprep.subr.mxu0 0.0
  %4339 = vmatpush1.msra.mxu0 %v4315
  %4340 = vmatprep.subr.mxu0 0.0
  %4341 = vmatpush1.msra.mxu0 %v4316
  %4342 = vmatprep.subr.mxu0 0.0
  %4343 = vmatpush1.msra.mxu0 %v4317
  %4344 = vmatprep.subr.mxu0 0.0
  %4345 = vmatpush1.msra.mxu0 %v4318
  %4346 = vmatprep.subr.mxu0 0.0
  %4347 = vmatpush1.msra.mxu0 %v4319
  %4348 = vmatprep.subr.mxu0 0.0
  %4349 = vmatpush1.msra.mxu0 %v4320
  %4350 = vmatprep.subr.mxu0 0.0
  %4351 = vmatpush1.msra.mxu0 %v4321
  %4352 = vmatprep.subr.mxu0 0.0
  %4353 = vmatpush1.msra.mxu0 %v4322
  %4354 = vmatprep.subr.mxu0 0.0
  %4355 = vmatpush1.msra.mxu0 %v4323
  %4356 = vmatprep.subr.mxu0 0.0
  %4357 = vmatpush1.msra.mxu0 %v4324
  %4358 = vmatprep.subr.mxu0 0.0
  %4359 = vmatpush1.msra.mxu0 %v4325
  %4360 = vmatprep.subr.mxu0 0.0
  %4361 = vmatpush1.msra.mxu0 %v4326
  %4362 = vmatprep.subr.mxu0 0.0
  %4363 = vmatpush1.msra.mxu0 %v4327
  %4364 = vmatprep.subr.mxu0 0.0
  %4365 = vmatpush1.msra.mxu0 %v4328
  %4366 = vmatprep.subr.mxu0 0.0
  %4367 = vmatpush1.msra.mxu0 0.0
  %4368 = vmatprep.subr.mxu0 0.0
  %4369 = vmatpush1.msra.mxu0 0.0
  %4370 = vmatprep.subr.mxu0 0.0
  %4371 = vmatpush1.msra.mxu0 0.0
  %4372 = vmatprep.subr.mxu0 0.0
  %4373 = vmatpush1.msra.mxu0 0.0
  %4374 = vmatprep.subr.mxu0 0.0
  %4375 = vmatpush1.msra.mxu0 0.0
  %4376 = vmatprep.subr.mxu0 0.0
  %4377 = vmatpush1.msra.mxu0 0.0
  %4378 = vmatprep.subr.mxu0 0.0
  %4379 = vmatpush1.msra.mxu0 0.0
  %4380 = vmatprep.subr.mxu0 0.0
  %4381 = vmatpush1.msra.mxu0 0.0
  %4382 = vmatprep.subr.mxu0 0.0
  %4383 = vmatpush1.msra.mxu0 0.0
  %4384 = vmatprep.subr.mxu0 0.0
  %4385 = vmatpush1.msra.mxu0 0.0
  %4386 = vmatprep.subr.mxu0 0.0
  %4387 = vmatpush1.msra.mxu0 0.0
  %4388 = vmatprep.subr.mxu0 0.0
  %4389 = vmatpush1.msra.mxu0 0.0
  %4390 = vmatprep.subr.mxu0 0.0
  %4391 = vmatpush1.msra.mxu0 0.0
  %4392 = vmatprep.subr.mxu0 0.0
  %4393 = vmatpush1.msra.mxu0 0.0
  %4394 = vmatprep.subr.mxu0 0.0
  %4395 = vmatpush1.msra.mxu0 0.0
  %4396 = vmatprep.subr.mxu0 0.0
  %4397 = vmatpush1.msra.mxu0 0.0
  %4398 = vmatprep.mubr.f32.mxu0 0.0
  %4399 = vmatmul.mubr.f32.gmra.mrb[0].mxu0 %v4310
  %v4400 = vpop.f32.mrb[0].mxu0
  %v4401 = vadd.f32 %v4333, %v4400
  %v4402 = vpop.f32.mrb[0].mxu0
  %4403 = vmatprep.mubr.f32.mxu0 0.0
  %4404 = vmatmul.mubr.f32.gmra.mrb[0].mxu0 %v4311
  %v4405 = vpop.f32.mrb[0].mxu0
  %v4406 = vadd.f32 %v4333, %v4405
  %v4407 = vpop.f32.mrb[0].mxu0
  %4408 = vdwg.mxu0
  %v4409 = vadd.f32 %v4217, %v4401
  %v4410 = vadd.f32 %v4218, %v4406
  %v4411 = vsel %vm144, %v4409, 0.0
  %4412 = vadd.xlane.f32.xlu0 %v4411
  %v4413 = vpop.xlane.xlu0 %4412
  %v4414 = vsel %vm144, %v4410, 0.0
  %4415 = vadd.xlane.f32.xlu0 %v4414
  %v4416 = vpop.xlane.xlu0 %4415
  %v4417 = vmul.f32 %v4413, %v151
  %v4418 = vmul.f32 %v4416, %v151
  %v4419 = vsub.f32 %v4409, %v4417
  %v4420 = vsub.f32 %v4410, %v4418
  %v4421 = vmul.f32 %v4419, %v4419
  %v4422 = vmul.f32 %v4420, %v4420
  %v4423 = vsel %vm144, %v4421, 0.0
  %4424 = vadd.xlane.f32.xlu0 %v4423
  %v4425 = vpop.xlane.xlu0 %4424
  %v4426 = vsel %vm144, %v4422, 0.0
  %4427 = vadd.xlane.f32.xlu0 %v4426
  %v4428 = vpop.xlane.xlu0 %4427
  %v4429 = vmul.f32 %v4425, %v151
  %v4430 = vmul.f32 %v4428, %v151
  %v4431 = vadd.f32 %v4429, 1e-05
  %v4432 = vadd.f32 %v4430, 1e-05
  %v4433 = vrsqrt.pop %v4431
  %v4434 = vrsqrt.pop %v4432
  %v4435 = vmul.f32 %v4419, %v4433
  %v4436 = vmul.f32 %v4420, %v4434
  %v4437 = vld [vmem:[%s3 + $0x17] sm:$0x1]
  %v4438 = vlaneseq
  %v4439 = vshrl.u32 %v4438, 7
  %v4440 = vsub.s32 0, %v4439
  %v4441 = vrot.slane %v4437, %v4440
  %v4442 = vmul.f32 %v4435, %v4441
  %v4443 = vmul.f32 %v4436, %v4441
  %v4444 = vld [vmem:[%s3 + $0x18] sm:$0x1]
  %v4445 = vlaneseq
  %v4446 = vshrl.u32 %v4445, 7
  %v4447 = vsub.s32 0, %v4446
  %v4448 = vrot.slane %v4444, %v4447
  %v4449 = vadd.f32 %v4442, %v4448
  %v4450 = vadd.f32 %v4443, %v4448
  %v4451 = vld [vmem:[%s10] sm:$0xff]
  %v4452 = vld [vmem:[%s10 + $0x8] sm:$0xff]
  %v4453 = vld [vmem:[%s10 + $0x10] sm:$0xff]
  %v4454 = vld [vmem:[%s10 + $0x18] sm:$0xff]
  %v4455 = vld [vmem:[%s3 + $0x19] sm:$0x1]
  %v4456 = vlaneseq
  %v4457 = vshrl.u32 %v4456, 7
  %v4458 = vsub.s32 0, %v4457
  %v4459 = vrot.slane %v4455, %v4458
  %v4461 = vsel %vm144, %v4449, 0
  %v4464 = vsel %vm144, %v4450, 0
  %4466 = vmatprep.subr.mxu0 0.0
  %4467 = vmatpush1.msra.mxu0 %v4451
  %4468 = vmatprep.subr.mxu0 0.0
  %4469 = vmatpush1.msra.mxu0 %v4452
  %4470 = vmatprep.subr.mxu0 0.0
  %4471 = vmatpush1.msra.mxu0 %v4453
  %4472 = vmatprep.subr.mxu0 0.0
  %4473 = vmatpush1.msra.mxu0 %v4454
  %4474 = vmatprep.subr.mxu0 0.0
  %4475 = vmatpush1.msra.mxu0 0.0
  %4476 = vmatprep.subr.mxu0 0.0
  %4477 = vmatpush1.msra.mxu0 0.0
  %4478 = vmatprep.subr.mxu0 0.0
  %4479 = vmatpush1.msra.mxu0 0.0
  %4480 = vmatprep.subr.mxu0 0.0
  %4481 = vmatpush1.msra.mxu0 0.0
  %4482 = vmatprep.subr.mxu0 0.0
  %4483 = vmatpush1.msra.mxu0 0.0
  %4484 = vmatprep.subr.mxu0 0.0
  %4485 = vmatpush1.msra.mxu0 0.0
  %4486 = vmatprep.subr.mxu0 0.0
  %4487 = vmatpush1.msra.mxu0 0.0
  %4488 = vmatprep.subr.mxu0 0.0
  %4489 = vmatpush1.msra.mxu0 0.0
  %4490 = vmatprep.subr.mxu0 0.0
  %4491 = vmatpush1.msra.mxu0 0.0
  %4492 = vmatprep.subr.mxu0 0.0
  %4493 = vmatpush1.msra.mxu0 0.0
  %4494 = vmatprep.subr.mxu0 0.0
  %4495 = vmatpush1.msra.mxu0 0.0
  %4496 = vmatprep.subr.mxu0 0.0
  %4497 = vmatpush1.msra.mxu0 0.0
  %4498 = vmatprep.subr.mxu0 0.0
  %4499 = vmatpush1.msra.mxu0 0.0
  %4500 = vmatprep.subr.mxu0 0.0
  %4501 = vmatpush1.msra.mxu0 0.0
  %4502 = vmatprep.subr.mxu0 0.0
  %4503 = vmatpush1.msra.mxu0 0.0
  %4504 = vmatprep.subr.mxu0 0.0
  %4505 = vmatpush1.msra.mxu0 0.0
  %4506 = vmatprep.subr.mxu0 0.0
  %4507 = vmatpush1.msra.mxu0 0.0
  %4508 = vmatprep.subr.mxu0 0.0
  %4509 = vmatpush1.msra.mxu0 0.0
  %4510 = vmatprep.subr.mxu0 0.0
  %4511 = vmatpush1.msra.mxu0 0.0
  %4512 = vmatprep.subr.mxu0 0.0
  %4513 = vmatpush1.msra.mxu0 0.0
  %4514 = vmatprep.subr.mxu0 0.0
  %4515 = vmatpush1.msra.mxu0 0.0
  %4516 = vmatprep.subr.mxu0 0.0
  %4517 = vmatpush1.msra.mxu0 0.0
  %4518 = vmatprep.subr.mxu0 0.0
  %4519 = vmatpush1.msra.mxu0 0.0
  %4520 = vmatprep.subr.mxu0 0.0
  %4521 = vmatpush1.msra.mxu0 0.0
  %4522 = vmatprep.subr.mxu0 0.0
  %4523 = vmatpush1.msra.mxu0 0.0
  %4524 = vmatprep.subr.mxu0 0.0
  %4525 = vmatpush1.msra.mxu0 0.0
  %4526 = vmatprep.subr.mxu0 0.0
  %4527 = vmatpush1.msra.mxu0 0.0
  %4528 = vmatprep.subr.mxu0 0.0
  %4529 = vmatpush1.msra.mxu0 0.0
  %4530 = vmatprep.mubr.f32.mxu0 0.0
  %4531 = vmatmul.mubr.f32.gmra.mrb[0].mxu0 %v4461
  %v4532 = vpop.f32.mrb[0].mxu0
  %v4533 = vadd.f32 %v4459, %v4532
  %v4534 = vpop.f32.mrb[0].mxu0
  %4535 = vmatprep.mubr.f32.mxu0 0.0
  %4536 = vmatmul.mubr.f32.gmra.mrb[0].mxu0 %v4464
  %v4537 = vpop.f32.mrb[0].mxu0
  %v4538 = vadd.f32 %v4459, %v4537
  %v4539 = vpop.f32.mrb[0].mxu0
  %4540 = vdwg.mxu0
  %v4541 = vmul.f32 %v4533, 0.01
  %v4542 = vmul.f32 %v4538, 0.01
  %v4543 = vmax.f32 %v4533, %v4541
  %v4544 = vmax.f32 %v4538, %v4542
  %s4545 = scalar_lea.vmem %s10, 32
  %v4546 = vld [vmem:[%s4545] sm:$0xff]
  %v4547 = vld [vmem:[%s4545 + $0x8] sm:$0xff]
  %v4548 = vld [vmem:[%s4545 + $0x10] sm:$0xff]
  %v4549 = vld [vmem:[%s4545 + $0x18] sm:$0xff]
  %v4550 = vld [vmem:[%s3 + $0x1a] sm:$0x1]
  %v4551 = vlaneseq
  %v4552 = vshrl.u32 %v4551, 7
  %v4553 = vsub.s32 0, %v4552
  %v4554 = vrot.slane %v4550, %v4553
  %v4556 = vsel %vm144, %v4543, 0
  %v4559 = vsel %vm144, %v4544, 0
  %4561 = vmatprep.subr.mxu0 0.0
  %4562 = vmatpush1.msra.mxu0 %v4546
  %4563 = vmatprep.subr.mxu0 0.0
  %4564 = vmatpush1.msra.mxu0 %v4547
  %4565 = vmatprep.subr.mxu0 0.0
  %4566 = vmatpush1.msra.mxu0 %v4548
  %4567 = vmatprep.subr.mxu0 0.0
  %4568 = vmatpush1.msra.mxu0 %v4549
  %4569 = vmatprep.subr.mxu0 0.0
  %4570 = vmatpush1.msra.mxu0 0.0
  %4571 = vmatprep.subr.mxu0 0.0
  %4572 = vmatpush1.msra.mxu0 0.0
  %4573 = vmatprep.subr.mxu0 0.0
  %4574 = vmatpush1.msra.mxu0 0.0
  %4575 = vmatprep.subr.mxu0 0.0
  %4576 = vmatpush1.msra.mxu0 0.0
  %4577 = vmatprep.subr.mxu0 0.0
  %4578 = vmatpush1.msra.mxu0 0.0
  %4579 = vmatprep.subr.mxu0 0.0
  %4580 = vmatpush1.msra.mxu0 0.0
  %4581 = vmatprep.subr.mxu0 0.0
  %4582 = vmatpush1.msra.mxu0 0.0
  %4583 = vmatprep.subr.mxu0 0.0
  %4584 = vmatpush1.msra.mxu0 0.0
  %4585 = vmatprep.subr.mxu0 0.0
  %4586 = vmatpush1.msra.mxu0 0.0
  %4587 = vmatprep.subr.mxu0 0.0
  %4588 = vmatpush1.msra.mxu0 0.0
  %4589 = vmatprep.subr.mxu0 0.0
  %4590 = vmatpush1.msra.mxu0 0.0
  %4591 = vmatprep.subr.mxu0 0.0
  %4592 = vmatpush1.msra.mxu0 0.0
  %4593 = vmatprep.subr.mxu0 0.0
  %4594 = vmatpush1.msra.mxu0 0.0
  %4595 = vmatprep.subr.mxu0 0.0
  %4596 = vmatpush1.msra.mxu0 0.0
  %4597 = vmatprep.subr.mxu0 0.0
  %4598 = vmatpush1.msra.mxu0 0.0
  %4599 = vmatprep.subr.mxu0 0.0
  %4600 = vmatpush1.msra.mxu0 0.0
  %4601 = vmatprep.subr.mxu0 0.0
  %4602 = vmatpush1.msra.mxu0 0.0
  %4603 = vmatprep.subr.mxu0 0.0
  %4604 = vmatpush1.msra.mxu0 0.0
  %4605 = vmatprep.subr.mxu0 0.0
  %4606 = vmatpush1.msra.mxu0 0.0
  %4607 = vmatprep.subr.mxu0 0.0
  %4608 = vmatpush1.msra.mxu0 0.0
  %4609 = vmatprep.subr.mxu0 0.0
  %4610 = vmatpush1.msra.mxu0 0.0
  %4611 = vmatprep.subr.mxu0 0.0
  %4612 = vmatpush1.msra.mxu0 0.0
  %4613 = vmatprep.subr.mxu0 0.0
  %4614 = vmatpush1.msra.mxu0 0.0
  %4615 = vmatprep.subr.mxu0 0.0
  %4616 = vmatpush1.msra.mxu0 0.0
  %4617 = vmatprep.subr.mxu0 0.0
  %4618 = vmatpush1.msra.mxu0 0.0
  %4619 = vmatprep.subr.mxu0 0.0
  %4620 = vmatpush1.msra.mxu0 0.0
  %4621 = vmatprep.subr.mxu0 0.0
  %4622 = vmatpush1.msra.mxu0 0.0
  %4623 = vmatprep.subr.mxu0 0.0
  %4624 = vmatpush1.msra.mxu0 0.0
  %4625 = vmatprep.mubr.f32.mxu0 0.0
  %4626 = vmatmul.mubr.f32.gmra.mrb[0].mxu0 %v4556
  %v4627 = vpop.f32.mrb[0].mxu0
  %v4628 = vadd.f32 %v4554, %v4627
  %v4629 = vpop.f32.mrb[0].mxu0
  %4630 = vmatprep.mubr.f32.mxu0 0.0
  %4631 = vmatmul.mubr.f32.gmra.mrb[0].mxu0 %v4559
  %v4632 = vpop.f32.mrb[0].mxu0
  %v4633 = vadd.f32 %v4554, %v4632
  %v4634 = vpop.f32.mrb[0].mxu0
  %4635 = vdwg.mxu0
  %v4636 = vmul.f32 %v4628, 0.01
  %v4637 = vmul.f32 %v4633, 0.01
  %v4638 = vmax.f32 %v4628, %v4636
  %v4639 = vmax.f32 %v4633, %v4637
  %v4640 = vld [vmem:[%s3 + $0x1b] sm:$0x1]
  %v4641 = vlaneseq
  %v4642 = vshrl.u32 %v4641, 7
  %v4643 = vsub.s32 0, %v4642
  %v4644 = vrot.slane %v4640, %v4643
  %v4645 = vmul.f32 %v4638, %v4644
  %v4646 = vmul.f32 %v4639, %v4644
  %v4647 = vsel %vm144, %v4645, 0.0
  %4648 = vadd.xlane.f32.xlu0 %v4647
  %v4649 = vpop.xlane.xlu0 %4648
  %v4650 = vsel %vm144, %v4646, 0.0
  %4651 = vadd.xlane.f32.xlu0 %v4650
  %v4652 = vpop.xlane.xlu0 %4651
  %v4653 = vld [vmem:[%s3 + $0x1c] sm:$0x1]
  %v4654 = vlaneseq
  %v4655 = vshrl.u32 %v4654, 7
  %v4656 = vsub.s32 0, %v4655
  %v4657 = vrot.slane %v4653, %v4656
  %v4658 = vadd.f32 %v4649, %v4657
  %v4659 = vadd.f32 %v4652, %v4657
  %vm4660 = vcmask 7168
  %4661 = vst.msk [vmem:[%s11] sm:$0xff] %vm4660, %v4658
  %4662 = vst.msk [vmem:[%s11 + $0x8] sm:$0xff] %vm4660, %v4659
  // Predicated region
  $region46: #{tpu_custom_call.1} parent=0 // pred_check
    _
  $region47: #{tpu_custom_call.1} parent=0 // pred_check_branch
    %4664 = sbr.rel (0) target = $region49
  $region48: #{tpu_custom_call.1} parent=0 // pred_region
    _
  $region49: #{tpu_custom_call.1} parent=0 // pred_fallthru
    _
  // Predicated region
  $region50: #{tpu_custom_call.1} parent=0 // pred_check
    _
  $region51: #{tpu_custom_call.1} parent=0 // pred_check_branch
    %4666 = sbr.rel (0) target = $region53
  $region52: #{tpu_custom_call.1} parent=0 // pred_region
    _
  $region53: #{tpu_custom_call.1} parent=0 // pred_fallthru
    _

</llo_original>
